<compile_context>
chip_gen: v5e
topology: v5e:2x2
jax: 0.10.0
libtpu: 0.0.40
codegen_flags: <defaults>
</compile_context>

<pallas_src>
import functools

import jax
import jax.numpy as jnp
from jax import lax
from jax.experimental import pallas as pl
from jax.experimental.pallas import tpu as pltpu

SUB = 8  # sublane rows per coalesced store block


def modnn_kernel(tz_ref, tamb_ref, sol_ref, dsin_ref, dcos_ref, occ_ref, ph_ref,
                 scal_ref, w_ih_ref, w_hh_ref, b_rnn_ref, fc_col_ref,
                 int_w1_ref, int_b1_ref, int_w2_ref,
                 tout_ref, hvac_ref, ext_ref, int_ref, dq_ref,
                 *, window, enco_len):
    T, Bp = tz_ref.shape
    H = w_hh_ref.shape[0]
    IH = int_b1_ref.shape[0]
    W = window

    # scalar parameters (SMEM): [cond_w, trans_c, absor_c, hvac_w, int_scale,
    #                            zone_w, ext_fc_bias, int_fc2_bias]
    # trans_c / absor_c already passed through sigmoid in the wrapper.
    cond_w    = scal_ref[0]
    trans_c   = scal_ref[1]
    absor_c   = scal_ref[2]
    hvac_w    = scal_ref[3]
    int_scale = scal_ref[4]
    zone_w    = scal_ref[5]
    fc_b      = scal_ref[6]
    int_b2    = scal_ref[7]

    w_ih   = w_ih_ref[...]     # [H, 1]   RNN input weight (input_size = 1)
    w_hh   = w_hh_ref[...]     # [H, H]   RNN recurrent weight
    b_rnn  = b_rnn_ref[...]    # [H, 1]   b_ih + b_hh
    fc_col = fc_col_ref[...]   # [H, 1]   external.FC weight (column layout)

    # ----------------- vectorized prologue (recurrence-independent work) -----------------
    # hvac(): linear scale; warm-up rows keep the raw pHVAC (like the reference).
    ph = ph_ref[...]
    hvac_flux = hvac_w * ph
    hvac_ref[...] = hvac_flux
    hvac_ref[0:W, :] = ph[0:W, :]

    # internal(): 2 -> IH -> 1 MLP on (day_sin, day_cos), sigmoid, +occ, *scale.
    # IH is small and static: unrolled as VPU broadcast-MACs from SMEM scalars.
    s = dsin_ref[...]
    c = dcos_ref[...]
    acc = jnp.zeros((T, Bp), jnp.float32) + int_b2
    for h in range(IH):
        e = jnp.maximum(int_w1_ref[2 * h] * s + int_w1_ref[2 * h + 1] * c
                        + int_b1_ref[h], 0.0)
        acc = acc + int_w2_ref[h] * e
    int_flux = int_scale * (1.0 / (1.0 + jnp.exp(-acc)) + occ_ref[...])   # [T, Bp]
    int_ref[...] = int_flux
    int_ref[0:W, :] = jnp.zeros((W, Bp), jnp.float32)

    # Stage hvac+int directly in dq_ref; the time loop reads it back per row and
    # overwrites with the total flux.  Warm rows of dq / ext are zero (reference).
    dq_ref[...] = hvac_flux + int_flux
    dq_ref[0:W, :] = jnp.zeros((W, Bp), jnp.float32)
    ext_ref[0:W, :] = jnp.zeros((W, Bp), jnp.float32)

    # Warm-up rows of TOut are the raw measured zone temperature.
    tz_head = tz_ref[0:W, :]
    tout_ref[0:W, :] = tz_head

    # ----------------- serial time-stepper (external RNN + zone integration) -----------------
    # carry = (E_Zone_T [1,Bp], tz window rows i-W..i-1 [W,Bp],
    #          pre(=absor*sol + cond*Tamb) window [W,Bp], TOut window [W,Bp], h [H,Bp])
    e_zone0  = tz_ref[W:W + 1, :]                         # E_Zone_T = input_X[:, window, 0]
    pre_win0 = absor_c * sol_ref[0:W, :] + cond_w * tamb_ref[0:W, :]
    carry = (e_zone0, tz_head, pre_win0, tz_head, jnp.ones((H, Bp), jnp.float32))

    def time_step(i, carry, tz_i, pre_i, sol_i, dqhi_i, blend):
        """One reference time step. blend: None (traced i), True (encoder), False (decoder)."""
        e_zone, tz_win, pre_win, win, hh = carry
        tout_row = e_zone                                 # TOut_list[:, i, :] = E_Zone_T

        # roll the three windows to rows i-W+1 .. i (registers only, no VMEM round trip)
        tz_win  = jnp.concatenate([tz_win[1:],  tz_i],   axis=0)
        pre_win = jnp.concatenate([pre_win[1:], pre_i],  axis=0)
        win     = jnp.concatenate([win[1:],     e_zone], axis=0)

        if blend is None:                                 # traced step index
            ratio = i * (1.0 / float(enco_len))
            mix = jnp.where(i < enco_len, tz_win * ratio + win * (1.0 - ratio), win)
        elif blend:                                       # static encoder step
            r = float(i) / float(enco_len)
            mix = tz_win * r + win * (1.0 - r)
        else:                                             # static decoder step
            mix = win

        # external(): ext_input = absor*sol + cond*(T_amb - mix) = pre - cond*mix
        ext_in = pre_win - cond_w * mix                   # [W, Bp]

        # RNN: input contributions precomputed off the dependent chain; the serial
        # recurrence is W chained tanh(u_k + W_hh @ h) steps (W static -> unrolled).
        us = [w_ih * ext_in[k:k + 1, :] + b_rnn for k in range(W)]
        for k in range(W):
            hh = jnp.tanh(us[k] + jnp.dot(w_hh, hh, preferred_element_type=jnp.float32))

        # external.FC: 1xH done on VPU/XLU (broadcast mul + sublane reduce), not MXU.
        ext_row = (jnp.sum(fc_col * hh, axis=0, keepdims=True)
                   + fc_b + trans_c * sol_i)              # [1, Bp]
        dq_row = ext_row + dqhi_i                         # ext + hvac + int
        e_zone = e_zone + zone_w * dq_row                 # zone(): E += zone_w * Q
        return (e_zone, tz_win, pre_win, win, hh), tout_row, ext_row, dq_row

    def static_step(i, carry):
        """Peel/tail step with a static row index (static single-row loads/stores)."""
        tz_i   = tz_ref[i:i + 1, :]
        sol_i  = sol_ref[i:i + 1, :]
        pre_i  = absor_c * sol_i + cond_w * tamb_ref[i:i + 1, :]
        dqhi_i = dq_ref[i:i + 1, :]
        carry, tout_row, ext_row, dq_row = time_step(
            i, carry, tz_i, pre_i, sol_i, dqhi_i, blend=(i < enco_len))
        tout_ref[i:i + 1, :] = tout_row
        ext_ref[i:i + 1, :]  = ext_row
        dq_ref[i:i + 1, :]   = dq_row
        return carry

    first_blk  = min(T, ((W + SUB - 1) // SUB) * SUB)     # first 8-aligned row >= W
    n_blocks   = (T - first_blk) // SUB
    tail_start = first_blk + n_blocks * SUB

    # peel: rows W .. first_blk-1 (at most 7, static indices)
    for i in range(W, first_blk):
        carry = static_step(i, carry)

    # main loop: blocks of 8 steps; one aligned unmasked [8,Bp] load/store per plane.
    def block_step(b, carry):
        base = pl.multiple_of(first_blk + b * SUB, SUB)
        tz_blk   = tz_ref[pl.ds(base, SUB), :]
        tamb_blk = tamb_ref[pl.ds(base, SUB), :]
        sol_blk  = sol_ref[pl.ds(base, SUB), :]
        dqhi_blk = dq_ref[pl.ds(base, SUB), :]            # hvac+int staged in prologue

        tout_rows, ext_rows, dq_rows = [], [], []
        for j in range(SUB):
            tz_i   = tz_blk[j:j + 1, :]
            sol_i  = sol_blk[j:j + 1, :]
            pre_i  = absor_c * sol_i + cond_w * tamb_blk[j:j + 1, :]
            dqhi_i = dqhi_blk[j:j + 1, :]
            carry, tout_row, ext_row, dq_row = time_step(
                base + j, carry, tz_i, pre_i, sol_i, dqhi_i, blend=None)
            tout_rows.append(tout_row)
            ext_rows.append(ext_row)
            dq_rows.append(dq_row)

        tout_ref[pl.ds(base, SUB), :] = jnp.concatenate(tout_rows, axis=0)
        ext_ref[pl.ds(base, SUB), :]  = jnp.concatenate(ext_rows, axis=0)
        dq_ref[pl.ds(base, SUB), :]   = jnp.concatenate(dq_rows, axis=0)
        return carry

    if n_blocks > 0:
        carry = lax.fori_loop(0, n_blocks, block_step, carry)

    # tail: rows tail_start .. T-1 (at most 7, static indices)
    for i in range(tail_start, T):
        carry = static_step(i, carry)


def modnn_forward(input_X, params, *, window, enco_len):
    """input_X: [B, T, 7] float32.  Returns (TOut, HVAC, (Ext, Int, deltaQ)), each [B, T, 1]."""
    B, T, F = input_X.shape
    assert F == 7
    Bp = ((B + 127) // 128) * 128      # pad batch to the 128-lane width (lane-dense I/O)

    # TODO(synk): at production sizes keep [T, B] planes end-to-end (or fuse these
    # transposes into neighbouring XLA ops) — they cost an extra HBM round trip here.
    x = jnp.transpose(input_X.astype(jnp.float32), (2, 1, 0))    # [F, T, B] feature planes
    x = jnp.pad(x, ((0, 0), (0, 0), (0, Bp - B)))
    planes = tuple(x[f] for f in range(7))

    # fold sigmoid of the trans/absor coefficients into the scalar parameter vector
    scal = params["scalars"]
    scal = scal.at[1].set(jax.nn.sigmoid(scal[1]))
    scal = scal.at[2].set(jax.nn.sigmoid(scal[2]))
    fc_col = jnp.reshape(params["fc_w"], (-1, 1))                # [H, 1] column layout

    kernel = functools.partial(modnn_kernel, window=window, enco_len=enco_len)
    vmem = pl.BlockSpec(memory_space=pltpu.MemorySpace.VMEM)
    smem = pl.BlockSpec(memory_space=pltpu.MemorySpace.SMEM)
    out_sds = jax.ShapeDtypeStruct((T, Bp), jnp.float32)

    plane_bytes = T * Bp * 4          # 12 resident f32 planes (7 in + 5 out), no scratch
    vmem_limit = min(100 * 1024 * 1024, 13 * plane_bytes + (8 << 20))

    outs = pl.pallas_call(
        kernel,
        out_shape=(out_sds,) * 5,
        in_specs=[vmem] * 7 + [smem, vmem, vmem, vmem, vmem, smem, smem, smem],
        out_specs=(vmem,) * 5,
        compiler_params=pltpu.CompilerParams(vmem_limit_bytes=vmem_limit),
    )(*planes, scal, params["w_ih"], params["w_hh"], params["b_rnn"], fc_col,
      params["int_w1"], params["int_b1"], params["int_w2"])

    tout, hvac_l, ext_l, int_l, dq_l = outs
    tr = lambda a: jnp.transpose(a[:, :B], (1, 0))[:, :, None]
    return tr(tout), tr(hvac_l), (tr(ext_l), tr(int_l), tr(dq_l))


def init_params(key, hidden_size, int_hidden):
    """Deterministic synthetic parameters with the same shapes as the PyTorch module."""
    H, IH = hidden_size, int_hidden
    ks = jax.random.split(key, 16)
    u = lambda k, shape, b: jax.random.uniform(k, shape, jnp.float32, -b, b)
    bh = H ** -0.5

    w_ih  = u(ks[0], (H, 1), bh)                         # RNN weight_ih_l0 (input_size=1)
    w_hh  = u(ks[1], (H, H), bh)                         # RNN weight_hh_l0
    b_rnn = u(ks[2], (H, 1), bh) + u(ks[3], (H, 1), bh)  # bias_ih + bias_hh
    fc_w  = u(ks[4], (1, H), bh)                         # external.FC weight
    fc_b  = u(ks[5], (), bh)                             # external.FC bias

    int_w1 = u(ks[6], (IH, 2), 2 ** -0.5).reshape(-1)    # internal.FC1 weight (flattened, SMEM)
    int_b1 = u(ks[7], (IH,), 2 ** -0.5)                  # internal.FC1 bias
    int_w2 = u(ks[8], (IH,), IH ** -0.5)                 # internal.FC2 weight
    int_b2 = u(ks[9], (), IH ** -0.5)                    # internal.FC2 bias

    cond_w    = u(ks[10], (), 1.0)                       # external.conduction (Linear(1,1,no bias))
    trans_raw = jax.random.uniform(ks[11], (), jnp.float32)   # torch.rand(1)
    absor_raw = jax.random.uniform(ks[12], (), jnp.float32)   # torch.rand(1)
    hvac_w    = u(ks[13], (), 1.0)                       # hvac.scale
    int_scale = u(ks[14], (), 1.0)                       # internal.scale
    zone_w    = u(ks[15], (), 1.0)                       # zone.scale

    scalars = jnp.stack([cond_w, trans_raw, absor_raw, hvac_w,
                         int_scale, zone_w, fc_b, int_b2]).astype(jnp.float32)
    return dict(scalars=scalars, w_ih=w_ih, w_hh=w_hh, b_rnn=b_rnn, fc_w=fc_w,
                int_w1=int_w1, int_b1=int_b1, int_w2=int_w2)


if __name__ == "__main__":
    B, T, F = 8, 32, 7          # [T_zone, T_ambient, solar, day_sin, day_cos, occ, phvac]
    WINDOW, ENCOLEN = 4, 16     # para['window'], args['enLen']
    EXT_H, INT_H = 16, 8        # para['Ext_h'], para['Int_h']

    key = jax.random.PRNGKey(0)
    k_x, k_p = jax.random.split(key)
    input_X = jax.random.normal(k_x, (B, T, F), jnp.float32)
    params = init_params(k_p, EXT_H, INT_H)

    fwd = jax.jit(functools.partial(modnn_forward, window=WINDOW, enco_len=ENCOLEN))
    tout, hvac_l, (ext_l, int_l, dq_l) = fwd(input_X, params)
    jax.block_until_ready((tout, hvac_l, ext_l, int_l, dq_l))

    assert tout.shape == (B, T, 1) and hvac_l.shape == (B, T, 1)
    assert ext_l.shape == (B, T, 1) and int_l.shape == (B, T, 1) and dq_l.shape == (B, T, 1)
    assert bool(jnp.all(jnp.isfinite(tout))) and bool(jnp.all(jnp.isfinite(dq_l)))
    print("KERNEL_OK")
</pallas_src>

<mosaic_0001>
module attributes {stable_mosaic.version = 11 : i64} {
  func.func @modnn_kernel(%arg0: memref<32x128xf32, #tpu.memory_space<vmem>>, %arg1: memref<32x128xf32, #tpu.memory_space<vmem>>, %arg2: memref<32x128xf32, #tpu.memory_space<vmem>>, %arg3: memref<32x128xf32, #tpu.memory_space<vmem>>, %arg4: memref<32x128xf32, #tpu.memory_space<vmem>>, %arg5: memref<32x128xf32, #tpu.memory_space<vmem>>, %arg6: memref<32x128xf32, #tpu.memory_space<vmem>>, %arg7: memref<8xf32, #tpu.memory_space<smem>>, %arg8: memref<16x1xf32, #tpu.memory_space<vmem>>, %arg9: memref<16x16xf32, #tpu.memory_space<vmem>>, %arg10: memref<16x1xf32, #tpu.memory_space<vmem>>, %arg11: memref<16x1xf32, #tpu.memory_space<vmem>>, %arg12: memref<16xf32, #tpu.memory_space<smem>>, %arg13: memref<8xf32, #tpu.memory_space<smem>>, %arg14: memref<8xf32, #tpu.memory_space<smem>>, %arg15: memref<32x128xf32, #tpu.memory_space<vmem>>, %arg16: memref<32x128xf32, #tpu.memory_space<vmem>>, %arg17: memref<32x128xf32, #tpu.memory_space<vmem>>, %arg18: memref<32x128xf32, #tpu.memory_space<vmem>>, %arg19: memref<32x128xf32, #tpu.memory_space<vmem>>) attributes {dimension_semantics = [], scalar_prefetch = 0 : i64, scratch_operands = 0 : i64, tpu.core_type = #tpu.core_type<tc>} {
    %c0 = arith.constant 0 : index
    %0 = memref.load %arg7[%c0] : memref<8xf32, #tpu.memory_space<smem>>
    %c1 = arith.constant 1 : index
    %1 = memref.load %arg7[%c1] : memref<8xf32, #tpu.memory_space<smem>>
    %c2 = arith.constant 2 : index
    %2 = memref.load %arg7[%c2] : memref<8xf32, #tpu.memory_space<smem>>
    %c3 = arith.constant 3 : index
    %3 = memref.load %arg7[%c3] : memref<8xf32, #tpu.memory_space<smem>>
    %c4 = arith.constant 4 : index
    %4 = memref.load %arg7[%c4] : memref<8xf32, #tpu.memory_space<smem>>
    %c5 = arith.constant 5 : index
    %5 = memref.load %arg7[%c5] : memref<8xf32, #tpu.memory_space<smem>>
    %c6 = arith.constant 6 : index
    %6 = memref.load %arg7[%c6] : memref<8xf32, #tpu.memory_space<smem>>
    %c7 = arith.constant 7 : index
    %7 = memref.load %arg7[%c7] : memref<8xf32, #tpu.memory_space<smem>>
    %c0_0 = arith.constant 0 : index
    %c0_1 = arith.constant 0 : index
    %8 = vector.load %arg8[%c0_0, %c0_1] : memref<16x1xf32, #tpu.memory_space<vmem>>, vector<16x1xf32>
    %c0_2 = arith.constant 0 : index
    %c0_3 = arith.constant 0 : index
    %9 = vector.load %arg9[%c0_2, %c0_3] : memref<16x16xf32, #tpu.memory_space<vmem>>, vector<16x16xf32>
    %c0_4 = arith.constant 0 : index
    %c0_5 = arith.constant 0 : index
    %10 = vector.load %arg10[%c0_4, %c0_5] : memref<16x1xf32, #tpu.memory_space<vmem>>, vector<16x1xf32>
    %c0_6 = arith.constant 0 : index
    %c0_7 = arith.constant 0 : index
    %11 = vector.load %arg11[%c0_6, %c0_7] : memref<16x1xf32, #tpu.memory_space<vmem>>, vector<16x1xf32>
    %c0_8 = arith.constant 0 : index
    %c0_9 = arith.constant 0 : index
    %12 = vector.load %arg6[%c0_8, %c0_9] : memref<32x128xf32, #tpu.memory_space<vmem>>, vector<32x128xf32>
    %13 = vector.broadcast %3 : f32 to vector<32x128xf32>
    %14 = arith.mulf %13, %12 : vector<32x128xf32>
    %c0_10 = arith.constant 0 : index
    %c0_11 = arith.constant 0 : index
    %15 = vector.load %arg16[%c0_10, %c0_11] : memref<32x128xf32, #tpu.memory_space<vmem>>, vector<32x128xf32>
    tpu.vector_store %arg16[%c0_10, %c0_11], %14 {strides = array<i32>} : memref<32x128xf32, #tpu.memory_space<vmem>>, vector<32x128xf32>,
    %16 = vector.extract_strided_slice %12 {offsets = [0, 0], sizes = [4, 128], strides = [1, 1]} : vector<32x128xf32> to vector<4x128xf32>
    %c0_12 = arith.constant 0 : index
    %c0_13 = arith.constant 0 : index
    %17 = vector.load %arg16[%c0_12, %c0_13] : memref<32x128xf32, #tpu.memory_space<vmem>>, vector<4x128xf32>
    tpu.vector_store %arg16[%c0_12, %c0_13], %16 {strides = array<i32>} : memref<32x128xf32, #tpu.memory_space<vmem>>, vector<4x128xf32>,
    %c0_14 = arith.constant 0 : index
    %c0_15 = arith.constant 0 : index
    %18 = vector.load %arg3[%c0_14, %c0_15] : memref<32x128xf32, #tpu.memory_space<vmem>>, vector<32x128xf32>
    %c0_16 = arith.constant 0 : index
    %c0_17 = arith.constant 0 : index
    %19 = vector.load %arg4[%c0_16, %c0_17] : memref<32x128xf32, #tpu.memory_space<vmem>>, vector<32x128xf32>
    %cst = arith.constant 0.000000e+00 : f32
    %20 = vector.broadcast %cst : f32 to vector<32x128xf32>
    %21 = vector.broadcast %7 : f32 to vector<32x128xf32>
    %22 = arith.addf %20, %21 : vector<32x128xf32>
    %c0_18 = arith.constant 0 : index
    %23 = memref.load %arg12[%c0_18] : memref<16xf32, #tpu.memory_space<smem>>
    %24 = vector.broadcast %23 : f32 to vector<32x128xf32>
    %25 = arith.mulf %24, %18 : vector<32x128xf32>
    %c1_19 = arith.constant 1 : index
    %26 = memref.load %arg12[%c1_19] : memref<16xf32, #tpu.memory_space<smem>>
    %27 = vector.broadcast %26 : f32 to vector<32x128xf32>
    %28 = arith.mulf %27, %19 : vector<32x128xf32>
    %29 = arith.addf %25, %28 : vector<32x128xf32>
    %c0_20 = arith.constant 0 : index
    %30 = memref.load %arg13[%c0_20] : memref<8xf32, #tpu.memory_space<smem>>
    %31 = vector.broadcast %30 : f32 to vector<32x128xf32>
    %32 = arith.addf %29, %31 : vector<32x128xf32>
    %cst_21 = arith.constant 0.000000e+00 : f32
    %33 = vector.broadcast %cst_21 : f32 to vector<32x128xf32>
    %34 = arith.maximumf %32, %33 : vector<32x128xf32>
    %c0_22 = arith.constant 0 : index
    %35 = memref.load %arg14[%c0_22] : memref<8xf32, #tpu.memory_space<smem>>
    %36 = vector.broadcast %35 : f32 to vector<32x128xf32>
    %37 = arith.mulf %36, %34 : vector<32x128xf32>
    %38 = arith.addf %22, %37 : vector<32x128xf32>
    %c2_23 = arith.constant 2 : index
    %39 = memref.load %arg12[%c2_23] : memref<16xf32, #tpu.memory_space<smem>>
    %40 = vector.broadcast %39 : f32 to vector<32x128xf32>
    %41 = arith.mulf %40, %18 : vector<32x128xf32>
    %c3_24 = arith.constant 3 : index
    %42 = memref.load %arg12[%c3_24] : memref<16xf32, #tpu.memory_space<smem>>
    %43 = vector.broadcast %42 : f32 to vector<32x128xf32>
    %44 = arith.mulf %43, %19 : vector<32x128xf32>
    %45 = arith.addf %41, %44 : vector<32x128xf32>
    %c1_25 = arith.constant 1 : index
    %46 = memref.load %arg13[%c1_25] : memref<8xf32, #tpu.memory_space<smem>>
    %47 = vector.broadcast %46 : f32 to vector<32x128xf32>
    %48 = arith.addf %45, %47 : vector<32x128xf32>
    %cst_26 = arith.constant 0.000000e+00 : f32
    %49 = vector.broadcast %cst_26 : f32 to vector<32x128xf32>
    %50 = arith.maximumf %48, %49 : vector<32x128xf32>
    %c1_27 = arith.constant 1 : index
    %51 = memref.load %arg14[%c1_27] : memref<8xf32, #tpu.memory_space<smem>>
    %52 = vector.broadcast %51 : f32 to vector<32x128xf32>
    %53 = arith.mulf %52, %50 : vector<32x128xf32>
    %54 = arith.addf %38, %53 : vector<32x128xf32>
    %c4_28 = arith.constant 4 : index
    %55 = memref.load %arg12[%c4_28] : memref<16xf32, #tpu.memory_space<smem>>
    %56 = vector.broadcast %55 : f32 to vector<32x128xf32>
    %57 = arith.mulf %56, %18 : vector<32x128xf32>
    %c5_29 = arith.constant 5 : index
    %58 = memref.load %arg12[%c5_29] : memref<16xf32, #tpu.memory_space<smem>>
    %59 = vector.broadcast %58 : f32 to vector<32x128xf32>
    %60 = arith.mulf %59, %19 : vector<32x128xf32>
    %61 = arith.addf %57, %60 : vector<32x128xf32>
    %c2_30 = arith.constant 2 : index
    %62 = memref.load %arg13[%c2_30] : memref<8xf32, #tpu.memory_space<smem>>
    %63 = vector.broadcast %62 : f32 to vector<32x128xf32>
    %64 = arith.addf %61, %63 : vector<32x128xf32>
    %cst_31 = arith.constant 0.000000e+00 : f32
    %65 = vector.broadcast %cst_31 : f32 to vector<32x128xf32>
    %66 = arith.maximumf %64, %65 : vector<32x128xf32>
    %c2_32 = arith.constant 2 : index
    %67 = memref.load %arg14[%c2_32] : memref<8xf32, #tpu.memory_space<smem>>
    %68 = vector.broadcast %67 : f32 to vector<32x128xf32>
    %69 = arith.mulf %68, %66 : vector<32x128xf32>
    %70 = arith.addf %54, %69 : vector<32x128xf32>
    %c6_33 = arith.constant 6 : index
    %71 = memref.load %arg12[%c6_33] : memref<16xf32, #tpu.memory_space<smem>>
    %72 = vector.broadcast %71 : f32 to vector<32x128xf32>
    %73 = arith.mulf %72, %18 : vector<32x128xf32>
    %c7_34 = arith.constant 7 : index
    %74 = memref.load %arg12[%c7_34] : memref<16xf32, #tpu.memory_space<smem>>
    %75 = vector.broadcast %74 : f32 to vector<32x128xf32>
    %76 = arith.mulf %75, %19 : vector<32x128xf32>
    %77 = arith.addf %73, %76 : vector<32x128xf32>
    %c3_35 = arith.constant 3 : index
    %78 = memref.load %arg13[%c3_35] : memref<8xf32, #tpu.memory_space<smem>>
    %79 = vector.broadcast %78 : f32 to vector<32x128xf32>
    %80 = arith.addf %77, %79 : vector<32x128xf32>
    %cst_36 = arith.constant 0.000000e+00 : f32
    %81 = vector.broadcast %cst_36 : f32 to vector<32x128xf32>
    %82 = arith.maximumf %80, %81 : vector<32x128xf32>
    %c3_37 = arith.constant 3 : index
    %83 = memref.load %arg14[%c3_37] : memref<8xf32, #tpu.memory_space<smem>>
    %84 = vector.broadcast %83 : f32 to vector<32x128xf32>
    %85 = arith.mulf %84, %82 : vector<32x128xf32>
    %86 = arith.addf %70, %85 : vector<32x128xf32>
    %c8 = arith.constant 8 : index
    %87 = memref.load %arg12[%c8] : memref<16xf32, #tpu.memory_space<smem>>
    %88 = vector.broadcast %87 : f32 to vector<32x128xf32>
    %89 = arith.mulf %88, %18 : vector<32x128xf32>
    %c9 = arith.constant 9 : index
    %90 = memref.load %arg12[%c9] : memref<16xf32, #tpu.memory_space<smem>>
    %91 = vector.broadcast %90 : f32 to vector<32x128xf32>
    %92 = arith.mulf %91, %19 : vector<32x128xf32>
    %93 = arith.addf %89, %92 : vector<32x128xf32>
    %c4_38 = arith.constant 4 : index
    %94 = memref.load %arg13[%c4_38] : memref<8xf32, #tpu.memory_space<smem>>
    %95 = vector.broadcast %94 : f32 to vector<32x128xf32>
    %96 = arith.addf %93, %95 : vector<32x128xf32>
    %cst_39 = arith.constant 0.000000e+00 : f32
    %97 = vector.broadcast %cst_39 : f32 to vector<32x128xf32>
    %98 = arith.maximumf %96, %97 : vector<32x128xf32>
    %c4_40 = arith.constant 4 : index
    %99 = memref.load %arg14[%c4_40] : memref<8xf32, #tpu.memory_space<smem>>
    %100 = vector.broadcast %99 : f32 to vector<32x128xf32>
    %101 = arith.mulf %100, %98 : vector<32x128xf32>
    %102 = arith.addf %86, %101 : vector<32x128xf32>
    %c10 = arith.constant 10 : index
    %103 = memref.load %arg12[%c10] : memref<16xf32, #tpu.memory_space<smem>>
    %104 = vector.broadcast %103 : f32 to vector<32x128xf32>
    %105 = arith.mulf %104, %18 : vector<32x128xf32>
    %c11 = arith.constant 11 : index
    %106 = memref.load %arg12[%c11] : memref<16xf32, #tpu.memory_space<smem>>
    %107 = vector.broadcast %106 : f32 to vector<32x128xf32>
    %108 = arith.mulf %107, %19 : vector<32x128xf32>
    %109 = arith.addf %105, %108 : vector<32x128xf32>
    %c5_41 = arith.constant 5 : index
    %110 = memref.load %arg13[%c5_41] : memref<8xf32, #tpu.memory_space<smem>>
    %111 = vector.broadcast %110 : f32 to vector<32x128xf32>
    %112 = arith.addf %109, %111 : vector<32x128xf32>
    %cst_42 = arith.constant 0.000000e+00 : f32
    %113 = vector.broadcast %cst_42 : f32 to vector<32x128xf32>
    %114 = arith.maximumf %112, %113 : vector<32x128xf32>
    %c5_43 = arith.constant 5 : index
    %115 = memref.load %arg14[%c5_43] : memref<8xf32, #tpu.memory_space<smem>>
    %116 = vector.broadcast %115 : f32 to vector<32x128xf32>
    %117 = arith.mulf %116, %114 : vector<32x128xf32>
    %118 = arith.addf %102, %117 : vector<32x128xf32>
    %c12 = arith.constant 12 : index
    %119 = memref.load %arg12[%c12] : memref<16xf32, #tpu.memory_space<smem>>
    %120 = vector.broadcast %119 : f32 to vector<32x128xf32>
    %121 = arith.mulf %120, %18 : vector<32x128xf32>
    %c13 = arith.constant 13 : index
    %122 = memref.load %arg12[%c13] : memref<16xf32, #tpu.memory_space<smem>>
    %123 = vector.broadcast %122 : f32 to vector<32x128xf32>
    %124 = arith.mulf %123, %19 : vector<32x128xf32>
    %125 = arith.addf %121, %124 : vector<32x128xf32>
    %c6_44 = arith.constant 6 : index
    %126 = memref.load %arg13[%c6_44] : memref<8xf32, #tpu.memory_space<smem>>
    %127 = vector.broadcast %126 : f32 to vector<32x128xf32>
    %128 = arith.addf %125, %127 : vector<32x128xf32>
    %cst_45 = arith.constant 0.000000e+00 : f32
    %129 = vector.broadcast %cst_45 : f32 to vector<32x128xf32>
    %130 = arith.maximumf %128, %129 : vector<32x128xf32>
    %c6_46 = arith.constant 6 : index
    %131 = memref.load %arg14[%c6_46] : memref<8xf32, #tpu.memory_space<smem>>
    %132 = vector.broadcast %131 : f32 to vector<32x128xf32>
    %133 = arith.mulf %132, %130 : vector<32x128xf32>
    %134 = arith.addf %118, %133 : vector<32x128xf32>
    %c14 = arith.constant 14 : index
    %135 = memref.load %arg12[%c14] : memref<16xf32, #tpu.memory_space<smem>>
    %136 = vector.broadcast %135 : f32 to vector<32x128xf32>
    %137 = arith.mulf %136, %18 : vector<32x128xf32>
    %c15 = arith.constant 15 : index
    %138 = memref.load %arg12[%c15] : memref<16xf32, #tpu.memory_space<smem>>
    %139 = vector.broadcast %138 : f32 to vector<32x128xf32>
    %140 = arith.mulf %139, %19 : vector<32x128xf32>
    %141 = arith.addf %137, %140 : vector<32x128xf32>
    %c7_47 = arith.constant 7 : index
    %142 = memref.load %arg13[%c7_47] : memref<8xf32, #tpu.memory_space<smem>>
    %143 = vector.broadcast %142 : f32 to vector<32x128xf32>
    %144 = arith.addf %141, %143 : vector<32x128xf32>
    %cst_48 = arith.constant 0.000000e+00 : f32
    %145 = vector.broadcast %cst_48 : f32 to vector<32x128xf32>
    %146 = arith.maximumf %144, %145 : vector<32x128xf32>
    %c7_49 = arith.constant 7 : index
    %147 = memref.load %arg14[%c7_49] : memref<8xf32, #tpu.memory_space<smem>>
    %148 = vector.broadcast %147 : f32 to vector<32x128xf32>
    %149 = arith.mulf %148, %146 : vector<32x128xf32>
    %150 = arith.addf %134, %149 : vector<32x128xf32>
    %cst_50 = arith.constant 0.000000e+00 : f32
    %151 = vector.broadcast %cst_50 : f32 to vector<32x128xf32>
    %152 = arith.subf %151, %150 : vector<32x128xf32>
    %153 = math.exp %152 : vector<32x128xf32>
    %cst_51 = arith.constant 1.000000e+00 : f32
    %154 = vector.broadcast %cst_51 : f32 to vector<32x128xf32>
    %155 = arith.addf %154, %153 : vector<32x128xf32>
    %cst_52 = arith.constant 1.000000e+00 : f32
    %156 = vector.broadcast %cst_52 : f32 to vector<32x128xf32>
    %157 = arith.divf %156, %155 : vector<32x128xf32>
    %c0_53 = arith.constant 0 : index
    %c0_54 = arith.constant 0 : index
    %158 = vector.load %arg5[%c0_53, %c0_54] : memref<32x128xf32, #tpu.memory_space<vmem>>, vector<32x128xf32>
    %159 = arith.addf %157, %158 : vector<32x128xf32>
    %160 = vector.broadcast %4 : f32 to vector<32x128xf32>
    %161 = arith.mulf %160, %159 : vector<32x128xf32>
    %c0_55 = arith.constant 0 : index
    %c0_56 = arith.constant 0 : index
    %162 = vector.load %arg18[%c0_55, %c0_56] : memref<32x128xf32, #tpu.memory_space<vmem>>, vector<32x128xf32>
    tpu.vector_store %arg18[%c0_55, %c0_56], %161 {strides = array<i32>} : memref<32x128xf32, #tpu.memory_space<vmem>>, vector<32x128xf32>,
    %cst_57 = arith.constant 0.000000e+00 : f32
    %163 = vector.broadcast %cst_57 : f32 to vector<4x128xf32>
    %c0_58 = arith.constant 0 : index
    %c0_59 = arith.constant 0 : index
    %164 = vector.load %arg18[%c0_58, %c0_59] : memref<32x128xf32, #tpu.memory_space<vmem>>, vector<4x128xf32>
    tpu.vector_store %arg18[%c0_58, %c0_59], %163 {strides = array<i32>} : memref<32x128xf32, #tpu.memory_space<vmem>>, vector<4x128xf32>,
    %165 = arith.addf %14, %161 : vector<32x128xf32>
    %c0_60 = arith.constant 0 : index
    %c0_61 = arith.constant 0 : index
    %166 = vector.load %arg19[%c0_60, %c0_61] : memref<32x128xf32, #tpu.memory_space<vmem>>, vector<32x128xf32>
    tpu.vector_store %arg19[%c0_60, %c0_61], %165 {strides = array<i32>} : memref<32x128xf32, #tpu.memory_space<vmem>>, vector<32x128xf32>,
    %cst_62 = arith.constant 0.000000e+00 : f32
    %167 = vector.broadcast %cst_62 : f32 to vector<4x128xf32>
    %c0_63 = arith.constant 0 : index
    %c0_64 = arith.constant 0 : index
    %168 = vector.load %arg19[%c0_63, %c0_64] : memref<32x128xf32, #tpu.memory_space<vmem>>, vector<4x128xf32>
    tpu.vector_store %arg19[%c0_63, %c0_64], %167 {strides = array<i32>} : memref<32x128xf32, #tpu.memory_space<vmem>>, vector<4x128xf32>,
    %cst_65 = arith.constant 0.000000e+00 : f32
    %169 = vector.broadcast %cst_65 : f32 to vector<4x128xf32>
    %c0_66 = arith.constant 0 : index
    %c0_67 = arith.constant 0 : index
    %170 = vector.load %arg17[%c0_66, %c0_67] : memref<32x128xf32, #tpu.memory_space<vmem>>, vector<4x128xf32>
    tpu.vector_store %arg17[%c0_66, %c0_67], %169 {strides = array<i32>} : memref<32x128xf32, #tpu.memory_space<vmem>>, vector<4x128xf32>,
    %c0_68 = arith.constant 0 : index
    %c0_69 = arith.constant 0 : index
    %171 = vector.load %arg0[%c0_68, %c0_69] : memref<32x128xf32, #tpu.memory_space<vmem>>, vector<4x128xf32>
    %c0_70 = arith.constant 0 : index
    %c0_71 = arith.constant 0 : index
    %172 = vector.load %arg15[%c0_70, %c0_71] : memref<32x128xf32, #tpu.memory_space<vmem>>, vector<4x128xf32>
    tpu.vector_store %arg15[%c0_70, %c0_71], %171 {strides = array<i32>} : memref<32x128xf32, #tpu.memory_space<vmem>>, vector<4x128xf32>,
    %c4_72 = arith.constant 4 : index
    %c0_73 = arith.constant 0 : index
    %173 = vector.load %arg0[%c4_72, %c0_73] : memref<32x128xf32, #tpu.memory_space<vmem>>, vector<1x128xf32>
    %c0_74 = arith.constant 0 : index
    %c0_75 = arith.constant 0 : index
    %174 = vector.load %arg2[%c0_74, %c0_75] : memref<32x128xf32, #tpu.memory_space<vmem>>, vector<4x128xf32>
    %175 = vector.broadcast %2 : f32 to vector<4x128xf32>
    %176 = arith.mulf %175, %174 : vector<4x128xf32>
    %c0_76 = arith.constant 0 : index
    %c0_77 = arith.constant 0 : index
    %177 = vector.load %arg1[%c0_76, %c0_77] : memref<32x128xf32, #tpu.memory_space<vmem>>, vector<4x128xf32>
    %178 = vector.broadcast %0 : f32 to vector<4x128xf32>
    %179 = arith.mulf %178, %177 : vector<4x128xf32>
    %180 = arith.addf %176, %179 : vector<4x128xf32>
    %cst_78 = arith.constant 1.000000e+00 : f32
    %181 = vector.broadcast %cst_78 : f32 to vector<16x128xf32>
    %c4_79 = arith.constant 4 : index
    %c0_80 = arith.constant 0 : index
    %182 = vector.load %arg0[%c4_79, %c0_80] : memref<32x128xf32, #tpu.memory_space<vmem>>, vector<1x128xf32>
    %c4_81 = arith.constant 4 : index
    %c0_82 = arith.constant 0 : index
    %183 = vector.load %arg2[%c4_81, %c0_82] : memref<32x128xf32, #tpu.memory_space<vmem>>, vector<1x128xf32>
    %184 = vector.broadcast %2 : f32 to vector<1x128xf32>
    %185 = arith.mulf %184, %183 : vector<1x128xf32>
    %c4_83 = arith.constant 4 : index
    %c0_84 = arith.constant 0 : index
    %186 = vector.load %arg1[%c4_83, %c0_84] : memref<32x128xf32, #tpu.memory_space<vmem>>, vector<1x128xf32>
    %187 = vector.broadcast %0 : f32 to vector<1x128xf32>
    %188 = arith.mulf %187, %186 : vector<1x128xf32>
    %189 = arith.addf %185, %188 : vector<1x128xf32>
    %c4_85 = arith.constant 4 : index
    %c0_86 = arith.constant 0 : index
    %190 = vector.load %arg19[%c4_85, %c0_86] : memref<32x128xf32, #tpu.memory_space<vmem>>, vector<1x128xf32>
    %191 = vector.extract_strided_slice %171 {offsets = [1, 0], sizes = [3, 128], strides = [1, 1]} : vector<4x128xf32> to vector<3x128xf32>
    %192 = tpu.concatenate %191, %182 in 0 : vector<3x128xf32>, vector<1x128xf32> -> vector<4x128xf32>
    %193 = vector.extract_strided_slice %180 {offsets = [1, 0], sizes = [3, 128], strides = [1, 1]} : vector<4x128xf32> to vector<3x128xf32>
    %194 = tpu.concatenate %193, %189 in 0 : vector<3x128xf32>, vector<1x128xf32> -> vector<4x128xf32>
    %195 = vector.extract_strided_slice %171 {offsets = [1, 0], sizes = [3, 128], strides = [1, 1]} : vector<4x128xf32> to vector<3x128xf32>
    %196 = tpu.concatenate %195, %173 in 0 : vector<3x128xf32>, vector<1x128xf32> -> vector<4x128xf32>
    %cst_87 = arith.constant 2.500000e-01 : f32
    %197 = vector.broadcast %cst_87 : f32 to vector<4x128xf32>
    %198 = arith.mulf %192, %197 : vector<4x128xf32>
    %cst_88 = arith.constant 7.500000e-01 : f32
    %199 = vector.broadcast %cst_88 : f32 to vector<4x128xf32>
    %200 = arith.mulf %196, %199 : vector<4x128xf32>
    %201 = arith.addf %198, %200 : vector<4x128xf32>
    %202 = vector.broadcast %0 : f32 to vector<4x128xf32>
    %203 = arith.mulf %202, %201 : vector<4x128xf32>
    %204 = arith.subf %194, %203 : vector<4x128xf32>
    %205 = vector.extract_strided_slice %204 {offsets = [0, 0], sizes = [1, 128], strides = [1, 1]} : vector<4x128xf32> to vector<1x128xf32>
    %206 = vector.broadcast %8 : vector<16x1xf32> to vector<16x128xf32>
    %207 = vector.broadcast %205 : vector<1x128xf32> to vector<16x128xf32>
    %208 = arith.mulf %206, %207 : vector<16x128xf32>
    %209 = vector.broadcast %10 : vector<16x1xf32> to vector<16x128xf32>
    %210 = arith.addf %208, %209 : vector<16x128xf32>
    %211 = vector.extract_strided_slice %204 {offsets = [1, 0], sizes = [1, 128], strides = [1, 1]} : vector<4x128xf32> to vector<1x128xf32>
    %212 = vector.broadcast %8 : vector<16x1xf32> to vector<16x128xf32>
    %213 = vector.broadcast %211 : vector<1x128xf32> to vector<16x128xf32>
    %214 = arith.mulf %212, %213 : vector<16x128xf32>
    %215 = vector.broadcast %10 : vector<16x1xf32> to vector<16x128xf32>
    %216 = arith.addf %214, %215 : vector<16x128xf32>
    %217 = vector.extract_strided_slice %204 {offsets = [2, 0], sizes = [1, 128], strides = [1, 1]} : vector<4x128xf32> to vector<1x128xf32>
    %218 = vector.broadcast %8 : vector<16x1xf32> to vector<16x128xf32>
    %219 = vector.broadcast %217 : vector<1x128xf32> to vector<16x128xf32>
    %220 = arith.mulf %218, %219 : vector<16x128xf32>
    %221 = vector.broadcast %10 : vector<16x1xf32> to vector<16x128xf32>
    %222 = arith.addf %220, %221 : vector<16x128xf32>
    %223 = vector.extract_strided_slice %204 {offsets = [3, 0], sizes = [1, 128], strides = [1, 1]} : vector<4x128xf32> to vector<1x128xf32>
    %224 = vector.broadcast %8 : vector<16x1xf32> to vector<16x128xf32>
    %225 = vector.broadcast %223 : vector<1x128xf32> to vector<16x128xf32>
    %226 = arith.mulf %224, %225 : vector<16x128xf32>
    %227 = vector.broadcast %10 : vector<16x1xf32> to vector<16x128xf32>
    %228 = arith.addf %226, %227 : vector<16x128xf32>
    %cst_89 = arith.constant dense<0.000000e+00> : vector<16x128xf32>
    %229 = tpu.matmul %9, %181, %cst_89 {dimension_numbers = #tpu.dot_dimension_numbers<[1], [0], [0], [1], [0, 0, 1, 1], [], []>} : vector<16x16xf32>, vector<16x128xf32>, vector<16x128xf32> -> vector<16x128xf32>
    %230 = arith.addf %210, %229 : vector<16x128xf32>
    %231 = math.tanh %230 : vector<16x128xf32>
    %cst_90 = arith.constant dense<0.000000e+00> : vector<16x128xf32>
    %232 = tpu.matmul %9, %231, %cst_90 {dimension_numbers = #tpu.dot_dimension_numbers<[1], [0], [0], [1], [0, 0, 1, 1], [], []>} : vector<16x16xf32>, vector<16x128xf32>, vector<16x128xf32> -> vector<16x128xf32>
    %233 = arith.addf %216, %232 : vector<16x128xf32>
    %234 = math.tanh %233 : vector<16x128xf32>
    %cst_91 = arith.constant dense<0.000000e+00> : vector<16x128xf32>
    %235 = tpu.matmul %9, %234, %cst_91 {dimension_numbers = #tpu.dot_dimension_numbers<[1], [0], [0], [1], [0, 0, 1, 1], [], []>} : vector<16x16xf32>, vector<16x128xf32>, vector<16x128xf32> -> vector<16x128xf32>
    %236 = arith.addf %222, %235 : vector<16x128xf32>
    %237 = math.tanh %236 : vector<16x128xf32>
    %cst_92 = arith.constant dense<0.000000e+00> : vector<16x128xf32>
    %238 = tpu.matmul %9, %237, %cst_92 {dimension_numbers = #tpu.dot_dimension_numbers<[1], [0], [0], [1], [0, 0, 1, 1], [], []>} : vector<16x16xf32>, vector<16x128xf32>, vector<16x128xf32> -> vector<16x128xf32>
    %239 = arith.addf %228, %238 : vector<16x128xf32>
    %240 = math.tanh %239 : vector<16x128xf32>
    %241 = vector.broadcast %11 : vector<16x1xf32> to vector<16x128xf32>
    %242 = arith.mulf %241, %240 : vector<16x128xf32>
    %cst_93 = arith.constant dense<0.000000e+00> : vector<128xf32>
    %243 = vector.multi_reduction <add>, %242, %cst_93 [0] : vector<16x128xf32> to vector<128xf32>
    %244 = vector.shape_cast %243 : vector<128xf32> to vector<1x128xf32>
    %245 = vector.broadcast %6 : f32 to vector<1x128xf32>
    %246 = arith.addf %244, %245 : vector<1x128xf32>
    %247 = vector.broadcast %1 : f32 to vector<1x128xf32>
    %248 = arith.mulf %247, %183 : vector<1x128xf32>
    %249 = arith.addf %246, %248 : vector<1x128xf32>
    %250 = arith.addf %249, %190 : vector<1x128xf32>
    %251 = vector.broadcast %5 : f32 to vector<1x128xf32>
    %252 = arith.mulf %251, %250 : vector<1x128xf32>
    %253 = arith.addf %173, %252 : vector<1x128xf32>
    %c4_94 = arith.constant 4 : index
    %c0_95 = arith.constant 0 : index
    %254 = vector.load %arg15[%c4_94, %c0_95] : memref<32x128xf32, #tpu.memory_space<vmem>>, vector<1x128xf32>
    tpu.vector_store %arg15[%c4_94, %c0_95], %173 {strides = array<i32>} : memref<32x128xf32, #tpu.memory_space<vmem>>, vector<1x128xf32>,
    %c4_96 = arith.constant 4 : index
    %c0_97 = arith.constant 0 : index
    %255 = vector.load %arg17[%c4_96, %c0_97] : memref<32x128xf32, #tpu.memory_space<vmem>>, vector<1x128xf32>
    tpu.vector_store %arg17[%c4_96, %c0_97], %249 {strides = array<i32>} : memref<32x128xf32, #tpu.memory_space<vmem>>, vector<1x128xf32>,
    %c4_98 = arith.constant 4 : index
    %c0_99 = arith.constant 0 : index
    %256 = vector.load %arg19[%c4_98, %c0_99] : memref<32x128xf32, #tpu.memory_space<vmem>>, vector<1x128xf32>
    tpu.vector_store %arg19[%c4_98, %c0_99], %250 {strides = array<i32>} : memref<32x128xf32, #tpu.memory_space<vmem>>, vector<1x128xf32>,
    %c5_100 = arith.constant 5 : index
    %c0_101 = arith.constant 0 : index
    %257 = vector.load %arg0[%c5_100, %c0_101] : memref<32x128xf32, #tpu.memory_space<vmem>>, vector<1x128xf32>
    %c5_102 = arith.constant 5 : index
    %c0_103 = arith.constant 0 : index
    %258 = vector.load %arg2[%c5_102, %c0_103] : memref<32x128xf32, #tpu.memory_space<vmem>>, vector<1x128xf32>
    %259 = vector.broadcast %2 : f32 to vector<1x128xf32>
    %260 = arith.mulf %259, %258 : vector<1x128xf32>
    %c5_104 = arith.constant 5 : index
    %c0_105 = arith.constant 0 : index
    %261 = vector.load %arg1[%c5_104, %c0_105] : memref<32x128xf32, #tpu.memory_space<vmem>>, vector<1x128xf32>
    %262 = vector.broadcast %0 : f32 to vector<1x128xf32>
    %263 = arith.mulf %262, %261 : vector<1x128xf32>
    %264 = arith.addf %260, %263 : vector<1x128xf32>
    %c5_106 = arith.constant 5 : index
    %c0_107 = arith.constant 0 : index
    %265 = vector.load %arg19[%c5_106, %c0_107] : memref<32x128xf32, #tpu.memory_space<vmem>>, vector<1x128xf32>
    %266 = vector.extract_strided_slice %192 {offsets = [1, 0], sizes = [3, 128], strides = [1, 1]} : vector<4x128xf32> to vector<3x128xf32>
    %267 = tpu.concatenate %266, %257 in 0 : vector<3x128xf32>, vector<1x128xf32> -> vector<4x128xf32>
    %268 = vector.extract_strided_slice %194 {offsets = [1, 0], sizes = [3, 128], strides = [1, 1]} : vector<4x128xf32> to vector<3x128xf32>
    %269 = tpu.concatenate %268, %264 in 0 : vector<3x128xf32>, vector<1x128xf32> -> vector<4x128xf32>
    %270 = vector.extract_strided_slice %196 {offsets = [1, 0], sizes = [3, 128], strides = [1, 1]} : vector<4x128xf32> to vector<3x128xf32>
    %271 = tpu.concatenate %270, %253 in 0 : vector<3x128xf32>, vector<1x128xf32> -> vector<4x128xf32>
    %cst_108 = arith.constant 3.125000e-01 : f32
    %272 = vector.broadcast %cst_108 : f32 to vector<4x128xf32>
    %273 = arith.mulf %267, %272 : vector<4x128xf32>
    %cst_109 = arith.constant 6.875000e-01 : f32
    %274 = vector.broadcast %cst_109 : f32 to vector<4x128xf32>
    %275 = arith.mulf %271, %274 : vector<4x128xf32>
    %276 = arith.addf %273, %275 : vector<4x128xf32>
    %277 = vector.broadcast %0 : f32 to vector<4x128xf32>
    %278 = arith.mulf %277, %276 : vector<4x128xf32>
    %279 = arith.subf %269, %278 : vector<4x128xf32>
    %280 = vector.extract_strided_slice %279 {offsets = [0, 0], sizes = [1, 128], strides = [1, 1]} : vector<4x128xf32> to vector<1x128xf32>
    %281 = vector.broadcast %8 : vector<16x1xf32> to vector<16x128xf32>
    %282 = vector.broadcast %280 : vector<1x128xf32> to vector<16x128xf32>
    %283 = arith.mulf %281, %282 : vector<16x128xf32>
    %284 = vector.broadcast %10 : vector<16x1xf32> to vector<16x128xf32>
    %285 = arith.addf %283, %284 : vector<16x128xf32>
    %286 = vector.extract_strided_slice %279 {offsets = [1, 0], sizes = [1, 128], strides = [1, 1]} : vector<4x128xf32> to vector<1x128xf32>
    %287 = vector.broadcast %8 : vector<16x1xf32> to vector<16x128xf32>
    %288 = vector.broadcast %286 : vector<1x128xf32> to vector<16x128xf32>
    %289 = arith.mulf %287, %288 : vector<16x128xf32>
    %290 = vector.broadcast %10 : vector<16x1xf32> to vector<16x128xf32>
    %291 = arith.addf %289, %290 : vector<16x128xf32>
    %292 = vector.extract_strided_slice %279 {offsets = [2, 0], sizes = [1, 128], strides = [1, 1]} : vector<4x128xf32> to vector<1x128xf32>
    %293 = vector.broadcast %8 : vector<16x1xf32> to vector<16x128xf32>
    %294 = vector.broadcast %292 : vector<1x128xf32> to vector<16x128xf32>
    %295 = arith.mulf %293, %294 : vector<16x128xf32>
    %296 = vector.broadcast %10 : vector<16x1xf32> to vector<16x128xf32>
    %297 = arith.addf %295, %296 : vector<16x128xf32>
    %298 = vector.extract_strided_slice %279 {offsets = [3, 0], sizes = [1, 128], strides = [1, 1]} : vector<4x128xf32> to vector<1x128xf32>
    %299 = vector.broadcast %8 : vector<16x1xf32> to vector<16x128xf32>
    %300 = vector.broadcast %298 : vector<1x128xf32> to vector<16x128xf32>
    %301 = arith.mulf %299, %300 : vector<16x128xf32>
    %302 = vector.broadcast %10 : vector<16x1xf32> to vector<16x128xf32>
    %303 = arith.addf %301, %302 : vector<16x128xf32>
    %cst_110 = arith.constant dense<0.000000e+00> : vector<16x128xf32>
    %304 = tpu.matmul %9, %240, %cst_110 {dimension_numbers = #tpu.dot_dimension_numbers<[1], [0], [0], [1], [0, 0, 1, 1], [], []>} : vector<16x16xf32>, vector<16x128xf32>, vector<16x128xf32> -> vector<16x128xf32>
    %305 = arith.addf %285, %304 : vector<16x128xf32>
    %306 = math.tanh %305 : vector<16x128xf32>
    %cst_111 = arith.constant dense<0.000000e+00> : vector<16x128xf32>
    %307 = tpu.matmul %9, %306, %cst_111 {dimension_numbers = #tpu.dot_dimension_numbers<[1], [0], [0], [1], [0, 0, 1, 1], [], []>} : vector<16x16xf32>, vector<16x128xf32>, vector<16x128xf32> -> vector<16x128xf32>
    %308 = arith.addf %291, %307 : vector<16x128xf32>
    %309 = math.tanh %308 : vector<16x128xf32>
    %cst_112 = arith.constant dense<0.000000e+00> : vector<16x128xf32>
    %310 = tpu.matmul %9, %309, %cst_112 {dimension_numbers = #tpu.dot_dimension_numbers<[1], [0], [0], [1], [0, 0, 1, 1], [], []>} : vector<16x16xf32>, vector<16x128xf32>, vector<16x128xf32> -> vector<16x128xf32>
    %311 = arith.addf %297, %310 : vector<16x128xf32>
    %312 = math.tanh %311 : vector<16x128xf32>
    %cst_113 = arith.constant dense<0.000000e+00> : vector<16x128xf32>
    %313 = tpu.matmul %9, %312, %cst_113 {dimension_numbers = #tpu.dot_dimension_numbers<[1], [0], [0], [1], [0, 0, 1, 1], [], []>} : vector<16x16xf32>, vector<16x128xf32>, vector<16x128xf32> -> vector<16x128xf32>
    %314 = arith.addf %303, %313 : vector<16x128xf32>
    %315 = math.tanh %314 : vector<16x128xf32>
    %316 = vector.broadcast %11 : vector<16x1xf32> to vector<16x128xf32>
    %317 = arith.mulf %316, %315 : vector<16x128xf32>
    %cst_114 = arith.constant dense<0.000000e+00> : vector<128xf32>
    %318 = vector.multi_reduction <add>, %317, %cst_114 [0] : vector<16x128xf32> to vector<128xf32>
    %319 = vector.shape_cast %318 : vector<128xf32> to vector<1x128xf32>
    %320 = vector.broadcast %6 : f32 to vector<1x128xf32>
    %321 = arith.addf %319, %320 : vector<1x128xf32>
    %322 = vector.broadcast %1 : f32 to vector<1x128xf32>
    %323 = arith.mulf %322, %258 : vector<1x128xf32>
    %324 = arith.addf %321, %323 : vector<1x128xf32>
    %325 = arith.addf %324, %265 : vector<1x128xf32>
    %326 = vector.broadcast %5 : f32 to vector<1x128xf32>
    %327 = arith.mulf %326, %325 : vector<1x128xf32>
    %328 = arith.addf %253, %327 : vector<1x128xf32>
    %c5_115 = arith.constant 5 : index
    %c0_116 = arith.constant 0 : index
    %329 = vector.load %arg15[%c5_115, %c0_116] : memref<32x128xf32, #tpu.memory_space<vmem>>, vector<1x128xf32>
    tpu.vector_store %arg15[%c5_115, %c0_116], %253 {strides = array<i32>} : memref<32x128xf32, #tpu.memory_space<vmem>>, vector<1x128xf32>,
    %c5_117 = arith.constant 5 : index
    %c0_118 = arith.constant 0 : index
    %330 = vector.load %arg17[%c5_117, %c0_118] : memref<32x128xf32, #tpu.memory_space<vmem>>, vector<1x128xf32>
    tpu.vector_store %arg17[%c5_117, %c0_118], %324 {strides = array<i32>} : memref<32x128xf32, #tpu.memory_space<vmem>>, vector<1x128xf32>,
    %c5_119 = arith.constant 5 : index
    %c0_120 = arith.constant 0 : index
    %331 = vector.load %arg19[%c5_119, %c0_120] : memref<32x128xf32, #tpu.memory_space<vmem>>, vector<1x128xf32>
    tpu.vector_store %arg19[%c5_119, %c0_120], %325 {strides = array<i32>} : memref<32x128xf32, #tpu.memory_space<vmem>>, vector<1x128xf32>,
    %c6_121 = arith.constant 6 : index
    %c0_122 = arith.constant 0 : index
    %332 = vector.load %arg0[%c6_121, %c0_122] : memref<32x128xf32, #tpu.memory_space<vmem>>, vector<1x128xf32>
    %c6_123 = arith.constant 6 : index
    %c0_124 = arith.constant 0 : index
    %333 = vector.load %arg2[%c6_123, %c0_124] : memref<32x128xf32, #tpu.memory_space<vmem>>, vector<1x128xf32>
    %334 = vector.broadcast %2 : f32 to vector<1x128xf32>
    %335 = arith.mulf %334, %333 : vector<1x128xf32>
    %c6_125 = arith.constant 6 : index
    %c0_126 = arith.constant 0 : index
    %336 = vector.load %arg1[%c6_125, %c0_126] : memref<32x128xf32, #tpu.memory_space<vmem>>, vector<1x128xf32>
    %337 = vector.broadcast %0 : f32 to vector<1x128xf32>
    %338 = arith.mulf %337, %336 : vector<1x128xf32>
    %339 = arith.addf %335, %338 : vector<1x128xf32>
    %c6_127 = arith.constant 6 : index
    %c0_128 = arith.constant 0 : index
    %340 = vector.load %arg19[%c6_127, %c0_128] : memref<32x128xf32, #tpu.memory_space<vmem>>, vector<1x128xf32>
    %341 = vector.extract_strided_slice %267 {offsets = [1, 0], sizes = [3, 128], strides = [1, 1]} : vector<4x128xf32> to vector<3x128xf32>
    %342 = tpu.concatenate %341, %332 in 0 : vector<3x128xf32>, vector<1x128xf32> -> vector<4x128xf32>
    %343 = vector.extract_strided_slice %269 {offsets = [1, 0], sizes = [3, 128], strides = [1, 1]} : vector<4x128xf32> to vector<3x128xf32>
    %344 = tpu.concatenate %343, %339 in 0 : vector<3x128xf32>, vector<1x128xf32> -> vector<4x128xf32>
    %345 = vector.extract_strided_slice %271 {offsets = [1, 0], sizes = [3, 128], strides = [1, 1]} : vector<4x128xf32> to vector<3x128xf32>
    %346 = tpu.concatenate %345, %328 in 0 : vector<3x128xf32>, vector<1x128xf32> -> vector<4x128xf32>
    %cst_129 = arith.constant 3.750000e-01 : f32
    %347 = vector.broadcast %cst_129 : f32 to vector<4x128xf32>
    %348 = arith.mulf %342, %347 : vector<4x128xf32>
    %cst_130 = arith.constant 6.250000e-01 : f32
    %349 = vector.broadcast %cst_130 : f32 to vector<4x128xf32>
    %350 = arith.mulf %346, %349 : vector<4x128xf32>
    %351 = arith.addf %348, %350 : vector<4x128xf32>
    %352 = vector.broadcast %0 : f32 to vector<4x128xf32>
    %353 = arith.mulf %352, %351 : vector<4x128xf32>
    %354 = arith.subf %344, %353 : vector<4x128xf32>
    %355 = vector.extract_strided_slice %354 {offsets = [0, 0], sizes = [1, 128], strides = [1, 1]} : vector<4x128xf32> to vector<1x128xf32>
    %356 = vector.broadcast %8 : vector<16x1xf32> to vector<16x128xf32>
    %357 = vector.broadcast %355 : vector<1x128xf32> to vector<16x128xf32>
    %358 = arith.mulf %356, %357 : vector<16x128xf32>
    %359 = vector.broadcast %10 : vector<16x1xf32> to vector<16x128xf32>
    %360 = arith.addf %358, %359 : vector<16x128xf32>
    %361 = vector.extract_strided_slice %354 {offsets = [1, 0], sizes = [1, 128], strides = [1, 1]} : vector<4x128xf32> to vector<1x128xf32>
    %362 = vector.broadcast %8 : vector<16x1xf32> to vector<16x128xf32>
    %363 = vector.broadcast %361 : vector<1x128xf32> to vector<16x128xf32>
    %364 = arith.mulf %362, %363 : vector<16x128xf32>
    %365 = vector.broadcast %10 : vector<16x1xf32> to vector<16x128xf32>
    %366 = arith.addf %364, %365 : vector<16x128xf32>
    %367 = vector.extract_strided_slice %354 {offsets = [2, 0], sizes = [1, 128], strides = [1, 1]} : vector<4x128xf32> to vector<1x128xf32>
    %368 = vector.broadcast %8 : vector<16x1xf32> to vector<16x128xf32>
    %369 = vector.broadcast %367 : vector<1x128xf32> to vector<16x128xf32>
    %370 = arith.mulf %368, %369 : vector<16x128xf32>
    %371 = vector.broadcast %10 : vector<16x1xf32> to vector<16x128xf32>
    %372 = arith.addf %370, %371 : vector<16x128xf32>
    %373 = vector.extract_strided_slice %354 {offsets = [3, 0], sizes = [1, 128], strides = [1, 1]} : vector<4x128xf32> to vector<1x128xf32>
    %374 = vector.broadcast %8 : vector<16x1xf32> to vector<16x128xf32>
    %375 = vector.broadcast %373 : vector<1x128xf32> to vector<16x128xf32>
    %376 = arith.mulf %374, %375 : vector<16x128xf32>
    %377 = vector.broadcast %10 : vector<16x1xf32> to vector<16x128xf32>
    %378 = arith.addf %376, %377 : vector<16x128xf32>
    %cst_131 = arith.constant dense<0.000000e+00> : vector<16x128xf32>
    %379 = tpu.matmul %9, %315, %cst_131 {dimension_numbers = #tpu.dot_dimension_numbers<[1], [0], [0], [1], [0, 0, 1, 1], [], []>} : vector<16x16xf32>, vector<16x128xf32>, vector<16x128xf32> -> vector<16x128xf32>
    %380 = arith.addf %360, %379 : vector<16x128xf32>
    %381 = math.tanh %380 : vector<16x128xf32>
    %cst_132 = arith.constant dense<0.000000e+00> : vector<16x128xf32>
    %382 = tpu.matmul %9, %381, %cst_132 {dimension_numbers = #tpu.dot_dimension_numbers<[1], [0], [0], [1], [0, 0, 1, 1], [], []>} : vector<16x16xf32>, vector<16x128xf32>, vector<16x128xf32> -> vector<16x128xf32>
    %383 = arith.addf %366, %382 : vector<16x128xf32>
    %384 = math.tanh %383 : vector<16x128xf32>
    %cst_133 = arith.constant dense<0.000000e+00> : vector<16x128xf32>
    %385 = tpu.matmul %9, %384, %cst_133 {dimension_numbers = #tpu.dot_dimension_numbers<[1], [0], [0], [1], [0, 0, 1, 1], [], []>} : vector<16x16xf32>, vector<16x128xf32>, vector<16x128xf32> -> vector<16x128xf32>
    %386 = arith.addf %372, %385 : vector<16x128xf32>
    %387 = math.tanh %386 : vector<16x128xf32>
    %cst_134 = arith.constant dense<0.000000e+00> : vector<16x128xf32>
    %388 = tpu.matmul %9, %387, %cst_134 {dimension_numbers = #tpu.dot_dimension_numbers<[1], [0], [0], [1], [0, 0, 1, 1], [], []>} : vector<16x16xf32>, vector<16x128xf32>, vector<16x128xf32> -> vector<16x128xf32>
    %389 = arith.addf %378, %388 : vector<16x128xf32>
    %390 = math.tanh %389 : vector<16x128xf32>
    %391 = vector.broadcast %11 : vector<16x1xf32> to vector<16x128xf32>
    %392 = arith.mulf %391, %390 : vector<16x128xf32>
    %cst_135 = arith.constant dense<0.000000e+00> : vector<128xf32>
    %393 = vector.multi_reduction <add>, %392, %cst_135 [0] : vector<16x128xf32> to vector<128xf32>
    %394 = vector.shape_cast %393 : vector<128xf32> to vector<1x128xf32>
    %395 = vector.broadcast %6 : f32 to vector<1x128xf32>
    %396 = arith.addf %394, %395 : vector<1x128xf32>
    %397 = vector.broadcast %1 : f32 to vector<1x128xf32>
    %398 = arith.mulf %397, %333 : vector<1x128xf32>
    %399 = arith.addf %396, %398 : vector<1x128xf32>
    %400 = arith.addf %399, %340 : vector<1x128xf32>
    %401 = vector.broadcast %5 : f32 to vector<1x128xf32>
    %402 = arith.mulf %401, %400 : vector<1x128xf32>
    %403 = arith.addf %328, %402 : vector<1x128xf32>
    %c6_136 = arith.constant 6 : index
    %c0_137 = arith.constant 0 : index
    %404 = vector.load %arg15[%c6_136, %c0_137] : memref<32x128xf32, #tpu.memory_space<vmem>>, vector<1x128xf32>
    tpu.vector_store %arg15[%c6_136, %c0_137], %328 {strides = array<i32>} : memref<32x128xf32, #tpu.memory_space<vmem>>, vector<1x128xf32>,
    %c6_138 = arith.constant 6 : index
    %c0_139 = arith.constant 0 : index
    %405 = vector.load %arg17[%c6_138, %c0_139] : memref<32x128xf32, #tpu.memory_space<vmem>>, vector<1x128xf32>
    tpu.vector_store %arg17[%c6_138, %c0_139], %399 {strides = array<i32>} : memref<32x128xf32, #tpu.memory_space<vmem>>, vector<1x128xf32>,
    %c6_140 = arith.constant 6 : index
    %c0_141 = arith.constant 0 : index
    %406 = vector.load %arg19[%c6_140, %c0_141] : memref<32x128xf32, #tpu.memory_space<vmem>>, vector<1x128xf32>
    tpu.vector_store %arg19[%c6_140, %c0_141], %400 {strides = array<i32>} : memref<32x128xf32, #tpu.memory_space<vmem>>, vector<1x128xf32>,
    %c7_142 = arith.constant 7 : index
    %c0_143 = arith.constant 0 : index
    %407 = vector.load %arg0[%c7_142, %c0_143] : memref<32x128xf32, #tpu.memory_space<vmem>>, vector<1x128xf32>
    %c7_144 = arith.constant 7 : index
    %c0_145 = arith.constant 0 : index
    %408 = vector.load %arg2[%c7_144, %c0_145] : memref<32x128xf32, #tpu.memory_space<vmem>>, vector<1x128xf32>
    %409 = vector.broadcast %2 : f32 to vector<1x128xf32>
    %410 = arith.mulf %409, %408 : vector<1x128xf32>
    %c7_146 = arith.constant 7 : index
    %c0_147 = arith.constant 0 : index
    %411 = vector.load %arg1[%c7_146, %c0_147] : memref<32x128xf32, #tpu.memory_space<vmem>>, vector<1x128xf32>
    %412 = vector.broadcast %0 : f32 to vector<1x128xf32>
    %413 = arith.mulf %412, %411 : vector<1x128xf32>
    %414 = arith.addf %410, %413 : vector<1x128xf32>
    %c7_148 = arith.constant 7 : index
    %c0_149 = arith.constant 0 : index
    %415 = vector.load %arg19[%c7_148, %c0_149] : memref<32x128xf32, #tpu.memory_space<vmem>>, vector<1x128xf32>
    %416 = vector.extract_strided_slice %342 {offsets = [1, 0], sizes = [3, 128], strides = [1, 1]} : vector<4x128xf32> to vector<3x128xf32>
    %417 = tpu.concatenate %416, %407 in 0 : vector<3x128xf32>, vector<1x128xf32> -> vector<4x128xf32>
    %418 = vector.extract_strided_slice %344 {offsets = [1, 0], sizes = [3, 128], strides = [1, 1]} : vector<4x128xf32> to vector<3x128xf32>
    %419 = tpu.concatenate %418, %414 in 0 : vector<3x128xf32>, vector<1x128xf32> -> vector<4x128xf32>
    %420 = vector.extract_strided_slice %346 {offsets = [1, 0], sizes = [3, 128], strides = [1, 1]} : vector<4x128xf32> to vector<3x128xf32>
    %421 = tpu.concatenate %420, %403 in 0 : vector<3x128xf32>, vector<1x128xf32> -> vector<4x128xf32>
    %cst_150 = arith.constant 4.375000e-01 : f32
    %422 = vector.broadcast %cst_150 : f32 to vector<4x128xf32>
    %423 = arith.mulf %417, %422 : vector<4x128xf32>
    %cst_151 = arith.constant 5.625000e-01 : f32
    %424 = vector.broadcast %cst_151 : f32 to vector<4x128xf32>
    %425 = arith.mulf %421, %424 : vector<4x128xf32>
    %426 = arith.addf %423, %425 : vector<4x128xf32>
    %427 = vector.broadcast %0 : f32 to vector<4x128xf32>
    %428 = arith.mulf %427, %426 : vector<4x128xf32>
    %429 = arith.subf %419, %428 : vector<4x128xf32>
    %430 = vector.extract_strided_slice %429 {offsets = [0, 0], sizes = [1, 128], strides = [1, 1]} : vector<4x128xf32> to vector<1x128xf32>
    %431 = vector.broadcast %8 : vector<16x1xf32> to vector<16x128xf32>
    %432 = vector.broadcast %430 : vector<1x128xf32> to vector<16x128xf32>
    %433 = arith.mulf %431, %432 : vector<16x128xf32>
    %434 = vector.broadcast %10 : vector<16x1xf32> to vector<16x128xf32>
    %435 = arith.addf %433, %434 : vector<16x128xf32>
    %436 = vector.extract_strided_slice %429 {offsets = [1, 0], sizes = [1, 128], strides = [1, 1]} : vector<4x128xf32> to vector<1x128xf32>
    %437 = vector.broadcast %8 : vector<16x1xf32> to vector<16x128xf32>
    %438 = vector.broadcast %436 : vector<1x128xf32> to vector<16x128xf32>
    %439 = arith.mulf %437, %438 : vector<16x128xf32>
    %440 = vector.broadcast %10 : vector<16x1xf32> to vector<16x128xf32>
    %441 = arith.addf %439, %440 : vector<16x128xf32>
    %442 = vector.extract_strided_slice %429 {offsets = [2, 0], sizes = [1, 128], strides = [1, 1]} : vector<4x128xf32> to vector<1x128xf32>
    %443 = vector.broadcast %8 : vector<16x1xf32> to vector<16x128xf32>
    %444 = vector.broadcast %442 : vector<1x128xf32> to vector<16x128xf32>
    %445 = arith.mulf %443, %444 : vector<16x128xf32>
    %446 = vector.broadcast %10 : vector<16x1xf32> to vector<16x128xf32>
    %447 = arith.addf %445, %446 : vector<16x128xf32>
    %448 = vector.extract_strided_slice %429 {offsets = [3, 0], sizes = [1, 128], strides = [1, 1]} : vector<4x128xf32> to vector<1x128xf32>
    %449 = vector.broadcast %8 : vector<16x1xf32> to vector<16x128xf32>
    %450 = vector.broadcast %448 : vector<1x128xf32> to vector<16x128xf32>
    %451 = arith.mulf %449, %450 : vector<16x128xf32>
    %452 = vector.broadcast %10 : vector<16x1xf32> to vector<16x128xf32>
    %453 = arith.addf %451, %452 : vector<16x128xf32>
    %cst_152 = arith.constant dense<0.000000e+00> : vector<16x128xf32>
    %454 = tpu.matmul %9, %390, %cst_152 {dimension_numbers = #tpu.dot_dimension_numbers<[1], [0], [0], [1], [0, 0, 1, 1], [], []>} : vector<16x16xf32>, vector<16x128xf32>, vector<16x128xf32> -> vector<16x128xf32>
    %455 = arith.addf %435, %454 : vector<16x128xf32>
    %456 = math.tanh %455 : vector<16x128xf32>
    %cst_153 = arith.constant dense<0.000000e+00> : vector<16x128xf32>
    %457 = tpu.matmul %9, %456, %cst_153 {dimension_numbers = #tpu.dot_dimension_numbers<[1], [0], [0], [1], [0, 0, 1, 1], [], []>} : vector<16x16xf32>, vector<16x128xf32>, vector<16x128xf32> -> vector<16x128xf32>
    %458 = arith.addf %441, %457 : vector<16x128xf32>
    %459 = math.tanh %458 : vector<16x128xf32>
    %cst_154 = arith.constant dense<0.000000e+00> : vector<16x128xf32>
    %460 = tpu.matmul %9, %459, %cst_154 {dimension_numbers = #tpu.dot_dimension_numbers<[1], [0], [0], [1], [0, 0, 1, 1], [], []>} : vector<16x16xf32>, vector<16x128xf32>, vector<16x128xf32> -> vector<16x128xf32>
    %461 = arith.addf %447, %460 : vector<16x128xf32>
    %462 = math.tanh %461 : vector<16x128xf32>
    %cst_155 = arith.constant dense<0.000000e+00> : vector<16x128xf32>
    %463 = tpu.matmul %9, %462, %cst_155 {dimension_numbers = #tpu.dot_dimension_numbers<[1], [0], [0], [1], [0, 0, 1, 1], [], []>} : vector<16x16xf32>, vector<16x128xf32>, vector<16x128xf32> -> vector<16x128xf32>
    %464 = arith.addf %453, %463 : vector<16x128xf32>
    %465 = math.tanh %464 : vector<16x128xf32>
    %466 = vector.broadcast %11 : vector<16x1xf32> to vector<16x128xf32>
    %467 = arith.mulf %466, %465 : vector<16x128xf32>
    %cst_156 = arith.constant dense<0.000000e+00> : vector<128xf32>
    %468 = vector.multi_reduction <add>, %467, %cst_156 [0] : vector<16x128xf32> to vector<128xf32>
    %469 = vector.shape_cast %468 : vector<128xf32> to vector<1x128xf32>
    %470 = vector.broadcast %6 : f32 to vector<1x128xf32>
    %471 = arith.addf %469, %470 : vector<1x128xf32>
    %472 = vector.broadcast %1 : f32 to vector<1x128xf32>
    %473 = arith.mulf %472, %408 : vector<1x128xf32>
    %474 = arith.addf %471, %473 : vector<1x128xf32>
    %475 = arith.addf %474, %415 : vector<1x128xf32>
    %476 = vector.broadcast %5 : f32 to vector<1x128xf32>
    %477 = arith.mulf %476, %475 : vector<1x128xf32>
    %478 = arith.addf %403, %477 : vector<1x128xf32>
    %c7_157 = arith.constant 7 : index
    %c0_158 = arith.constant 0 : index
    %479 = vector.load %arg15[%c7_157, %c0_158] : memref<32x128xf32, #tpu.memory_space<vmem>>, vector<1x128xf32>
    tpu.vector_store %arg15[%c7_157, %c0_158], %403 {strides = array<i32>} : memref<32x128xf32, #tpu.memory_space<vmem>>, vector<1x128xf32>,
    %c7_159 = arith.constant 7 : index
    %c0_160 = arith.constant 0 : index
    %480 = vector.load %arg17[%c7_159, %c0_160] : memref<32x128xf32, #tpu.memory_space<vmem>>, vector<1x128xf32>
    tpu.vector_store %arg17[%c7_159, %c0_160], %474 {strides = array<i32>} : memref<32x128xf32, #tpu.memory_space<vmem>>, vector<1x128xf32>,
    %c7_161 = arith.constant 7 : index
    %c0_162 = arith.constant 0 : index
    %481 = vector.load %arg19[%c7_161, %c0_162] : memref<32x128xf32, #tpu.memory_space<vmem>>, vector<1x128xf32>
    tpu.vector_store %arg19[%c7_161, %c0_162], %475 {strides = array<i32>} : memref<32x128xf32, #tpu.memory_space<vmem>>, vector<1x128xf32>,
    %c0_i32 = arith.constant 0 : i32
    %c3_i32 = arith.constant 3 : i32
    %482 = arith.addi %c0_i32, %c3_i32 : i32
    %c1_i32 = arith.constant 1 : i32
    %483:5 = scf.for %arg20 = %c0_i32 to %482 step %c1_i32 iter_args(%arg21 = %478, %arg22 = %417, %arg23 = %419, %arg24 = %421, %arg25 = %465) -> (vector<1x128xf32>, vector<4x128xf32>, vector<4x128xf32>, vector<4x128xf32>, vector<16x128xf32>)  : i32 {
      %c8_i32 = arith.constant 8 : i32
      %484 = arith.muli %arg20, %c8_i32 : i32
      %c8_i32_164 = arith.constant 8 : i32
      %485 = arith.addi %c8_i32_164, %484 : i32
      %486 = tpu.assume_multiple %485, 8 : i32
      %487 = arith.index_cast %486 : i32 to index
      %c0_165 = arith.constant 0 : index
      %488 = vector.load %arg0[%487, %c0_165] : memref<32x128xf32, #tpu.memory_space<vmem>>, vector<8x128xf32>
      %489 = arith.index_cast %486 : i32 to index
      %c0_166 = arith.constant 0 : index
      %490 = vector.load %arg1[%489, %c0_166] : memref<32x128xf32, #tpu.memory_space<vmem>>, vector<8x128xf32>
      %491 = arith.index_cast %486 : i32 to index
      %c0_167 = arith.constant 0 : index
      %492 = vector.load %arg2[%491, %c0_167] : memref<32x128xf32, #tpu.memory_space<vmem>>, vector<8x128xf32>
      %493 = arith.index_cast %486 : i32 to index
      %c0_168 = arith.constant 0 : index
      %494 = vector.load %arg19[%493, %c0_168] : memref<32x128xf32, #tpu.memory_space<vmem>>, vector<8x128xf32>
      %495 = vector.extract_strided_slice %488 {offsets = [0, 0], sizes = [1, 128], strides = [1, 1]} : vector<8x128xf32> to vector<1x128xf32>
      %496 = vector.extract_strided_slice %492 {offsets = [0, 0], sizes = [1, 128], strides = [1, 1]} : vector<8x128xf32> to vector<1x128xf32>
      %497 = vector.broadcast %2 : f32 to vector<1x128xf32>
      %498 = arith.mulf %497, %496 : vector<1x128xf32>
      %499 = vector.extract_strided_slice %490 {offsets = [0, 0], sizes = [1, 128], strides = [1, 1]} : vector<8x128xf32> to vector<1x128xf32>
      %500 = vector.broadcast %0 : f32 to vector<1x128xf32>
      %501 = arith.mulf %500, %499 : vector<1x128xf32>
      %502 = arith.addf %498, %501 : vector<1x128xf32>
      %503 = vector.extract_strided_slice %494 {offsets = [0, 0], sizes = [1, 128], strides = [1, 1]} : vector<8x128xf32> to vector<1x128xf32>
      %c0_i32_169 = arith.constant 0 : i32
      %504 = arith.addi %486, %c0_i32_169 : i32
      %505 = vector.extract_strided_slice %arg22 {offsets = [1, 0], sizes = [3, 128], strides = [1, 1]} : vector<4x128xf32> to vector<3x128xf32>
      %506 = tpu.concatenate %505, %495 in 0 : vector<3x128xf32>, vector<1x128xf32> -> vector<4x128xf32>
      %507 = vector.extract_strided_slice %arg23 {offsets = [1, 0], sizes = [3, 128], strides = [1, 1]} : vector<4x128xf32> to vector<3x128xf32>
      %508 = tpu.concatenate %507, %502 in 0 : vector<3x128xf32>, vector<1x128xf32> -> vector<4x128xf32>
      %509 = vector.extract_strided_slice %arg24 {offsets = [1, 0], sizes = [3, 128], strides = [1, 1]} : vector<4x128xf32> to vector<3x128xf32>
      %510 = tpu.concatenate %509, %arg21 in 0 : vector<3x128xf32>, vector<1x128xf32> -> vector<4x128xf32>
      %511 = arith.sitofp %504 : i32 to f32
      %cst_170 = arith.constant 6.250000e-02 : f32
      %512 = arith.mulf %511, %cst_170 : f32
      %c16_i32 = arith.constant 16 : i32
      %513 = arith.cmpi slt, %504, %c16_i32 : i32
      %514 = vector.broadcast %512 : f32 to vector<4x128xf32>
      %515 = arith.mulf %506, %514 : vector<4x128xf32>
      %cst_171 = arith.constant 1.000000e+00 : f32
      %516 = arith.subf %cst_171, %512 : f32
      %517 = vector.broadcast %516 : f32 to vector<4x128xf32>
      %518 = arith.mulf %510, %517 : vector<4x128xf32>
      %519 = arith.addf %515, %518 : vector<4x128xf32>
      %520 = arith.select %513, %519, %510 : vector<4x128xf32>
      %521 = vector.broadcast %0 : f32 to vector<4x128xf32>
      %522 = arith.mulf %521, %520 : vector<4x128xf32>
      %523 = arith.subf %508, %522 : vector<4x128xf32>
      %524 = vector.extract_strided_slice %523 {offsets = [0, 0], sizes = [1, 128], strides = [1, 1]} : vector<4x128xf32> to vector<1x128xf32>
      %525 = vector.broadcast %8 : vector<16x1xf32> to vector<16x128xf32>
      %526 = vector.broadcast %524 : vector<1x128xf32> to vector<16x128xf32>
      %527 = arith.mulf %525, %526 : vector<16x128xf32>
      %528 = vector.broadcast %10 : vector<16x1xf32> to vector<16x128xf32>
      %529 = arith.addf %527, %528 : vector<16x128xf32>
      %530 = vector.extract_strided_slice %523 {offsets = [1, 0], sizes = [1, 128], strides = [1, 1]} : vector<4x128xf32> to vector<1x128xf32>
      %531 = vector.broadcast %8 : vector<16x1xf32> to vector<16x128xf32>
      %532 = vector.broadcast %530 : vector<1x128xf32> to vector<16x128xf32>
      %533 = arith.mulf %531, %532 : vector<16x128xf32>
      %534 = vector.broadcast %10 : vector<16x1xf32> to vector<16x128xf32>
      %535 = arith.addf %533, %534 : vector<16x128xf32>
      %536 = vector.extract_strided_slice %523 {offsets = [2, 0], sizes = [1, 128], strides = [1, 1]} : vector<4x128xf32> to vector<1x128xf32>
      %537 = vector.broadcast %8 : vector<16x1xf32> to vector<16x128xf32>
      %538 = vector.broadcast %536 : vector<1x128xf32> to vector<16x128xf32>
      %539 = arith.mulf %537, %538 : vector<16x128xf32>
      %540 = vector.broadcast %10 : vector<16x1xf32> to vector<16x128xf32>
      %541 = arith.addf %539, %540 : vector<16x128xf32>
      %542 = vector.extract_strided_slice %523 {offsets = [3, 0], sizes = [1, 128], strides = [1, 1]} : vector<4x128xf32> to vector<1x128xf32>
      %543 = vector.broadcast %8 : vector<16x1xf32> to vector<16x128xf32>
      %544 = vector.broadcast %542 : vector<1x128xf32> to vector<16x128xf32>
      %545 = arith.mulf %543, %544 : vector<16x128xf32>
      %546 = vector.broadcast %10 : vector<16x1xf32> to vector<16x128xf32>
      %547 = arith.addf %545, %546 : vector<16x128xf32>
      %cst_172 = arith.constant dense<0.000000e+00> : vector<16x128xf32>
      %548 = tpu.matmul %9, %arg25, %cst_172 {dimension_numbers = #tpu.dot_dimension_numbers<[1], [0], [0], [1], [0, 0, 1, 1], [], []>} : vector<16x16xf32>, vector<16x128xf32>, vector<16x128xf32> -> vector<16x128xf32>
      %549 = arith.addf %529, %548 : vector<16x128xf32>
      %550 = math.tanh %549 : vector<16x128xf32>
      %cst_173 = arith.constant dense<0.000000e+00> : vector<16x128xf32>
      %551 = tpu.matmul %9, %550, %cst_173 {dimension_numbers = #tpu.dot_dimension_numbers<[1], [0], [0], [1], [0, 0, 1, 1], [], []>} : vector<16x16xf32>, vector<16x128xf32>, vector<16x128xf32> -> vector<16x128xf32>
      %552 = arith.addf %535, %551 : vector<16x128xf32>
      %553 = math.tanh %552 : vector<16x128xf32>
      %cst_174 = arith.constant dense<0.000000e+00> : vector<16x128xf32>
      %554 = tpu.matmul %9, %553, %cst_174 {dimension_numbers = #tpu.dot_dimension_numbers<[1], [0], [0], [1], [0, 0, 1, 1], [], []>} : vector<16x16xf32>, vector<16x128xf32>, vector<16x128xf32> -> vector<16x128xf32>
      %555 = arith.addf %541, %554 : vector<16x128xf32>
      %556 = math.tanh %555 : vector<16x128xf32>
      %cst_175 = arith.constant dense<0.000000e+00> : vector<16x128xf32>
      %557 = tpu.matmul %9, %556, %cst_175 {dimension_numbers = #tpu.dot_dimension_numbers<[1], [0], [0], [1], [0, 0, 1, 1], [], []>} : vector<16x16xf32>, vector<16x128xf32>, vector<16x128xf32> -> vector<16x128xf32>
      %558 = arith.addf %547, %557 : vector<16x128xf32>
      %559 = math.tanh %558 : vector<16x128xf32>
      %560 = vector.broadcast %11 : vector<16x1xf32> to vector<16x128xf32>
      %561 = arith.mulf %560, %559 : vector<16x128xf32>
      %cst_176 = arith.constant dense<0.000000e+00> : vector<128xf32>
      %562 = vector.multi_reduction <add>, %561, %cst_176 [0] : vector<16x128xf32> to vector<128xf32>
      %563 = vector.shape_cast %562 : vector<128xf32> to vector<1x128xf32>
      %564 = vector.broadcast %6 : f32 to vector<1x128xf32>
      %565 = arith.addf %563, %564 : vector<1x128xf32>
      %566 = vector.broadcast %1 : f32 to vector<1x128xf32>
      %567 = arith.mulf %566, %496 : vector<1x128xf32>
      %568 = arith.addf %565, %567 : vector<1x128xf32>
      %569 = arith.addf %568, %503 : vector<1x128xf32>
      %570 = vector.broadcast %5 : f32 to vector<1x128xf32>
      %571 = arith.mulf %570, %569 : vector<1x128xf32>
      %572 = arith.addf %arg21, %571 : vector<1x128xf32>
      %573 = vector.extract_strided_slice %488 {offsets = [1, 0], sizes = [1, 128], strides = [1, 1]} : vector<8x128xf32> to vector<1x128xf32>
      %574 = vector.extract_strided_slice %492 {offsets = [1, 0], sizes = [1, 128], strides = [1, 1]} : vector<8x128xf32> to vector<1x128xf32>
      %575 = vector.broadcast %2 : f32 to vector<1x128xf32>
      %576 = arith.mulf %575, %574 : vector<1x128xf32>
      %577 = vector.extract_strided_slice %490 {offsets = [1, 0], sizes = [1, 128], strides = [1, 1]} : vector<8x128xf32> to vector<1x128xf32>
      %578 = vector.broadcast %0 : f32 to vector<1x128xf32>
      %579 = arith.mulf %578, %577 : vector<1x128xf32>
      %580 = arith.addf %576, %579 : vector<1x128xf32>
      %581 = vector.extract_strided_slice %494 {offsets = [1, 0], sizes = [1, 128], strides = [1, 1]} : vector<8x128xf32> to vector<1x128xf32>
      %c1_i32_177 = arith.constant 1 : i32
      %582 = arith.addi %486, %c1_i32_177 : i32
      %583 = vector.extract_strided_slice %506 {offsets = [1, 0], sizes = [3, 128], strides = [1, 1]} : vector<4x128xf32> to vector<3x128xf32>
      %584 = tpu.concatenate %583, %573 in 0 : vector<3x128xf32>, vector<1x128xf32> -> vector<4x128xf32>
      %585 = vector.extract_strided_slice %508 {offsets = [1, 0], sizes = [3, 128], strides = [1, 1]} : vector<4x128xf32> to vector<3x128xf32>
      %586 = tpu.concatenate %585, %580 in 0 : vector<3x128xf32>, vector<1x128xf32> -> vector<4x128xf32>
      %587 = vector.extract_strided_slice %510 {offsets = [1, 0], sizes = [3, 128], strides = [1, 1]} : vector<4x128xf32> to vector<3x128xf32>
      %588 = tpu.concatenate %587, %572 in 0 : vector<3x128xf32>, vector<1x128xf32> -> vector<4x128xf32>
      %589 = arith.sitofp %582 : i32 to f32
      %cst_178 = arith.constant 6.250000e-02 : f32
      %590 = arith.mulf %589, %cst_178 : f32
      %c16_i32_179 = arith.constant 16 : i32
      %591 = arith.cmpi slt, %582, %c16_i32_179 : i32
      %592 = vector.broadcast %590 : f32 to vector<4x128xf32>
      %593 = arith.mulf %584, %592 : vector<4x128xf32>
      %cst_180 = arith.constant 1.000000e+00 : f32
      %594 = arith.subf %cst_180, %590 : f32
      %595 = vector.broadcast %594 : f32 to vector<4x128xf32>
      %596 = arith.mulf %588, %595 : vector<4x128xf32>
      %597 = arith.addf %593, %596 : vector<4x128xf32>
      %598 = arith.select %591, %597, %588 : vector<4x128xf32>
      %599 = vector.broadcast %0 : f32 to vector<4x128xf32>
      %600 = arith.mulf %599, %598 : vector<4x128xf32>
      %601 = arith.subf %586, %600 : vector<4x128xf32>
      %602 = vector.extract_strided_slice %601 {offsets = [0, 0], sizes = [1, 128], strides = [1, 1]} : vector<4x128xf32> to vector<1x128xf32>
      %603 = vector.broadcast %8 : vector<16x1xf32> to vector<16x128xf32>
      %604 = vector.broadcast %602 : vector<1x128xf32> to vector<16x128xf32>
      %605 = arith.mulf %603, %604 : vector<16x128xf32>
      %606 = vector.broadcast %10 : vector<16x1xf32> to vector<16x128xf32>
      %607 = arith.addf %605, %606 : vector<16x128xf32>
      %608 = vector.extract_strided_slice %601 {offsets = [1, 0], sizes = [1, 128], strides = [1, 1]} : vector<4x128xf32> to vector<1x128xf32>
      %609 = vector.broadcast %8 : vector<16x1xf32> to vector<16x128xf32>
      %610 = vector.broadcast %608 : vector<1x128xf32> to vector<16x128xf32>
      %611 = arith.mulf %609, %610 : vector<16x128xf32>
      %612 = vector.broadcast %10 : vector<16x1xf32> to vector<16x128xf32>
      %613 = arith.addf %611, %612 : vector<16x128xf32>
      %614 = vector.extract_strided_slice %601 {offsets = [2, 0], sizes = [1, 128], strides = [1, 1]} : vector<4x128xf32> to vector<1x128xf32>
      %615 = vector.broadcast %8 : vector<16x1xf32> to vector<16x128xf32>
      %616 = vector.broadcast %614 : vector<1x128xf32> to vector<16x128xf32>
      %617 = arith.mulf %615, %616 : vector<16x128xf32>
      %618 = vector.broadcast %10 : vector<16x1xf32> to vector<16x128xf32>
      %619 = arith.addf %617, %618 : vector<16x128xf32>
      %620 = vector.extract_strided_slice %601 {offsets = [3, 0], sizes = [1, 128], strides = [1, 1]} : vector<4x128xf32> to vector<1x128xf32>
      %621 = vector.broadcast %8 : vector<16x1xf32> to vector<16x128xf32>
      %622 = vector.broadcast %620 : vector<1x128xf32> to vector<16x128xf32>
      %623 = arith.mulf %621, %622 : vector<16x128xf32>
      %624 = vector.broadcast %10 : vector<16x1xf32> to vector<16x128xf32>
      %625 = arith.addf %623, %624 : vector<16x128xf32>
      %cst_181 = arith.constant dense<0.000000e+00> : vector<16x128xf32>
      %626 = tpu.matmul %9, %559, %cst_181 {dimension_numbers = #tpu.dot_dimension_numbers<[1], [0], [0], [1], [0, 0, 1, 1], [], []>} : vector<16x16xf32>, vector<16x128xf32>, vector<16x128xf32> -> vector<16x128xf32>
      %627 = arith.addf %607, %626 : vector<16x128xf32>
      %628 = math.tanh %627 : vector<16x128xf32>
      %cst_182 = arith.constant dense<0.000000e+00> : vector<16x128xf32>
      %629 = tpu.matmul %9, %628, %cst_182 {dimension_numbers = #tpu.dot_dimension_numbers<[1], [0], [0], [1], [0, 0, 1, 1], [], []>} : vector<16x16xf32>, vector<16x128xf32>, vector<16x128xf32> -> vector<16x128xf32>
      %630 = arith.addf %613, %629 : vector<16x128xf32>
      %631 = math.tanh %630 : vector<16x128xf32>
      %cst_183 = arith.constant dense<0.000000e+00> : vector<16x128xf32>
      %632 = tpu.matmul %9, %631, %cst_183 {dimension_numbers = #tpu.dot_dimension_numbers<[1], [0], [0], [1], [0, 0, 1, 1], [], []>} : vector<16x16xf32>, vector<16x128xf32>, vector<16x128xf32> -> vector<16x128xf32>
      %633 = arith.addf %619, %632 : vector<16x128xf32>
      %634 = math.tanh %633 : vector<16x128xf32>
      %cst_184 = arith.constant dense<0.000000e+00> : vector<16x128xf32>
      %635 = tpu.matmul %9, %634, %cst_184 {dimension_numbers = #tpu.dot_dimension_numbers<[1], [0], [0], [1], [0, 0, 1, 1], [], []>} : vector<16x16xf32>, vector<16x128xf32>, vector<16x128xf32> -> vector<16x128xf32>
      %636 = arith.addf %625, %635 : vector<16x128xf32>
      %637 = math.tanh %636 : vector<16x128xf32>
      %638 = vector.broadcast %11 : vector<16x1xf32> to vector<16x128xf32>
      %639 = arith.mulf %638, %637 : vector<16x128xf32>
      %cst_185 = arith.constant dense<0.000000e+00> : vector<128xf32>
      %640 = vector.multi_reduction <add>, %639, %cst_185 [0] : vector<16x128xf32> to vector<128xf32>
      %641 = vector.shape_cast %640 : vector<128xf32> to vector<1x128xf32>
      %642 = vector.broadcast %6 : f32 to vector<1x128xf32>
      %643 = arith.addf %641, %642 : vector<1x128xf32>
      %644 = vector.broadcast %1 : f32 to vector<1x128xf32>
      %645 = arith.mulf %644, %574 : vector<1x128xf32>
      %646 = arith.addf %643, %645 : vector<1x128xf32>
      %647 = arith.addf %646, %581 : vector<1x128xf32>
      %648 = vector.broadcast %5 : f32 to vector<1x128xf32>
      %649 = arith.mulf %648, %647 : vector<1x128xf32>
      %650 = arith.addf %572, %649 : vector<1x128xf32>
      %651 = vector.extract_strided_slice %488 {offsets = [2, 0], sizes = [1, 128], strides = [1, 1]} : vector<8x128xf32> to vector<1x128xf32>
      %652 = vector.extract_strided_slice %492 {offsets = [2, 0], sizes = [1, 128], strides = [1, 1]} : vector<8x128xf32> to vector<1x128xf32>
      %653 = vector.broadcast %2 : f32 to vector<1x128xf32>
      %654 = arith.mulf %653, %652 : vector<1x128xf32>
      %655 = vector.extract_strided_slice %490 {offsets = [2, 0], sizes = [1, 128], strides = [1, 1]} : vector<8x128xf32> to vector<1x128xf32>
      %656 = vector.broadcast %0 : f32 to vector<1x128xf32>
      %657 = arith.mulf %656, %655 : vector<1x128xf32>
      %658 = arith.addf %654, %657 : vector<1x128xf32>
      %659 = vector.extract_strided_slice %494 {offsets = [2, 0], sizes = [1, 128], strides = [1, 1]} : vector<8x128xf32> to vector<1x128xf32>
      %c2_i32 = arith.constant 2 : i32
      %660 = arith.addi %486, %c2_i32 : i32
      %661 = vector.extract_strided_slice %584 {offsets = [1, 0], sizes = [3, 128], strides = [1, 1]} : vector<4x128xf32> to vector<3x128xf32>
      %662 = tpu.concatenate %661, %651 in 0 : vector<3x128xf32>, vector<1x128xf32> -> vector<4x128xf32>
      %663 = vector.extract_strided_slice %586 {offsets = [1, 0], sizes = [3, 128], strides = [1, 1]} : vector<4x128xf32> to vector<3x128xf32>
      %664 = tpu.concatenate %663, %658 in 0 : vector<3x128xf32>, vector<1x128xf32> -> vector<4x128xf32>
      %665 = vector.extract_strided_slice %588 {offsets = [1, 0], sizes = [3, 128], strides = [1, 1]} : vector<4x128xf32> to vector<3x128xf32>
      %666 = tpu.concatenate %665, %650 in 0 : vector<3x128xf32>, vector<1x128xf32> -> vector<4x128xf32>
      %667 = arith.sitofp %660 : i32 to f32
      %cst_186 = arith.constant 6.250000e-02 : f32
      %668 = arith.mulf %667, %cst_186 : f32
      %c16_i32_187 = arith.constant 16 : i32
      %669 = arith.cmpi slt, %660, %c16_i32_187 : i32
      %670 = vector.broadcast %668 : f32 to vector<4x128xf32>
      %671 = arith.mulf %662, %670 : vector<4x128xf32>
      %cst_188 = arith.constant 1.000000e+00 : f32
      %672 = arith.subf %cst_188, %668 : f32
      %673 = vector.broadcast %672 : f32 to vector<4x128xf32>
      %674 = arith.mulf %666, %673 : vector<4x128xf32>
      %675 = arith.addf %671, %674 : vector<4x128xf32>
      %676 = arith.select %669, %675, %666 : vector<4x128xf32>
      %677 = vector.broadcast %0 : f32 to vector<4x128xf32>
      %678 = arith.mulf %677, %676 : vector<4x128xf32>
      %679 = arith.subf %664, %678 : vector<4x128xf32>
      %680 = vector.extract_strided_slice %679 {offsets = [0, 0], sizes = [1, 128], strides = [1, 1]} : vector<4x128xf32> to vector<1x128xf32>
      %681 = vector.broadcast %8 : vector<16x1xf32> to vector<16x128xf32>
      %682 = vector.broadcast %680 : vector<1x128xf32> to vector<16x128xf32>
      %683 = arith.mulf %681, %682 : vector<16x128xf32>
      %684 = vector.broadcast %10 : vector<16x1xf32> to vector<16x128xf32>
      %685 = arith.addf %683, %684 : vector<16x128xf32>
      %686 = vector.extract_strided_slice %679 {offsets = [1, 0], sizes = [1, 128], strides = [1, 1]} : vector<4x128xf32> to vector<1x128xf32>
      %687 = vector.broadcast %8 : vector<16x1xf32> to vector<16x128xf32>
      %688 = vector.broadcast %686 : vector<1x128xf32> to vector<16x128xf32>
      %689 = arith.mulf %687, %688 : vector<16x128xf32>
      %690 = vector.broadcast %10 : vector<16x1xf32> to vector<16x128xf32>
      %691 = arith.addf %689, %690 : vector<16x128xf32>
      %692 = vector.extract_strided_slice %679 {offsets = [2, 0], sizes = [1, 128], strides = [1, 1]} : vector<4x128xf32> to vector<1x128xf32>
      %693 = vector.broadcast %8 : vector<16x1xf32> to vector<16x128xf32>
      %694 = vector.broadcast %692 : vector<1x128xf32> to vector<16x128xf32>
      %695 = arith.mulf %693, %694 : vector<16x128xf32>
      %696 = vector.broadcast %10 : vector<16x1xf32> to vector<16x128xf32>
      %697 = arith.addf %695, %696 : vector<16x128xf32>
      %698 = vector.extract_strided_slice %679 {offsets = [3, 0], sizes = [1, 128], strides = [1, 1]} : vector<4x128xf32> to vector<1x128xf32>
      %699 = vector.broadcast %8 : vector<16x1xf32> to vector<16x128xf32>
      %700 = vector.broadcast %698 : vector<1x128xf32> to vector<16x128xf32>
      %701 = arith.mulf %699, %700 : vector<16x128xf32>
      %702 = vector.broadcast %10 : vector<16x1xf32> to vector<16x128xf32>
      %703 = arith.addf %701, %702 : vector<16x128xf32>
      %cst_189 = arith.constant dense<0.000000e+00> : vector<16x128xf32>
      %704 = tpu.matmul %9, %637, %cst_189 {dimension_numbers = #tpu.dot_dimension_numbers<[1], [0], [0], [1], [0, 0, 1, 1], [], []>} : vector<16x16xf32>, vector<16x128xf32>, vector<16x128xf32> -> vector<16x128xf32>
      %705 = arith.addf %685, %704 : vector<16x128xf32>
      %706 = math.tanh %705 : vector<16x128xf32>
      %cst_190 = arith.constant dense<0.000000e+00> : vector<16x128xf32>
      %707 = tpu.matmul %9, %706, %cst_190 {dimension_numbers = #tpu.dot_dimension_numbers<[1], [0], [0], [1], [0, 0, 1, 1], [], []>} : vector<16x16xf32>, vector<16x128xf32>, vector<16x128xf32> -> vector<16x128xf32>
      %708 = arith.addf %691, %707 : vector<16x128xf32>
      %709 = math.tanh %708 : vector<16x128xf32>
      %cst_191 = arith.constant dense<0.000000e+00> : vector<16x128xf32>
      %710 = tpu.matmul %9, %709, %cst_191 {dimension_numbers = #tpu.dot_dimension_numbers<[1], [0], [0], [1], [0, 0, 1, 1], [], []>} : vector<16x16xf32>, vector<16x128xf32>, vector<16x128xf32> -> vector<16x128xf32>
      %711 = arith.addf %697, %710 : vector<16x128xf32>
      %712 = math.tanh %711 : vector<16x128xf32>
      %cst_192 = arith.constant dense<0.000000e+00> : vector<16x128xf32>
      %713 = tpu.matmul %9, %712, %cst_192 {dimension_numbers = #tpu.dot_dimension_numbers<[1], [0], [0], [1], [0, 0, 1, 1], [], []>} : vector<16x16xf32>, vector<16x128xf32>, vector<16x128xf32> -> vector<16x128xf32>
      %714 = arith.addf %703, %713 : vector<16x128xf32>
      %715 = math.tanh %714 : vector<16x128xf32>
      %716 = vector.broadcast %11 : vector<16x1xf32> to vector<16x128xf32>
      %717 = arith.mulf %716, %715 : vector<16x128xf32>
      %cst_193 = arith.constant dense<0.000000e+00> : vector<128xf32>
      %718 = vector.multi_reduction <add>, %717, %cst_193 [0] : vector<16x128xf32> to vector<128xf32>
      %719 = vector.shape_cast %718 : vector<128xf32> to vector<1x128xf32>
      %720 = vector.broadcast %6 : f32 to vector<1x128xf32>
      %721 = arith.addf %719, %720 : vector<1x128xf32>
      %722 = vector.broadcast %1 : f32 to vector<1x128xf32>
      %723 = arith.mulf %722, %652 : vector<1x128xf32>
      %724 = arith.addf %721, %723 : vector<1x128xf32>
      %725 = arith.addf %724, %659 : vector<1x128xf32>
      %726 = vector.broadcast %5 : f32 to vector<1x128xf32>
      %727 = arith.mulf %726, %725 : vector<1x128xf32>
      %728 = arith.addf %650, %727 : vector<1x128xf32>
      %729 = vector.extract_strided_slice %488 {offsets = [3, 0], sizes = [1, 128], strides = [1, 1]} : vector<8x128xf32> to vector<1x128xf32>
      %730 = vector.extract_strided_slice %492 {offsets = [3, 0], sizes = [1, 128], strides = [1, 1]} : vector<8x128xf32> to vector<1x128xf32>
      %731 = vector.broadcast %2 : f32 to vector<1x128xf32>
      %732 = arith.mulf %731, %730 : vector<1x128xf32>
      %733 = vector.extract_strided_slice %490 {offsets = [3, 0], sizes = [1, 128], strides = [1, 1]} : vector<8x128xf32> to vector<1x128xf32>
      %734 = vector.broadcast %0 : f32 to vector<1x128xf32>
      %735 = arith.mulf %734, %733 : vector<1x128xf32>
      %736 = arith.addf %732, %735 : vector<1x128xf32>
      %737 = vector.extract_strided_slice %494 {offsets = [3, 0], sizes = [1, 128], strides = [1, 1]} : vector<8x128xf32> to vector<1x128xf32>
      %c3_i32_194 = arith.constant 3 : i32
      %738 = arith.addi %486, %c3_i32_194 : i32
      %739 = vector.extract_strided_slice %662 {offsets = [1, 0], sizes = [3, 128], strides = [1, 1]} : vector<4x128xf32> to vector<3x128xf32>
      %740 = tpu.concatenate %739, %729 in 0 : vector<3x128xf32>, vector<1x128xf32> -> vector<4x128xf32>
      %741 = vector.extract_strided_slice %664 {offsets = [1, 0], sizes = [3, 128], strides = [1, 1]} : vector<4x128xf32> to vector<3x128xf32>
      %742 = tpu.concatenate %741, %736 in 0 : vector<3x128xf32>, vector<1x128xf32> -> vector<4x128xf32>
      %743 = vector.extract_strided_slice %666 {offsets = [1, 0], sizes = [3, 128], strides = [1, 1]} : vector<4x128xf32> to vector<3x128xf32>
      %744 = tpu.concatenate %743, %728 in 0 : vector<3x128xf32>, vector<1x128xf32> -> vector<4x128xf32>
      %745 = arith.sitofp %738 : i32 to f32
      %cst_195 = arith.constant 6.250000e-02 : f32
      %746 = arith.mulf %745, %cst_195 : f32
      %c16_i32_196 = arith.constant 16 : i32
      %747 = arith.cmpi slt, %738, %c16_i32_196 : i32
      %748 = vector.broadcast %746 : f32 to vector<4x128xf32>
      %749 = arith.mulf %740, %748 : vector<4x128xf32>
      %cst_197 = arith.constant 1.000000e+00 : f32
      %750 = arith.subf %cst_197, %746 : f32
      %751 = vector.broadcast %750 : f32 to vector<4x128xf32>
      %752 = arith.mulf %744, %751 : vector<4x128xf32>
      %753 = arith.addf %749, %752 : vector<4x128xf32>
      %754 = arith.select %747, %753, %744 : vector<4x128xf32>
      %755 = vector.broadcast %0 : f32 to vector<4x128xf32>
      %756 = arith.mulf %755, %754 : vector<4x128xf32>
      %757 = arith.subf %742, %756 : vector<4x128xf32>
      %758 = vector.extract_strided_slice %757 {offsets = [0, 0], sizes = [1, 128], strides = [1, 1]} : vector<4x128xf32> to vector<1x128xf32>
      %759 = vector.broadcast %8 : vector<16x1xf32> to vector<16x128xf32>
      %760 = vector.broadcast %758 : vector<1x128xf32> to vector<16x128xf32>
      %761 = arith.mulf %759, %760 : vector<16x128xf32>
      %762 = vector.broadcast %10 : vector<16x1xf32> to vector<16x128xf32>
      %763 = arith.addf %761, %762 : vector<16x128xf32>
      %764 = vector.extract_strided_slice %757 {offsets = [1, 0], sizes = [1, 128], strides = [1, 1]} : vector<4x128xf32> to vector<1x128xf32>
      %765 = vector.broadcast %8 : vector<16x1xf32> to vector<16x128xf32>
      %766 = vector.broadcast %764 : vector<1x128xf32> to vector<16x128xf32>
      %767 = arith.mulf %765, %766 : vector<16x128xf32>
      %768 = vector.broadcast %10 : vector<16x1xf32> to vector<16x128xf32>
      %769 = arith.addf %767, %768 : vector<16x128xf32>
      %770 = vector.extract_strided_slice %757 {offsets = [2, 0], sizes = [1, 128], strides = [1, 1]} : vector<4x128xf32> to vector<1x128xf32>
      %771 = vector.broadcast %8 : vector<16x1xf32> to vector<16x128xf32>
      %772 = vector.broadcast %770 : vector<1x128xf32> to vector<16x128xf32>
      %773 = arith.mulf %771, %772 : vector<16x128xf32>
      %774 = vector.broadcast %10 : vector<16x1xf32> to vector<16x128xf32>
      %775 = arith.addf %773, %774 : vector<16x128xf32>
      %776 = vector.extract_strided_slice %757 {offsets = [3, 0], sizes = [1, 128], strides = [1, 1]} : vector<4x128xf32> to vector<1x128xf32>
      %777 = vector.broadcast %8 : vector<16x1xf32> to vector<16x128xf32>
      %778 = vector.broadcast %776 : vector<1x128xf32> to vector<16x128xf32>
      %779 = arith.mulf %777, %778 : vector<16x128xf32>
      %780 = vector.broadcast %10 : vector<16x1xf32> to vector<16x128xf32>
      %781 = arith.addf %779, %780 : vector<16x128xf32>
      %cst_198 = arith.constant dense<0.000000e+00> : vector<16x128xf32>
      %782 = tpu.matmul %9, %715, %cst_198 {dimension_numbers = #tpu.dot_dimension_numbers<[1], [0], [0], [1], [0, 0, 1, 1], [], []>} : vector<16x16xf32>, vector<16x128xf32>, vector<16x128xf32> -> vector<16x128xf32>
      %783 = arith.addf %763, %782 : vector<16x128xf32>
      %784 = math.tanh %783 : vector<16x128xf32>
      %cst_199 = arith.constant dense<0.000000e+00> : vector<16x128xf32>
      %785 = tpu.matmul %9, %784, %cst_199 {dimension_numbers = #tpu.dot_dimension_numbers<[1], [0], [0], [1], [0, 0, 1, 1], [], []>} : vector<16x16xf32>, vector<16x128xf32>, vector<16x128xf32> -> vector<16x128xf32>
      %786 = arith.addf %769, %785 : vector<16x128xf32>
      %787 = math.tanh %786 : vector<16x128xf32>
      %cst_200 = arith.constant dense<0.000000e+00> : vector<16x128xf32>
      %788 = tpu.matmul %9, %787, %cst_200 {dimension_numbers = #tpu.dot_dimension_numbers<[1], [0], [0], [1], [0, 0, 1, 1], [], []>} : vector<16x16xf32>, vector<16x128xf32>, vector<16x128xf32> -> vector<16x128xf32>
      %789 = arith.addf %775, %788 : vector<16x128xf32>
      %790 = math.tanh %789 : vector<16x128xf32>
      %cst_201 = arith.constant dense<0.000000e+00> : vector<16x128xf32>
      %791 = tpu.matmul %9, %790, %cst_201 {dimension_numbers = #tpu.dot_dimension_numbers<[1], [0], [0], [1], [0, 0, 1, 1], [], []>} : vector<16x16xf32>, vector<16x128xf32>, vector<16x128xf32> -> vector<16x128xf32>
      %792 = arith.addf %781, %791 : vector<16x128xf32>
      %793 = math.tanh %792 : vector<16x128xf32>
      %794 = vector.broadcast %11 : vector<16x1xf32> to vector<16x128xf32>
      %795 = arith.mulf %794, %793 : vector<16x128xf32>
      %cst_202 = arith.constant dense<0.000000e+00> : vector<128xf32>
      %796 = vector.multi_reduction <add>, %795, %cst_202 [0] : vector<16x128xf32> to vector<128xf32>
      %797 = vector.shape_cast %796 : vector<128xf32> to vector<1x128xf32>
      %798 = vector.broadcast %6 : f32 to vector<1x128xf32>
      %799 = arith.addf %797, %798 : vector<1x128xf32>
      %800 = vector.broadcast %1 : f32 to vector<1x128xf32>
      %801 = arith.mulf %800, %730 : vector<1x128xf32>
      %802 = arith.addf %799, %801 : vector<1x128xf32>
      %803 = arith.addf %802, %737 : vector<1x128xf32>
      %804 = vector.broadcast %5 : f32 to vector<1x128xf32>
      %805 = arith.mulf %804, %803 : vector<1x128xf32>
      %806 = arith.addf %728, %805 : vector<1x128xf32>
      %807 = vector.extract_strided_slice %488 {offsets = [4, 0], sizes = [1, 128], strides = [1, 1]} : vector<8x128xf32> to vector<1x128xf32>
      %808 = vector.extract_strided_slice %492 {offsets = [4, 0], sizes = [1, 128], strides = [1, 1]} : vector<8x128xf32> to vector<1x128xf32>
      %809 = vector.broadcast %2 : f32 to vector<1x128xf32>
      %810 = arith.mulf %809, %808 : vector<1x128xf32>
      %811 = vector.extract_strided_slice %490 {offsets = [4, 0], sizes = [1, 128], strides = [1, 1]} : vector<8x128xf32> to vector<1x128xf32>
      %812 = vector.broadcast %0 : f32 to vector<1x128xf32>
      %813 = arith.mulf %812, %811 : vector<1x128xf32>
      %814 = arith.addf %810, %813 : vector<1x128xf32>
      %815 = vector.extract_strided_slice %494 {offsets = [4, 0], sizes = [1, 128], strides = [1, 1]} : vector<8x128xf32> to vector<1x128xf32>
      %c4_i32 = arith.constant 4 : i32
      %816 = arith.addi %486, %c4_i32 : i32
      %817 = vector.extract_strided_slice %740 {offsets = [1, 0], sizes = [3, 128], strides = [1, 1]} : vector<4x128xf32> to vector<3x128xf32>
      %818 = tpu.concatenate %817, %807 in 0 : vector<3x128xf32>, vector<1x128xf32> -> vector<4x128xf32>
      %819 = vector.extract_strided_slice %742 {offsets = [1, 0], sizes = [3, 128], strides = [1, 1]} : vector<4x128xf32> to vector<3x128xf32>
      %820 = tpu.concatenate %819, %814 in 0 : vector<3x128xf32>, vector<1x128xf32> -> vector<4x128xf32>
      %821 = vector.extract_strided_slice %744 {offsets = [1, 0], sizes = [3, 128], strides = [1, 1]} : vector<4x128xf32> to vector<3x128xf32>
      %822 = tpu.concatenate %821, %806 in 0 : vector<3x128xf32>, vector<1x128xf32> -> vector<4x128xf32>
      %823 = arith.sitofp %816 : i32 to f32
      %cst_203 = arith.constant 6.250000e-02 : f32
      %824 = arith.mulf %823, %cst_203 : f32
      %c16_i32_204 = arith.constant 16 : i32
      %825 = arith.cmpi slt, %816, %c16_i32_204 : i32
      %826 = vector.broadcast %824 : f32 to vector<4x128xf32>
      %827 = arith.mulf %818, %826 : vector<4x128xf32>
      %cst_205 = arith.constant 1.000000e+00 : f32
      %828 = arith.subf %cst_205, %824 : f32
      %829 = vector.broadcast %828 : f32 to vector<4x128xf32>
      %830 = arith.mulf %822, %829 : vector<4x128xf32>
      %831 = arith.addf %827, %830 : vector<4x128xf32>
      %832 = arith.select %825, %831, %822 : vector<4x128xf32>
      %833 = vector.broadcast %0 : f32 to vector<4x128xf32>
      %834 = arith.mulf %833, %832 : vector<4x128xf32>
      %835 = arith.subf %820, %834 : vector<4x128xf32>
      %836 = vector.extract_strided_slice %835 {offsets = [0, 0], sizes = [1, 128], strides = [1, 1]} : vector<4x128xf32> to vector<1x128xf32>
      %837 = vector.broadcast %8 : vector<16x1xf32> to vector<16x128xf32>
      %838 = vector.broadcast %836 : vector<1x128xf32> to vector<16x128xf32>
      %839 = arith.mulf %837, %838 : vector<16x128xf32>
      %840 = vector.broadcast %10 : vector<16x1xf32> to vector<16x128xf32>
      %841 = arith.addf %839, %840 : vector<16x128xf32>
      %842 = vector.extract_strided_slice %835 {offsets = [1, 0], sizes = [1, 128], strides = [1, 1]} : vector<4x128xf32> to vector<1x128xf32>
      %843 = vector.broadcast %8 : vector<16x1xf32> to vector<16x128xf32>
      %844 = vector.broadcast %842 : vector<1x128xf32> to vector<16x128xf32>
      %845 = arith.mulf %843, %844 : vector<16x128xf32>
      %846 = vector.broadcast %10 : vector<16x1xf32> to vector<16x128xf32>
      %847 = arith.addf %845, %846 : vector<16x128xf32>
      %848 = vector.extract_strided_slice %835 {offsets = [2, 0], sizes = [1, 128], strides = [1, 1]} : vector<4x128xf32> to vector<1x128xf32>
      %849 = vector.broadcast %8 : vector<16x1xf32> to vector<16x128xf32>
      %850 = vector.broadcast %848 : vector<1x128xf32> to vector<16x128xf32>
      %851 = arith.mulf %849, %850 : vector<16x128xf32>
      %852 = vector.broadcast %10 : vector<16x1xf32> to vector<16x128xf32>
      %853 = arith.addf %851, %852 : vector<16x128xf32>
      %854 = vector.extract_strided_slice %835 {offsets = [3, 0], sizes = [1, 128], strides = [1, 1]} : vector<4x128xf32> to vector<1x128xf32>
      %855 = vector.broadcast %8 : vector<16x1xf32> to vector<16x128xf32>
      %856 = vector.broadcast %854 : vector<1x128xf32> to vector<16x128xf32>
      %857 = arith.mulf %855, %856 : vector<16x128xf32>
      %858 = vector.broadcast %10 : vector<16x1xf32> to vector<16x128xf32>
      %859 = arith.addf %857, %858 : vector<16x128xf32>
      %cst_206 = arith.constant dense<0.000000e+00> : vector<16x128xf32>
      %860 = tpu.matmul %9, %793, %cst_206 {dimension_numbers = #tpu.dot_dimension_numbers<[1], [0], [0], [1], [0, 0, 1, 1], [], []>} : vector<16x16xf32>, vector<16x128xf32>, vector<16x128xf32> -> vector<16x128xf32>
      %861 = arith.addf %841, %860 : vector<16x128xf32>
      %862 = math.tanh %861 : vector<16x128xf32>
      %cst_207 = arith.constant dense<0.000000e+00> : vector<16x128xf32>
      %863 = tpu.matmul %9, %862, %cst_207 {dimension_numbers = #tpu.dot_dimension_numbers<[1], [0], [0], [1], [0, 0, 1, 1], [], []>} : vector<16x16xf32>, vector<16x128xf32>, vector<16x128xf32> -> vector<16x128xf32>
      %864 = arith.addf %847, %863 : vector<16x128xf32>
      %865 = math.tanh %864 : vector<16x128xf32>
      %cst_208 = arith.constant dense<0.000000e+00> : vector<16x128xf32>
      %866 = tpu.matmul %9, %865, %cst_208 {dimension_numbers = #tpu.dot_dimension_numbers<[1], [0], [0], [1], [0, 0, 1, 1], [], []>} : vector<16x16xf32>, vector<16x128xf32>, vector<16x128xf32> -> vector<16x128xf32>
      %867 = arith.addf %853, %866 : vector<16x128xf32>
      %868 = math.tanh %867 : vector<16x128xf32>
      %cst_209 = arith.constant dense<0.000000e+00> : vector<16x128xf32>
      %869 = tpu.matmul %9, %868, %cst_209 {dimension_numbers = #tpu.dot_dimension_numbers<[1], [0], [0], [1], [0, 0, 1, 1], [], []>} : vector<16x16xf32>, vector<16x128xf32>, vector<16x128xf32> -> vector<16x128xf32>
      %870 = arith.addf %859, %869 : vector<16x128xf32>
      %871 = math.tanh %870 : vector<16x128xf32>
      %872 = vector.broadcast %11 : vector<16x1xf32> to vector<16x128xf32>
      %873 = arith.mulf %872, %871 : vector<16x128xf32>
      %cst_210 = arith.constant dense<0.000000e+00> : vector<128xf32>
      %874 = vector.multi_reduction <add>, %873, %cst_210 [0] : vector<16x128xf32> to vector<128xf32>
      %875 = vector.shape_cast %874 : vector<128xf32> to vector<1x128xf32>
      %876 = vector.broadcast %6 : f32 to vector<1x128xf32>
      %877 = arith.addf %875, %876 : vector<1x128xf32>
      %878 = vector.broadcast %1 : f32 to vector<1x128xf32>
      %879 = arith.mulf %878, %808 : vector<1x128xf32>
      %880 = arith.addf %877, %879 : vector<1x128xf32>
      %881 = arith.addf %880, %815 : vector<1x128xf32>
      %882 = vector.broadcast %5 : f32 to vector<1x128xf32>
      %883 = arith.mulf %882, %881 : vector<1x128xf32>
      %884 = arith.addf %806, %883 : vector<1x128xf32>
      %885 = vector.extract_strided_slice %488 {offsets = [5, 0], sizes = [1, 128], strides = [1, 1]} : vector<8x128xf32> to vector<1x128xf32>
      %886 = vector.extract_strided_slice %492 {offsets = [5, 0], sizes = [1, 128], strides = [1, 1]} : vector<8x128xf32> to vector<1x128xf32>
      %887 = vector.broadcast %2 : f32 to vector<1x128xf32>
      %888 = arith.mulf %887, %886 : vector<1x128xf32>
      %889 = vector.extract_strided_slice %490 {offsets = [5, 0], sizes = [1, 128], strides = [1, 1]} : vector<8x128xf32> to vector<1x128xf32>
      %890 = vector.broadcast %0 : f32 to vector<1x128xf32>
      %891 = arith.mulf %890, %889 : vector<1x128xf32>
      %892 = arith.addf %888, %891 : vector<1x128xf32>
      %893 = vector.extract_strided_slice %494 {offsets = [5, 0], sizes = [1, 128], strides = [1, 1]} : vector<8x128xf32> to vector<1x128xf32>
      %c5_i32 = arith.constant 5 : i32
      %894 = arith.addi %486, %c5_i32 : i32
      %895 = vector.extract_strided_slice %818 {offsets = [1, 0], sizes = [3, 128], strides = [1, 1]} : vector<4x128xf32> to vector<3x128xf32>
      %896 = tpu.concatenate %895, %885 in 0 : vector<3x128xf32>, vector<1x128xf32> -> vector<4x128xf32>
      %897 = vector.extract_strided_slice %820 {offsets = [1, 0], sizes = [3, 128], strides = [1, 1]} : vector<4x128xf32> to vector<3x128xf32>
      %898 = tpu.concatenate %897, %892 in 0 : vector<3x128xf32>, vector<1x128xf32> -> vector<4x128xf32>
      %899 = vector.extract_strided_slice %822 {offsets = [1, 0], sizes = [3, 128], strides = [1, 1]} : vector<4x128xf32> to vector<3x128xf32>
      %900 = tpu.concatenate %899, %884 in 0 : vector<3x128xf32>, vector<1x128xf32> -> vector<4x128xf32>
      %901 = arith.sitofp %894 : i32 to f32
      %cst_211 = arith.constant 6.250000e-02 : f32
      %902 = arith.mulf %901, %cst_211 : f32
      %c16_i32_212 = arith.constant 16 : i32
      %903 = arith.cmpi slt, %894, %c16_i32_212 : i32
      %904 = vector.broadcast %902 : f32 to vector<4x128xf32>
      %905 = arith.mulf %896, %904 : vector<4x128xf32>
      %cst_213 = arith.constant 1.000000e+00 : f32
      %906 = arith.subf %cst_213, %902 : f32
      %907 = vector.broadcast %906 : f32 to vector<4x128xf32>
      %908 = arith.mulf %900, %907 : vector<4x128xf32>
      %909 = arith.addf %905, %908 : vector<4x128xf32>
      %910 = arith.select %903, %909, %900 : vector<4x128xf32>
      %911 = vector.broadcast %0 : f32 to vector<4x128xf32>
      %912 = arith.mulf %911, %910 : vector<4x128xf32>
      %913 = arith.subf %898, %912 : vector<4x128xf32>
      %914 = vector.extract_strided_slice %913 {offsets = [0, 0], sizes = [1, 128], strides = [1, 1]} : vector<4x128xf32> to vector<1x128xf32>
      %915 = vector.broadcast %8 : vector<16x1xf32> to vector<16x128xf32>
      %916 = vector.broadcast %914 : vector<1x128xf32> to vector<16x128xf32>
      %917 = arith.mulf %915, %916 : vector<16x128xf32>
      %918 = vector.broadcast %10 : vector<16x1xf32> to vector<16x128xf32>
      %919 = arith.addf %917, %918 : vector<16x128xf32>
      %920 = vector.extract_strided_slice %913 {offsets = [1, 0], sizes = [1, 128], strides = [1, 1]} : vector<4x128xf32> to vector<1x128xf32>
      %921 = vector.broadcast %8 : vector<16x1xf32> to vector<16x128xf32>
      %922 = vector.broadcast %920 : vector<1x128xf32> to vector<16x128xf32>
      %923 = arith.mulf %921, %922 : vector<16x128xf32>
      %924 = vector.broadcast %10 : vector<16x1xf32> to vector<16x128xf32>
      %925 = arith.addf %923, %924 : vector<16x128xf32>
      %926 = vector.extract_strided_slice %913 {offsets = [2, 0], sizes = [1, 128], strides = [1, 1]} : vector<4x128xf32> to vector<1x128xf32>
      %927 = vector.broadcast %8 : vector<16x1xf32> to vector<16x128xf32>
      %928 = vector.broadcast %926 : vector<1x128xf32> to vector<16x128xf32>
      %929 = arith.mulf %927, %928 : vector<16x128xf32>
      %930 = vector.broadcast %10 : vector<16x1xf32> to vector<16x128xf32>
      %931 = arith.addf %929, %930 : vector<16x128xf32>
      %932 = vector.extract_strided_slice %913 {offsets = [3, 0], sizes = [1, 128], strides = [1, 1]} : vector<4x128xf32> to vector<1x128xf32>
      %933 = vector.broadcast %8 : vector<16x1xf32> to vector<16x128xf32>
      %934 = vector.broadcast %932 : vector<1x128xf32> to vector<16x128xf32>
      %935 = arith.mulf %933, %934 : vector<16x128xf32>
      %936 = vector.broadcast %10 : vector<16x1xf32> to vector<16x128xf32>
      %937 = arith.addf %935, %936 : vector<16x128xf32>
      %cst_214 = arith.constant dense<0.000000e+00> : vector<16x128xf32>
      %938 = tpu.matmul %9, %871, %cst_214 {dimension_numbers = #tpu.dot_dimension_numbers<[1], [0], [0], [1], [0, 0, 1, 1], [], []>} : vector<16x16xf32>, vector<16x128xf32>, vector<16x128xf32> -> vector<16x128xf32>
      %939 = arith.addf %919, %938 : vector<16x128xf32>
      %940 = math.tanh %939 : vector<16x128xf32>
      %cst_215 = arith.constant dense<0.000000e+00> : vector<16x128xf32>
      %941 = tpu.matmul %9, %940, %cst_215 {dimension_numbers = #tpu.dot_dimension_numbers<[1], [0], [0], [1], [0, 0, 1, 1], [], []>} : vector<16x16xf32>, vector<16x128xf32>, vector<16x128xf32> -> vector<16x128xf32>
      %942 = arith.addf %925, %941 : vector<16x128xf32>
      %943 = math.tanh %942 : vector<16x128xf32>
      %cst_216 = arith.constant dense<0.000000e+00> : vector<16x128xf32>
      %944 = tpu.matmul %9, %943, %cst_216 {dimension_numbers = #tpu.dot_dimension_numbers<[1], [0], [0], [1], [0, 0, 1, 1], [], []>} : vector<16x16xf32>, vector<16x128xf32>, vector<16x128xf32> -> vector<16x128xf32>
      %945 = arith.addf %931, %944 : vector<16x128xf32>
      %946 = math.tanh %945 : vector<16x128xf32>
      %cst_217 = arith.constant dense<0.000000e+00> : vector<16x128xf32>
      %947 = tpu.matmul %9, %946, %cst_217 {dimension_numbers = #tpu.dot_dimension_numbers<[1], [0], [0], [1], [0, 0, 1, 1], [], []>} : vector<16x16xf32>, vector<16x128xf32>, vector<16x128xf32> -> vector<16x128xf32>
      %948 = arith.addf %937, %947 : vector<16x128xf32>
      %949 = math.tanh %948 : vector<16x128xf32>
      %950 = vector.broadcast %11 : vector<16x1xf32> to vector<16x128xf32>
      %951 = arith.mulf %950, %949 : vector<16x128xf32>
      %cst_218 = arith.constant dense<0.000000e+00> : vector<128xf32>
      %952 = vector.multi_reduction <add>, %951, %cst_218 [0] : vector<16x128xf32> to vector<128xf32>
      %953 = vector.shape_cast %952 : vector<128xf32> to vector<1x128xf32>
      %954 = vector.broadcast %6 : f32 to vector<1x128xf32>
      %955 = arith.addf %953, %954 : vector<1x128xf32>
      %956 = vector.broadcast %1 : f32 to vector<1x128xf32>
      %957 = arith.mulf %956, %886 : vector<1x128xf32>
      %958 = arith.addf %955, %957 : vector<1x128xf32>
      %959 = arith.addf %958, %893 : vector<1x128xf32>
      %960 = vector.broadcast %5 : f32 to vector<1x128xf32>
      %961 = arith.mulf %960, %959 : vector<1x128xf32>
      %962 = arith.addf %884, %961 : vector<1x128xf32>
      %963 = vector.extract_strided_slice %488 {offsets = [6, 0], sizes = [1, 128], strides = [1, 1]} : vector<8x128xf32> to vector<1x128xf32>
      %964 = vector.extract_strided_slice %492 {offsets = [6, 0], sizes = [1, 128], strides = [1, 1]} : vector<8x128xf32> to vector<1x128xf32>
      %965 = vector.broadcast %2 : f32 to vector<1x128xf32>
      %966 = arith.mulf %965, %964 : vector<1x128xf32>
      %967 = vector.extract_strided_slice %490 {offsets = [6, 0], sizes = [1, 128], strides = [1, 1]} : vector<8x128xf32> to vector<1x128xf32>
      %968 = vector.broadcast %0 : f32 to vector<1x128xf32>
      %969 = arith.mulf %968, %967 : vector<1x128xf32>
      %970 = arith.addf %966, %969 : vector<1x128xf32>
      %971 = vector.extract_strided_slice %494 {offsets = [6, 0], sizes = [1, 128], strides = [1, 1]} : vector<8x128xf32> to vector<1x128xf32>
      %c6_i32 = arith.constant 6 : i32
      %972 = arith.addi %486, %c6_i32 : i32
      %973 = vector.extract_strided_slice %896 {offsets = [1, 0], sizes = [3, 128], strides = [1, 1]} : vector<4x128xf32> to vector<3x128xf32>
      %974 = tpu.concatenate %973, %963 in 0 : vector<3x128xf32>, vector<1x128xf32> -> vector<4x128xf32>
      %975 = vector.extract_strided_slice %898 {offsets = [1, 0], sizes = [3, 128], strides = [1, 1]} : vector<4x128xf32> to vector<3x128xf32>
      %976 = tpu.concatenate %975, %970 in 0 : vector<3x128xf32>, vector<1x128xf32> -> vector<4x128xf32>
      %977 = vector.extract_strided_slice %900 {offsets = [1, 0], sizes = [3, 128], strides = [1, 1]} : vector<4x128xf32> to vector<3x128xf32>
      %978 = tpu.concatenate %977, %962 in 0 : vector<3x128xf32>, vector<1x128xf32> -> vector<4x128xf32>
      %979 = arith.sitofp %972 : i32 to f32
      %cst_219 = arith.constant 6.250000e-02 : f32
      %980 = arith.mulf %979, %cst_219 : f32
      %c16_i32_220 = arith.constant 16 : i32
      %981 = arith.cmpi slt, %972, %c16_i32_220 : i32
      %982 = vector.broadcast %980 : f32 to vector<4x128xf32>
      %983 = arith.mulf %974, %982 : vector<4x128xf32>
      %cst_221 = arith.constant 1.000000e+00 : f32
      %984 = arith.subf %cst_221, %980 : f32
      %985 = vector.broadcast %984 : f32 to vector<4x128xf32>
      %986 = arith.mulf %978, %985 : vector<4x128xf32>
      %987 = arith.addf %983, %986 : vector<4x128xf32>
      %988 = arith.select %981, %987, %978 : vector<4x128xf32>
      %989 = vector.broadcast %0 : f32 to vector<4x128xf32>
      %990 = arith.mulf %989, %988 : vector<4x128xf32>
      %991 = arith.subf %976, %990 : vector<4x128xf32>
      %992 = vector.extract_strided_slice %991 {offsets = [0, 0], sizes = [1, 128], strides = [1, 1]} : vector<4x128xf32> to vector<1x128xf32>
      %993 = vector.broadcast %8 : vector<16x1xf32> to vector<16x128xf32>
      %994 = vector.broadcast %992 : vector<1x128xf32> to vector<16x128xf32>
      %995 = arith.mulf %993, %994 : vector<16x128xf32>
      %996 = vector.broadcast %10 : vector<16x1xf32> to vector<16x128xf32>
      %997 = arith.addf %995, %996 : vector<16x128xf32>
      %998 = vector.extract_strided_slice %991 {offsets = [1, 0], sizes = [1, 128], strides = [1, 1]} : vector<4x128xf32> to vector<1x128xf32>
      %999 = vector.broadcast %8 : vector<16x1xf32> to vector<16x128xf32>
      %1000 = vector.broadcast %998 : vector<1x128xf32> to vector<16x128xf32>
      %1001 = arith.mulf %999, %1000 : vector<16x128xf32>
      %1002 = vector.broadcast %10 : vector<16x1xf32> to vector<16x128xf32>
      %1003 = arith.addf %1001, %1002 : vector<16x128xf32>
      %1004 = vector.extract_strided_slice %991 {offsets = [2, 0], sizes = [1, 128], strides = [1, 1]} : vector<4x128xf32> to vector<1x128xf32>
      %1005 = vector.broadcast %8 : vector<16x1xf32> to vector<16x128xf32>
      %1006 = vector.broadcast %1004 : vector<1x128xf32> to vector<16x128xf32>
      %1007 = arith.mulf %1005, %1006 : vector<16x128xf32>
      %1008 = vector.broadcast %10 : vector<16x1xf32> to vector<16x128xf32>
      %1009 = arith.addf %1007, %1008 : vector<16x128xf32>
      %1010 = vector.extract_strided_slice %991 {offsets = [3, 0], sizes = [1, 128], strides = [1, 1]} : vector<4x128xf32> to vector<1x128xf32>
      %1011 = vector.broadcast %8 : vector<16x1xf32> to vector<16x128xf32>
      %1012 = vector.broadcast %1010 : vector<1x128xf32> to vector<16x128xf32>
      %1013 = arith.mulf %1011, %1012 : vector<16x128xf32>
      %1014 = vector.broadcast %10 : vector<16x1xf32> to vector<16x128xf32>
      %1015 = arith.addf %1013, %1014 : vector<16x128xf32>
      %cst_222 = arith.constant dense<0.000000e+00> : vector<16x128xf32>
      %1016 = tpu.matmul %9, %949, %cst_222 {dimension_numbers = #tpu.dot_dimension_numbers<[1], [0], [0], [1], [0, 0, 1, 1], [], []>} : vector<16x16xf32>, vector<16x128xf32>, vector<16x128xf32> -> vector<16x128xf32>
      %1017 = arith.addf %997, %1016 : vector<16x128xf32>
      %1018 = math.tanh %1017 : vector<16x128xf32>
      %cst_223 = arith.constant dense<0.000000e+00> : vector<16x128xf32>
      %1019 = tpu.matmul %9, %1018, %cst_223 {dimension_numbers = #tpu.dot_dimension_numbers<[1], [0], [0], [1], [0, 0, 1, 1], [], []>} : vector<16x16xf32>, vector<16x128xf32>, vector<16x128xf32> -> vector<16x128xf32>
      %1020 = arith.addf %1003, %1019 : vector<16x128xf32>
      %1021 = math.tanh %1020 : vector<16x128xf32>
      %cst_224 = arith.constant dense<0.000000e+00> : vector<16x128xf32>
      %1022 = tpu.matmul %9, %1021, %cst_224 {dimension_numbers = #tpu.dot_dimension_numbers<[1], [0], [0], [1], [0, 0, 1, 1], [], []>} : vector<16x16xf32>, vector<16x128xf32>, vector<16x128xf32> -> vector<16x128xf32>
      %1023 = arith.addf %1009, %1022 : vector<16x128xf32>
      %1024 = math.tanh %1023 : vector<16x128xf32>
      %cst_225 = arith.constant dense<0.000000e+00> : vector<16x128xf32>
      %1025 = tpu.matmul %9, %1024, %cst_225 {dimension_numbers = #tpu.dot_dimension_numbers<[1], [0], [0], [1], [0, 0, 1, 1], [], []>} : vector<16x16xf32>, vector<16x128xf32>, vector<16x128xf32> -> vector<16x128xf32>
      %1026 = arith.addf %1015, %1025 : vector<16x128xf32>
      %1027 = math.tanh %1026 : vector<16x128xf32>
      %1028 = vector.broadcast %11 : vector<16x1xf32> to vector<16x128xf32>
      %1029 = arith.mulf %1028, %1027 : vector<16x128xf32>
      %cst_226 = arith.constant dense<0.000000e+00> : vector<128xf32>
      %1030 = vector.multi_reduction <add>, %1029, %cst_226 [0] : vector<16x128xf32> to vector<128xf32>
      %1031 = vector.shape_cast %1030 : vector<128xf32> to vector<1x128xf32>
      %1032 = vector.broadcast %6 : f32 to vector<1x128xf32>
      %1033 = arith.addf %1031, %1032 : vector<1x128xf32>
      %1034 = vector.broadcast %1 : f32 to vector<1x128xf32>
      %1035 = arith.mulf %1034, %964 : vector<1x128xf32>
      %1036 = arith.addf %1033, %1035 : vector<1x128xf32>
      %1037 = arith.addf %1036, %971 : vector<1x128xf32>
      %1038 = vector.broadcast %5 : f32 to vector<1x128xf32>
      %1039 = arith.mulf %1038, %1037 : vector<1x128xf32>
      %1040 = arith.addf %962, %1039 : vector<1x128xf32>
      %1041 = vector.extract_strided_slice %488 {offsets = [7, 0], sizes = [1, 128], strides = [1, 1]} : vector<8x128xf32> to vector<1x128xf32>
      %1042 = vector.extract_strided_slice %492 {offsets = [7, 0], sizes = [1, 128], strides = [1, 1]} : vector<8x128xf32> to vector<1x128xf32>
      %1043 = vector.broadcast %2 : f32 to vector<1x128xf32>
      %1044 = arith.mulf %1043, %1042 : vector<1x128xf32>
      %1045 = vector.extract_strided_slice %490 {offsets = [7, 0], sizes = [1, 128], strides = [1, 1]} : vector<8x128xf32> to vector<1x128xf32>
      %1046 = vector.broadcast %0 : f32 to vector<1x128xf32>
      %1047 = arith.mulf %1046, %1045 : vector<1x128xf32>
      %1048 = arith.addf %1044, %1047 : vector<1x128xf32>
      %1049 = vector.extract_strided_slice %494 {offsets = [7, 0], sizes = [1, 128], strides = [1, 1]} : vector<8x128xf32> to vector<1x128xf32>
      %c7_i32 = arith.constant 7 : i32
      %1050 = arith.addi %486, %c7_i32 : i32
      %1051 = vector.extract_strided_slice %974 {offsets = [1, 0], sizes = [3, 128], strides = [1, 1]} : vector<4x128xf32> to vector<3x128xf32>
      %1052 = tpu.concatenate %1051, %1041 in 0 : vector<3x128xf32>, vector<1x128xf32> -> vector<4x128xf32>
      %1053 = vector.extract_strided_slice %976 {offsets = [1, 0], sizes = [3, 128], strides = [1, 1]} : vector<4x128xf32> to vector<3x128xf32>
      %1054 = tpu.concatenate %1053, %1048 in 0 : vector<3x128xf32>, vector<1x128xf32> -> vector<4x128xf32>
      %1055 = vector.extract_strided_slice %978 {offsets = [1, 0], sizes = [3, 128], strides = [1, 1]} : vector<4x128xf32> to vector<3x128xf32>
      %1056 = tpu.concatenate %1055, %1040 in 0 : vector<3x128xf32>, vector<1x128xf32> -> vector<4x128xf32>
      %1057 = arith.sitofp %1050 : i32 to f32
      %cst_227 = arith.constant 6.250000e-02 : f32
      %1058 = arith.mulf %1057, %cst_227 : f32
      %c16_i32_228 = arith.constant 16 : i32
      %1059 = arith.cmpi slt, %1050, %c16_i32_228 : i32
      %1060 = vector.broadcast %1058 : f32 to vector<4x128xf32>
      %1061 = arith.mulf %1052, %1060 : vector<4x128xf32>
      %cst_229 = arith.constant 1.000000e+00 : f32
      %1062 = arith.subf %cst_229, %1058 : f32
      %1063 = vector.broadcast %1062 : f32 to vector<4x128xf32>
      %1064 = arith.mulf %1056, %1063 : vector<4x128xf32>
      %1065 = arith.addf %1061, %1064 : vector<4x128xf32>
      %1066 = arith.select %1059, %1065, %1056 : vector<4x128xf32>
      %1067 = vector.broadcast %0 : f32 to vector<4x128xf32>
      %1068 = arith.mulf %1067, %1066 : vector<4x128xf32>
      %1069 = arith.subf %1054, %1068 : vector<4x128xf32>
      %1070 = vector.extract_strided_slice %1069 {offsets = [0, 0], sizes = [1, 128], strides = [1, 1]} : vector<4x128xf32> to vector<1x128xf32>
      %1071 = vector.broadcast %8 : vector<16x1xf32> to vector<16x128xf32>
      %1072 = vector.broadcast %1070 : vector<1x128xf32> to vector<16x128xf32>
      %1073 = arith.mulf %1071, %1072 : vector<16x128xf32>
      %1074 = vector.broadcast %10 : vector<16x1xf32> to vector<16x128xf32>
      %1075 = arith.addf %1073, %1074 : vector<16x128xf32>
      %1076 = vector.extract_strided_slice %1069 {offsets = [1, 0], sizes = [1, 128], strides = [1, 1]} : vector<4x128xf32> to vector<1x128xf32>
      %1077 = vector.broadcast %8 : vector<16x1xf32> to vector<16x128xf32>
      %1078 = vector.broadcast %1076 : vector<1x128xf32> to vector<16x128xf32>
      %1079 = arith.mulf %1077, %1078 : vector<16x128xf32>
      %1080 = vector.broadcast %10 : vector<16x1xf32> to vector<16x128xf32>
      %1081 = arith.addf %1079, %1080 : vector<16x128xf32>
      %1082 = vector.extract_strided_slice %1069 {offsets = [2, 0], sizes = [1, 128], strides = [1, 1]} : vector<4x128xf32> to vector<1x128xf32>
      %1083 = vector.broadcast %8 : vector<16x1xf32> to vector<16x128xf32>
      %1084 = vector.broadcast %1082 : vector<1x128xf32> to vector<16x128xf32>
      %1085 = arith.mulf %1083, %1084 : vector<16x128xf32>
      %1086 = vector.broadcast %10 : vector<16x1xf32> to vector<16x128xf32>
      %1087 = arith.addf %1085, %1086 : vector<16x128xf32>
      %1088 = vector.extract_strided_slice %1069 {offsets = [3, 0], sizes = [1, 128], strides = [1, 1]} : vector<4x128xf32> to vector<1x128xf32>
      %1089 = vector.broadcast %8 : vector<16x1xf32> to vector<16x128xf32>
      %1090 = vector.broadcast %1088 : vector<1x128xf32> to vector<16x128xf32>
      %1091 = arith.mulf %1089, %1090 : vector<16x128xf32>
      %1092 = vector.broadcast %10 : vector<16x1xf32> to vector<16x128xf32>
      %1093 = arith.addf %1091, %1092 : vector<16x128xf32>
      %cst_230 = arith.constant dense<0.000000e+00> : vector<16x128xf32>
      %1094 = tpu.matmul %9, %1027, %cst_230 {dimension_numbers = #tpu.dot_dimension_numbers<[1], [0], [0], [1], [0, 0, 1, 1], [], []>} : vector<16x16xf32>, vector<16x128xf32>, vector<16x128xf32> -> vector<16x128xf32>
      %1095 = arith.addf %1075, %1094 : vector<16x128xf32>
      %1096 = math.tanh %1095 : vector<16x128xf32>
      %cst_231 = arith.constant dense<0.000000e+00> : vector<16x128xf32>
      %1097 = tpu.matmul %9, %1096, %cst_231 {dimension_numbers = #tpu.dot_dimension_numbers<[1], [0], [0], [1], [0, 0, 1, 1], [], []>} : vector<16x16xf32>, vector<16x128xf32>, vector<16x128xf32> -> vector<16x128xf32>
      %1098 = arith.addf %1081, %1097 : vector<16x128xf32>
      %1099 = math.tanh %1098 : vector<16x128xf32>
      %cst_232 = arith.constant dense<0.000000e+00> : vector<16x128xf32>
      %1100 = tpu.matmul %9, %1099, %cst_232 {dimension_numbers = #tpu.dot_dimension_numbers<[1], [0], [0], [1], [0, 0, 1, 1], [], []>} : vector<16x16xf32>, vector<16x128xf32>, vector<16x128xf32> -> vector<16x128xf32>
      %1101 = arith.addf %1087, %1100 : vector<16x128xf32>
      %1102 = math.tanh %1101 : vector<16x128xf32>
      %cst_233 = arith.constant dense<0.000000e+00> : vector<16x128xf32>
      %1103 = tpu.matmul %9, %1102, %cst_233 {dimension_numbers = #tpu.dot_dimension_numbers<[1], [0], [0], [1], [0, 0, 1, 1], [], []>} : vector<16x16xf32>, vector<16x128xf32>, vector<16x128xf32> -> vector<16x128xf32>
      %1104 = arith.addf %1093, %1103 : vector<16x128xf32>
      %1105 = math.tanh %1104 : vector<16x128xf32>
      %1106 = vector.broadcast %11 : vector<16x1xf32> to vector<16x128xf32>
      %1107 = arith.mulf %1106, %1105 : vector<16x128xf32>
      %cst_234 = arith.constant dense<0.000000e+00> : vector<128xf32>
      %1108 = vector.multi_reduction <add>, %1107, %cst_234 [0] : vector<16x128xf32> to vector<128xf32>
      %1109 = vector.shape_cast %1108 : vector<128xf32> to vector<1x128xf32>
      %1110 = vector.broadcast %6 : f32 to vector<1x128xf32>
      %1111 = arith.addf %1109, %1110 : vector<1x128xf32>
      %1112 = vector.broadcast %1 : f32 to vector<1x128xf32>
      %1113 = arith.mulf %1112, %1042 : vector<1x128xf32>
      %1114 = arith.addf %1111, %1113 : vector<1x128xf32>
      %1115 = arith.addf %1114, %1049 : vector<1x128xf32>
      %1116 = vector.broadcast %5 : f32 to vector<1x128xf32>
      %1117 = arith.mulf %1116, %1115 : vector<1x128xf32>
      %1118 = arith.addf %1040, %1117 : vector<1x128xf32>
      %1119 = tpu.concatenate %arg21, %572, %650, %728, %806, %884, %962, %1040 in 0 : vector<1x128xf32>, vector<1x128xf32>, vector<1x128xf32>, vector<1x128xf32>, vector<1x128xf32>, vector<1x128xf32>, vector<1x128xf32>, vector<1x128xf32> -> vector<8x128xf32>
      %1120 = arith.index_cast %486 : i32 to index
      %c0_235 = arith.constant 0 : index
      %1121 = vector.load %arg15[%1120, %c0_235] : memref<32x128xf32, #tpu.memory_space<vmem>>, vector<8x128xf32>
      tpu.vector_store %arg15[%1120, %c0_235], %1119 {strides = array<i32>} : memref<32x128xf32, #tpu.memory_space<vmem>>, vector<8x128xf32>,
      %1122 = tpu.concatenate %568, %646, %724, %802, %880, %958, %1036, %1114 in 0 : vector<1x128xf32>, vector<1x128xf32>, vector<1x128xf32>, vector<1x128xf32>, vector<1x128xf32>, vector<1x128xf32>, vector<1x128xf32>, vector<1x128xf32> -> vector<8x128xf32>
      %1123 = arith.index_cast %486 : i32 to index
      %c0_236 = arith.constant 0 : index
      %1124 = vector.load %arg17[%1123, %c0_236] : memref<32x128xf32, #tpu.memory_space<vmem>>, vector<8x128xf32>
      tpu.vector_store %arg17[%1123, %c0_236], %1122 {strides = array<i32>} : memref<32x128xf32, #tpu.memory_space<vmem>>, vector<8x128xf32>,
      %1125 = tpu.concatenate %569, %647, %725, %803, %881, %959, %1037, %1115 in 0 : vector<1x128xf32>, vector<1x128xf32>, vector<1x128xf32>, vector<1x128xf32>, vector<1x128xf32>, vector<1x128xf32>, vector<1x128xf32>, vector<1x128xf32> -> vector<8x128xf32>
      %1126 = arith.index_cast %486 : i32 to index
      %c0_237 = arith.constant 0 : index
      %1127 = vector.load %arg19[%1126, %c0_237] : memref<32x128xf32, #tpu.memory_space<vmem>>, vector<8x128xf32>
      tpu.vector_store %arg19[%1126, %c0_237], %1125 {strides = array<i32>} : memref<32x128xf32, #tpu.memory_space<vmem>>, vector<8x128xf32>,
      scf.yield %1118, %1052, %1054, %1056, %1105 : vector<1x128xf32>, vector<4x128xf32>, vector<4x128xf32>, vector<4x128xf32>, vector<16x128xf32>
    }
    %c3_i32_163 = arith.constant 3 : i32
    return
  }
}

</mosaic_0001>

<llo_original>
// kernel: modnn_forward.1
$region0: #{modnn_forward.1}
  #allocation0 [shape = 'u32[]', space=smem, size = 0x4, offset = 0x4, fixed_abs, tag = 'smem constant byte address 0x4 - core index']
  #allocation1 [shape = 'u32[72,128]{1,0:T(1,128)}', space=vmem, size = 0x9000, scoped, tag = 'internal scratch']
  %s0 = inlined_call_operand.vmem [shape: f32[32,128], index: 0, kind: input, shape index: {}]
  %s1 = inlined_call_operand.vmem [shape: f32[32,128], index: 1, kind: input, shape index: {}]
  %s2 = inlined_call_operand.vmem [shape: f32[32,128], index: 2, kind: input, shape index: {}]
  %s3 = inlined_call_operand.vmem [shape: f32[32,128], index: 3, kind: input, shape index: {}]
  %s4 = inlined_call_operand.vmem [shape: f32[32,128], index: 4, kind: input, shape index: {}]
  %s5 = inlined_call_operand.vmem [shape: f32[32,128], index: 5, kind: input, shape index: {}]
  %s6 = inlined_call_operand.vmem [shape: f32[32,128], index: 6, kind: input, shape index: {}]
  %s7 = inlined_call_operand.vmem [shape: f32[8], index: 7, kind: input, shape index: {}]
  %s8 = inlined_call_operand.vmem [shape: f32[16,1], index: 8, kind: input, shape index: {}]
  %s9 = inlined_call_operand.vmem [shape: f32[16,16], index: 9, kind: input, shape index: {}]
  %s10 = inlined_call_operand.vmem [shape: f32[16,1], index: 10, kind: input, shape index: {}]
  %s11 = inlined_call_operand.vmem [shape: f32[16,1], index: 11, kind: input, shape index: {}]
  %s12 = inlined_call_operand.vmem [shape: f32[16], index: 12, kind: input, shape index: {}]
  %s13 = inlined_call_operand.vmem [shape: f32[8], index: 13, kind: input, shape index: {}]
  %s14 = inlined_call_operand.vmem [shape: f32[8], index: 14, kind: input, shape index: {}]
  %s15 = inlined_call_operand.vmem [shape: f32[32,128], index: 15, kind: output, shape index: {0}]
  %s16 = inlined_call_operand.vmem [shape: f32[32,128], index: 16, kind: output, shape index: {1}]
  %s17 = inlined_call_operand.vmem [shape: f32[32,128], index: 17, kind: output, shape index: {2}]
  %s18 = inlined_call_operand.vmem [shape: f32[32,128], index: 18, kind: output, shape index: {3}]
  %s19 = inlined_call_operand.vmem [shape: f32[32,128], index: 19, kind: output, shape index: {4}]
  %20 = xla_tuple %s15, %s16, %s17, %s18, %s19
  %s21 = sld [smem:[#allocation0]]
  $region125: #{modnn_forward.1} parent=0
    _
  %s23 = ssub.s32 1, %s21
  %s24 = scalar_select 0, %s23, %s21
  $region1: #{modnn_forward.1} parent=0
    #allocation2 [shape = 'u8[512]{0}', space=smem, size = 0x200, scoped, tag = 'input window, operand 7, single buffered']
    #allocation3 [shape = 's32[1]{0}', space=sflag, size = 0x4, scoped, tag = 'scoped memory for modnn_forward.1']
    #allocation4 [shape = 'u8[512]{0}', space=smem, size = 0x200, scoped, tag = 'input window, operand 12, single buffered']
    #allocation5 [shape = 's32[1]{0}', space=sflag, size = 0x4, scoped, tag = 'scoped memory for modnn_forward.1']
    #allocation6 [shape = 'u8[512]{0}', space=smem, size = 0x200, scoped, tag = 'input window, operand 13, single buffered']
    #allocation7 [shape = 'u8[512]{0}', space=smem, size = 0x200, scoped, tag = 'input window, operand 14, single buffered']
    #allocation8 [shape = 's32[1]{0}', space=sflag, size = 0x4, scoped, tag = 'scoped memory for modnn_forward.1']
    %25 = vsyncpa [#allocation3], 0
    %26 = vsyncpa [#allocation5], 0
    %27 = vsyncpa [#allocation8], 0
    // Predicated region
    $region2: #{modnn_forward.1} parent=1 // pred_check
      _
    $region3: #{modnn_forward.1} parent=1 // pred_check_branch
      %29 = sbr.rel (0) target = $region5
    $region4: #{modnn_forward.1} parent=1 // pred_region
      _
    $region5: #{modnn_forward.1} parent=1 // pred_fallthru
      _
    // Predicated region
    $region6: #{modnn_forward.1} parent=1 // pred_check
      _
    $region7: #{modnn_forward.1} parent=1 // pred_check_branch
      %31 = sbr.rel (0) target = $region9
    $region8: #{modnn_forward.1} parent=1 // pred_region
      _
    $region9: #{modnn_forward.1} parent=1 // pred_fallthru
      _
    // Predicated region
    $region10: #{modnn_forward.1} parent=1 // pred_check
      _
    $region11: #{modnn_forward.1} parent=1 // pred_check_branch
      %33 = sbr.rel (0) target = $region13
    $region12: #{modnn_forward.1} parent=1 // pred_region
      _
    $region13: #{modnn_forward.1} parent=1 // pred_fallthru
      _
    // Predicated region
    $region14: #{modnn_forward.1} parent=1 // pred_check
      _
    $region15: #{modnn_forward.1} parent=1 // pred_check_branch
      %35 = sbr.rel (0) target = $region17
    $region16: #{modnn_forward.1} parent=1 // pred_region
      _
    $region17: #{modnn_forward.1} parent=1 // pred_fallthru
      _
    // Predicated region
    $region18: #{modnn_forward.1} parent=1 // pred_check
      _
    $region19: #{modnn_forward.1} parent=1 // pred_check_branch
      %37 = sbr.rel (0) target = $region21
    $region20: #{modnn_forward.1} parent=1 // pred_region
      _
    $region21: #{modnn_forward.1} parent=1 // pred_fallthru
      _
    // Predicated region
    $region22: #{modnn_forward.1} parent=1 // pred_check
      _
    $region23: #{modnn_forward.1} parent=1 // pred_check_branch
      %39 = sbr.rel (0) target = $region25
    $region24: #{modnn_forward.1} parent=1 // pred_region
      _
    $region25: #{modnn_forward.1} parent=1 // pred_fallthru
      _
    // Predicated region
    $region26: #{modnn_forward.1} parent=1 // pred_check
      _
    $region27: #{modnn_forward.1} parent=1 // pred_check_branch
      %41 = sbr.rel (0) target = $region29
    $region28: #{modnn_forward.1} parent=1 // pred_region
      _
    $region29: #{modnn_forward.1} parent=1 // pred_fallthru
      _
    // Predicated region
    $region30: #{modnn_forward.1} parent=1 // pred_check
      _
    $region31: #{modnn_forward.1} parent=1 // pred_check_branch
      %43 = sbr.rel (0) target = $region33
    $region32: #{modnn_forward.1} parent=1 // pred_region
      %45 = vsyncadd [#allocation3], 0
      %s47 = sshll.u32 %s7, 4
      %s48 = int_to_ptr.vmem [resolvable:$true] %s47
      %50 = dma.vmem_to_smem %s48, 16, [#allocation2], [#allocation3]
    $region33: #{modnn_forward.1} parent=1 // pred_fallthru
      _
    // Predicated region
    $region34: #{modnn_forward.1} parent=1 // pred_check
      _
    $region35: #{modnn_forward.1} parent=1 // pred_check_branch
      %52 = sbr.rel (0) target = $region37
    $region36: #{modnn_forward.1} parent=1 // pred_region
      _
    $region37: #{modnn_forward.1} parent=1 // pred_fallthru
      _
    // Predicated region
    $region38: #{modnn_forward.1} parent=1 // pred_check
      _
    $region39: #{modnn_forward.1} parent=1 // pred_check_branch
      %54 = sbr.rel (0) target = $region41
    $region40: #{modnn_forward.1} parent=1 // pred_region
      _
    $region41: #{modnn_forward.1} parent=1 // pred_fallthru
      _
    // Predicated region
    $region42: #{modnn_forward.1} parent=1 // pred_check
      _
    $region43: #{modnn_forward.1} parent=1 // pred_check_branch
      %56 = sbr.rel (0) target = $region45
    $region44: #{modnn_forward.1} parent=1 // pred_region
      _
    $region45: #{modnn_forward.1} parent=1 // pred_fallthru
      _
    // Predicated region
    $region46: #{modnn_forward.1} parent=1 // pred_check
      _
    $region47: #{modnn_forward.1} parent=1 // pred_check_branch
      %58 = sbr.rel (0) target = $region49
    $region48: #{modnn_forward.1} parent=1 // pred_region
      _
    $region49: #{modnn_forward.1} parent=1 // pred_fallthru
      _
    // Predicated region
    $region50: #{modnn_forward.1} parent=1 // pred_check
      _
    $region51: #{modnn_forward.1} parent=1 // pred_check_branch
      %60 = sbr.rel (0) target = $region53
    $region52: #{modnn_forward.1} parent=1 // pred_region
      %62 = vsyncadd [#allocation5], 0
      %s64 = sshll.u32 %s12, 4
      %s65 = int_to_ptr.vmem [resolvable:$true] %s64
      %67 = dma.vmem_to_smem %s65, 16, [#allocation4], [#allocation5]
    $region53: #{modnn_forward.1} parent=1 // pred_fallthru
      _
    // Predicated region
    $region54: #{modnn_forward.1} parent=1 // pred_check
      _
    $region55: #{modnn_forward.1} parent=1 // pred_check_branch
      %69 = sbr.rel (0) target = $region57
    $region56: #{modnn_forward.1} parent=1 // pred_region
      %71 = vsyncadd [#allocation5], 0
      %s73 = sshll.u32 %s13, 4
      %s74 = int_to_ptr.vmem [resolvable:$true] %s73
      %76 = dma.vmem_to_smem %s74, 16, [#allocation6], [#allocation5]
    $region57: #{modnn_forward.1} parent=1 // pred_fallthru
      _
    // Predicated region
    $region58: #{modnn_forward.1} parent=1 // pred_check
      _
    $region59: #{modnn_forward.1} parent=1 // pred_check_branch
      %78 = sbr.rel (0) target = $region61
    $region60: #{modnn_forward.1} parent=1 // pred_region
      %80 = vsyncadd [#allocation8], 0
      %s82 = sshll.u32 %s14, 4
      %s83 = int_to_ptr.vmem [resolvable:$true] %s82
      %85 = dma.vmem_to_smem %s83, 16, [#allocation7], [#allocation8]
    $region61: #{modnn_forward.1} parent=1 // pred_fallthru
      _
    // Predicated region
    $region62: #{modnn_forward.1} parent=1 // pred_check
      _
    $region63: #{modnn_forward.1} parent=1 // pred_check_branch
      %87 = sbr.rel (0) target = $region65
    $region64: #{modnn_forward.1} parent=1 // pred_region
      %89 = dma.done [#allocation3], 16
    $region65: #{modnn_forward.1} parent=1 // pred_fallthru
      _
    // Predicated region
    $region66: #{modnn_forward.1} parent=1 // pred_check
      _
    $region67: #{modnn_forward.1} parent=1 // pred_check_branch
      %91 = sbr.rel (0) target = $region69
    $region68: #{modnn_forward.1} parent=1 // pred_region
      %93 = dma.done [#allocation5], 16
    $region69: #{modnn_forward.1} parent=1 // pred_fallthru
      _
    // Predicated region
    $region70: #{modnn_forward.1} parent=1 // pred_check
      _
    $region71: #{modnn_forward.1} parent=1 // pred_check_branch
      %95 = sbr.rel (0) target = $region73
    $region72: #{modnn_forward.1} parent=1 // pred_region
      %97 = dma.done [#allocation5], 16
    $region73: #{modnn_forward.1} parent=1 // pred_fallthru
      _
    // Predicated region
    $region74: #{modnn_forward.1} parent=1 // pred_check
      _
    $region75: #{modnn_forward.1} parent=1 // pred_check_branch
      %99 = sbr.rel (0) target = $region77
    $region76: #{modnn_forward.1} parent=1 // pred_region
      %101 = dma.done [#allocation8], 16
    $region77: #{modnn_forward.1} parent=1 // pred_fallthru
      _
    %102 = sfence
    %s103 = sld [smem:[#allocation2]]
    %s104 = sld [smem:[#allocation2 + $0x1]]
    %s105 = sld [smem:[#allocation2 + $0x2]]
    %s106 = sld [smem:[#allocation2 + $0x3]]
    %s107 = sld [smem:[#allocation2 + $0x4]]
    %s108 = sld [smem:[#allocation2 + $0x5]]
    %s109 = sld [smem:[#allocation2 + $0x6]]
    %s110 = sld [smem:[#allocation2 + $0x7]]
    %v111 = vld [vmem:[%s8] sm:$0xff]
    %v112 = vld [vmem:[%s8 + $0x8] sm:$0xff]
    %v113 = vld [vmem:[%s9] sm:$0xff]
    %v114 = vld [vmem:[%s9 + $0x8] sm:$0xff]
    %v115 = vld [vmem:[%s10] sm:$0xff]
    %v116 = vld [vmem:[%s10 + $0x8] sm:$0xff]
    %v117 = vld [vmem:[%s11] sm:$0xff]
    %v118 = vld [vmem:[%s11 + $0x8] sm:$0xff]
    %v119 = vld [vmem:[%s6] sm:$0xff]
    %v120 = vld [vmem:[%s6 + $0x8] sm:$0xff]
    %v121 = vld [vmem:[%s6 + $0x10] sm:$0xff]
    %v122 = vld [vmem:[%s6 + $0x18] sm:$0xff]
    %v123 = vstv %s106
    %v124 = vmul.f32 %v123, %v119
    %v125 = vmul.f32 %v123, %v120
    %v126 = vmul.f32 %v123, %v121
    %v127 = vmul.f32 %v123, %v122
    %128 = vst [vmem:[%s16] sm:$0xff] %v124
    %129 = vst [vmem:[%s16 + $0x8] sm:$0xff] %v125
    %130 = vst [vmem:[%s16 + $0x10] sm:$0xff] %v126
    %131 = vst [vmem:[%s16 + $0x18] sm:$0xff] %v127
    %132 = vst [vmem:[%s16] sm:$0xf] %v119
    %v133 = vld [vmem:[%s3] sm:$0xff]
    %v134 = vld [vmem:[%s3 + $0x8] sm:$0xff]
    %v135 = vld [vmem:[%s3 + $0x10] sm:$0xff]
    %v136 = vld [vmem:[%s3 + $0x18] sm:$0xff]
    %v137 = vld [vmem:[%s4] sm:$0xff]
    %v138 = vld [vmem:[%s4 + $0x8] sm:$0xff]
    %v139 = vld [vmem:[%s4 + $0x10] sm:$0xff]
    %v140 = vld [vmem:[%s4 + $0x18] sm:$0xff]
    %v141 = vstv %s110
    %v142 = vadd.f32 %v141, 0.0
    %s143 = sld [smem:[#allocation4]]
    %v144 = vstv %s143
    %v145 = vmul.f32 %v144, %v133
    %v146 = vmul.f32 %v144, %v134
    %v147 = vmul.f32 %v144, %v135
    %v148 = vmul.f32 %v144, %v136
    %s149 = sld [smem:[#allocation4 + $0x1]]
    %v150 = vstv %s149
    %v151 = vmul.f32 %v150, %v137
    %v152 = vmul.f32 %v150, %v138
    %v153 = vmul.f32 %v150, %v139
    %v154 = vmul.f32 %v150, %v140
    %v155 = vadd.f32 %v145, %v151
    %v156 = vadd.f32 %v146, %v152
    %v157 = vadd.f32 %v147, %v153
    %v158 = vadd.f32 %v148, %v154
    %s159 = sld [smem:[#allocation6]]
    %v160 = vstv %s159
    %v161 = vadd.f32 %v155, %v160
    %v162 = vadd.f32 %v156, %v160
    %v163 = vadd.f32 %v157, %v160
    %v164 = vadd.f32 %v158, %v160
    %v165 = vmax.f32 %v161, 0.0
    %v166 = vmax.f32 %v162, 0.0
    %v167 = vmax.f32 %v163, 0.0
    %v168 = vmax.f32 %v164, 0.0
    %s169 = sld [smem:[#allocation7]]
    %v170 = vstv %s169
    %v171 = vmul.f32 %v170, %v165
    %v172 = vmul.f32 %v170, %v166
    %v173 = vmul.f32 %v170, %v167
    %v174 = vmul.f32 %v170, %v168
    %v175 = vadd.f32 %v142, %v171
    %v176 = vadd.f32 %v142, %v172
    %v177 = vadd.f32 %v142, %v173
    %v178 = vadd.f32 %v142, %v174
    %s179 = sld [smem:[#allocation4 + $0x2]]
    %v180 = vstv %s179
    %v181 = vmul.f32 %v180, %v133
    %v182 = vmul.f32 %v180, %v134
    %v183 = vmul.f32 %v180, %v135
    %v184 = vmul.f32 %v180, %v136
    %s185 = sld [smem:[#allocation4 + $0x3]]
    %v186 = vstv %s185
    %v187 = vmul.f32 %v186, %v137
    %v188 = vmul.f32 %v186, %v138
    %v189 = vmul.f32 %v186, %v139
    %v190 = vmul.f32 %v186, %v140
    %v191 = vadd.f32 %v181, %v187
    %v192 = vadd.f32 %v182, %v188
    %v193 = vadd.f32 %v183, %v189
    %v194 = vadd.f32 %v184, %v190
    %s195 = sld [smem:[#allocation6 + $0x1]]
    %v196 = vstv %s195
    %v197 = vadd.f32 %v191, %v196
    %v198 = vadd.f32 %v192, %v196
    %v199 = vadd.f32 %v193, %v196
    %v200 = vadd.f32 %v194, %v196
    %v201 = vmax.f32 %v197, 0.0
    %v202 = vmax.f32 %v198, 0.0
    %v203 = vmax.f32 %v199, 0.0
    %v204 = vmax.f32 %v200, 0.0
    %s205 = sld [smem:[#allocation7 + $0x1]]
    %v206 = vstv %s205
    %v207 = vmul.f32 %v206, %v201
    %v208 = vmul.f32 %v206, %v202
    %v209 = vmul.f32 %v206, %v203
    %v210 = vmul.f32 %v206, %v204
    %v211 = vadd.f32 %v175, %v207
    %v212 = vadd.f32 %v176, %v208
    %v213 = vadd.f32 %v177, %v209
    %v214 = vadd.f32 %v178, %v210
    %s215 = sld [smem:[#allocation4 + $0x4]]
    %v216 = vstv %s215
    %v217 = vmul.f32 %v216, %v133
    %v218 = vmul.f32 %v216, %v134
    %v219 = vmul.f32 %v216, %v135
    %v220 = vmul.f32 %v216, %v136
    %s221 = sld [smem:[#allocation4 + $0x5]]
    %v222 = vstv %s221
    %v223 = vmul.f32 %v222, %v137
    %v224 = vmul.f32 %v222, %v138
    %v225 = vmul.f32 %v222, %v139
    %v226 = vmul.f32 %v222, %v140
    %v227 = vadd.f32 %v217, %v223
    %v228 = vadd.f32 %v218, %v224
    %v229 = vadd.f32 %v219, %v225
    %v230 = vadd.f32 %v220, %v226
    %s231 = sld [smem:[#allocation6 + $0x2]]
    %v232 = vstv %s231
    %v233 = vadd.f32 %v227, %v232
    %v234 = vadd.f32 %v228, %v232
    %v235 = vadd.f32 %v229, %v232
    %v236 = vadd.f32 %v230, %v232
    %v237 = vmax.f32 %v233, 0.0
    %v238 = vmax.f32 %v234, 0.0
    %v239 = vmax.f32 %v235, 0.0
    %v240 = vmax.f32 %v236, 0.0
    %s241 = sld [smem:[#allocation7 + $0x2]]
    %v242 = vstv %s241
    %v243 = vmul.f32 %v242, %v237
    %v244 = vmul.f32 %v242, %v238
    %v245 = vmul.f32 %v242, %v239
    %v246 = vmul.f32 %v242, %v240
    %v247 = vadd.f32 %v211, %v243
    %v248 = vadd.f32 %v212, %v244
    %v249 = vadd.f32 %v213, %v245
    %v250 = vadd.f32 %v214, %v246
    %s251 = sld [smem:[#allocation4 + $0x6]]
    %v252 = vstv %s251
    %v253 = vmul.f32 %v252, %v133
    %v254 = vmul.f32 %v252, %v134
    %v255 = vmul.f32 %v252, %v135
    %v256 = vmul.f32 %v252, %v136
    %s257 = sld [smem:[#allocation4 + $0x7]]
    %v258 = vstv %s257
    %v259 = vmul.f32 %v258, %v137
    %v260 = vmul.f32 %v258, %v138
    %v261 = vmul.f32 %v258, %v139
    %v262 = vmul.f32 %v258, %v140
    %v263 = vadd.f32 %v253, %v259
    %v264 = vadd.f32 %v254, %v260
    %v265 = vadd.f32 %v255, %v261
    %v266 = vadd.f32 %v256, %v262
    %s267 = sld [smem:[#allocation6 + $0x3]]
    %v268 = vstv %s267
    %v269 = vadd.f32 %v263, %v268
    %v270 = vadd.f32 %v264, %v268
    %v271 = vadd.f32 %v265, %v268
    %v272 = vadd.f32 %v266, %v268
    %v273 = vmax.f32 %v269, 0.0
    %v274 = vmax.f32 %v270, 0.0
    %v275 = vmax.f32 %v271, 0.0
    %v276 = vmax.f32 %v272, 0.0
    %s277 = sld [smem:[#allocation7 + $0x3]]
    %v278 = vstv %s277
    %v279 = vmul.f32 %v278, %v273
    %v280 = vmul.f32 %v278, %v274
    %v281 = vmul.f32 %v278, %v275
    %v282 = vmul.f32 %v278, %v276
    %v283 = vadd.f32 %v247, %v279
    %v284 = vadd.f32 %v248, %v280
    %v285 = vadd.f32 %v249, %v281
    %v286 = vadd.f32 %v250, %v282
    %s287 = sld [smem:[#allocation4 + $0x8]]
    %v288 = vstv %s287
    %v289 = vmul.f32 %v288, %v133
    %v290 = vmul.f32 %v288, %v134
    %v291 = vmul.f32 %v288, %v135
    %v292 = vmul.f32 %v288, %v136
    %s293 = sld [smem:[#allocation4 + $0x9]]
    %v294 = vstv %s293
    %v295 = vmul.f32 %v294, %v137
    %v296 = vmul.f32 %v294, %v138
    %v297 = vmul.f32 %v294, %v139
    %v298 = vmul.f32 %v294, %v140
    %v299 = vadd.f32 %v289, %v295
    %v300 = vadd.f32 %v290, %v296
    %v301 = vadd.f32 %v291, %v297
    %v302 = vadd.f32 %v292, %v298
    %s303 = sld [smem:[#allocation6 + $0x4]]
    %v304 = vstv %s303
    %v305 = vadd.f32 %v299, %v304
    %v306 = vadd.f32 %v300, %v304
    %v307 = vadd.f32 %v301, %v304
    %v308 = vadd.f32 %v302, %v304
    %v309 = vmax.f32 %v305, 0.0
    %v310 = vmax.f32 %v306, 0.0
    %v311 = vmax.f32 %v307, 0.0
    %v312 = vmax.f32 %v308, 0.0
    %s313 = sld [smem:[#allocation7 + $0x4]]
    %v314 = vstv %s313
    %v315 = vmul.f32 %v314, %v309
    %v316 = vmul.f32 %v314, %v310
    %v317 = vmul.f32 %v314, %v311
    %v318 = vmul.f32 %v314, %v312
    %v319 = vadd.f32 %v283, %v315
    %v320 = vadd.f32 %v284, %v316
    %v321 = vadd.f32 %v285, %v317
    %v322 = vadd.f32 %v286, %v318
    %s323 = sld [smem:[#allocation4 + $0xa]]
    %v324 = vstv %s323
    %v325 = vmul.f32 %v324, %v133
    %v326 = vmul.f32 %v324, %v134
    %v327 = vmul.f32 %v324, %v135
    %v328 = vmul.f32 %v324, %v136
    %s329 = sld [smem:[#allocation4 + $0xb]]
    %v330 = vstv %s329
    %v331 = vmul.f32 %v330, %v137
    %v332 = vmul.f32 %v330, %v138
    %v333 = vmul.f32 %v330, %v139
    %v334 = vmul.f32 %v330, %v140
    %v335 = vadd.f32 %v325, %v331
    %v336 = vadd.f32 %v326, %v332
    %v337 = vadd.f32 %v327, %v333
    %v338 = vadd.f32 %v328, %v334
    %s339 = sld [smem:[#allocation6 + $0x5]]
    %v340 = vstv %s339
    %v341 = vadd.f32 %v335, %v340
    %v342 = vadd.f32 %v336, %v340
    %v343 = vadd.f32 %v337, %v340
    %v344 = vadd.f32 %v338, %v340
    %v345 = vmax.f32 %v341, 0.0
    %v346 = vmax.f32 %v342, 0.0
    %v347 = vmax.f32 %v343, 0.0
    %v348 = vmax.f32 %v344, 0.0
    %s349 = sld [smem:[#allocation7 + $0x5]]
    %v350 = vstv %s349
    %v351 = vmul.f32 %v350, %v345
    %v352 = vmul.f32 %v350, %v346
    %v353 = vmul.f32 %v350, %v347
    %v354 = vmul.f32 %v350, %v348
    %v355 = vadd.f32 %v319, %v351
    %v356 = vadd.f32 %v320, %v352
    %v357 = vadd.f32 %v321, %v353
    %v358 = vadd.f32 %v322, %v354
    %s359 = sld [smem:[#allocation4 + $0xc]]
    %v360 = vstv %s359
    %v361 = vmul.f32 %v360, %v133
    %v362 = vmul.f32 %v360, %v134
    %v363 = vmul.f32 %v360, %v135
    %v364 = vmul.f32 %v360, %v136
    %s365 = sld [smem:[#allocation4 + $0xd]]
    %v366 = vstv %s365
    %v367 = vmul.f32 %v366, %v137
    %v368 = vmul.f32 %v366, %v138
    %v369 = vmul.f32 %v366, %v139
    %v370 = vmul.f32 %v366, %v140
    %v371 = vadd.f32 %v361, %v367
    %v372 = vadd.f32 %v362, %v368
    %v373 = vadd.f32 %v363, %v369
    %v374 = vadd.f32 %v364, %v370
    %s375 = sld [smem:[#allocation6 + $0x6]]
    %v376 = vstv %s375
    %v377 = vadd.f32 %v371, %v376
    %v378 = vadd.f32 %v372, %v376
    %v379 = vadd.f32 %v373, %v376
    %v380 = vadd.f32 %v374, %v376
    %v381 = vmax.f32 %v377, 0.0
    %v382 = vmax.f32 %v378, 0.0
    %v383 = vmax.f32 %v379, 0.0
    %v384 = vmax.f32 %v380, 0.0
    %s385 = sld [smem:[#allocation7 + $0x6]]
    %v386 = vstv %s385
    %v387 = vmul.f32 %v386, %v381
    %v388 = vmul.f32 %v386, %v382
    %v389 = vmul.f32 %v386, %v383
    %v390 = vmul.f32 %v386, %v384
    %v391 = vadd.f32 %v355, %v387
    %v392 = vadd.f32 %v356, %v388
    %v393 = vadd.f32 %v357, %v389
    %v394 = vadd.f32 %v358, %v390
    %s395 = sld [smem:[#allocation4 + $0xe]]
    %v396 = vstv %s395
    %v397 = vmul.f32 %v396, %v133
    %v398 = vmul.f32 %v396, %v134
    %v399 = vmul.f32 %v396, %v135
    %v400 = vmul.f32 %v396, %v136
    %s401 = sld [smem:[#allocation4 + $0xf]]
    %v402 = vstv %s401
    %v403 = vmul.f32 %v402, %v137
    %v404 = vmul.f32 %v402, %v138
    %v405 = vmul.f32 %v402, %v139
    %v406 = vmul.f32 %v402, %v140
    %v407 = vadd.f32 %v397, %v403
    %v408 = vadd.f32 %v398, %v404
    %v409 = vadd.f32 %v399, %v405
    %v410 = vadd.f32 %v400, %v406
    %s411 = sld [smem:[#allocation6 + $0x7]]
    %v412 = vstv %s411
    %v413 = vadd.f32 %v407, %v412
    %v414 = vadd.f32 %v408, %v412
    %v415 = vadd.f32 %v409, %v412
    %v416 = vadd.f32 %v410, %v412
    %v417 = vmax.f32 %v413, 0.0
    %v418 = vmax.f32 %v414, 0.0
    %v419 = vmax.f32 %v415, 0.0
    %v420 = vmax.f32 %v416, 0.0
    %s421 = sld [smem:[#allocation7 + $0x7]]
    %v422 = vstv %s421
    %v423 = vmul.f32 %v422, %v417
    %v424 = vmul.f32 %v422, %v418
    %v425 = vmul.f32 %v422, %v419
    %v426 = vmul.f32 %v422, %v420
    %v427 = vadd.f32 %v391, %v423
    %v428 = vadd.f32 %v392, %v424
    %v429 = vadd.f32 %v393, %v425
    %v430 = vadd.f32 %v394, %v426
    %v431 = vsub.f32 0.0, %v427
    %v432 = vsub.f32 0.0, %v428
    %v433 = vsub.f32 0.0, %v429
    %v434 = vsub.f32 0.0, %v430
    %v435 = vmul.f32 %v431, 1.442695
    %v436 = vpow.pop %v435
    %v437 = vmul.f32 %v432, 1.442695
    %v438 = vpow.pop %v437
    %v439 = vmul.f32 %v433, 1.442695
    %v440 = vpow.pop %v439
    %v441 = vmul.f32 %v434, 1.442695
    %v442 = vpow.pop %v441
    %v443 = vadd.f32 %v436, 1.0
    %v444 = vadd.f32 %v438, 1.0
    %v445 = vadd.f32 %v440, 1.0
    %v446 = vadd.f32 %v442, 1.0
    %v447 = vrcp.pop %v443
    %v448 = vmul.f32 %v443, %v447
    %v449 = vsub.f32 1.0, %v448
    %v450 = vmul.f32 %v447, %v449
    %v451 = vadd.f32 %v447, %v450
    %vm452 = vweird.f32 %v443
    %vm453 = vweird.f32 %v447
    %vm454 = vmor %vm452, %vm453
    %v455 = vsel %vm454, %v447, %v451
    %v456 = vand.u32 2147483647, %v443
    %vm457 = vcmp.eq.f32.partialorder %v456, 8.507059e+37
    %v458 = vand.u32 %v443, 2147483648
    %v459 = vor.u32 1.1754944e-38, %v458
    %v460 = vsel %vm457, %v459, %v455
    %v461 = vmul.f32 1.0, %v460
    %v462 = vrcp.pop %v444
    %v463 = vmul.f32 %v444, %v462
    %v464 = vsub.f32 1.0, %v463
    %v465 = vmul.f32 %v462, %v464
    %v466 = vadd.f32 %v462, %v465
    %vm467 = vweird.f32 %v444
    %vm468 = vweird.f32 %v462
    %vm469 = vmor %vm467, %vm468
    %v470 = vsel %vm469, %v462, %v466
    %v471 = vand.u32 2147483647, %v444
    %vm472 = vcmp.eq.f32.partialorder %v471, 8.507059e+37
    %v473 = vand.u32 %v444, 2147483648
    %v474 = vor.u32 1.1754944e-38, %v473
    %v475 = vsel %vm472, %v474, %v470
    %v476 = vmul.f32 1.0, %v475
    %v477 = vrcp.pop %v445
    %v478 = vmul.f32 %v445, %v477
    %v479 = vsub.f32 1.0, %v478
    %v480 = vmul.f32 %v477, %v479
    %v481 = vadd.f32 %v477, %v480
    %vm482 = vweird.f32 %v445
    %vm483 = vweird.f32 %v477
    %vm484 = vmor %vm482, %vm483
    %v485 = vsel %vm484, %v477, %v481
    %v486 = vand.u32 2147483647, %v445
    %vm487 = vcmp.eq.f32.partialorder %v486, 8.507059e+37
    %v488 = vand.u32 %v445, 2147483648
    %v489 = vor.u32 1.1754944e-38, %v488
    %v490 = vsel %vm487, %v489, %v485
    %v491 = vmul.f32 1.0, %v490
    %v492 = vrcp.pop %v446
    %v493 = vmul.f32 %v446, %v492
    %v494 = vsub.f32 1.0, %v493
    %v495 = vmul.f32 %v492, %v494
    %v496 = vadd.f32 %v492, %v495
    %vm497 = vweird.f32 %v446
    %vm498 = vweird.f32 %v492
    %vm499 = vmor %vm497, %vm498
    %v500 = vsel %vm499, %v492, %v496
    %v501 = vand.u32 2147483647, %v446
    %vm502 = vcmp.eq.f32.partialorder %v501, 8.507059e+37
    %v503 = vand.u32 %v446, 2147483648
    %v504 = vor.u32 1.1754944e-38, %v503
    %v505 = vsel %vm502, %v504, %v500
    %v506 = vmul.f32 1.0, %v505
    %v507 = vld [vmem:[%s5] sm:$0xff]
    %v508 = vld [vmem:[%s5 + $0x8] sm:$0xff]
    %v509 = vld [vmem:[%s5 + $0x10] sm:$0xff]
    %v510 = vld [vmem:[%s5 + $0x18] sm:$0xff]
    %v511 = vadd.f32 %v461, %v507
    %v512 = vadd.f32 %v476, %v508
    %v513 = vadd.f32 %v491, %v509
    %v514 = vadd.f32 %v506, %v510
    %v515 = vstv %s107
    %v516 = vmul.f32 %v515, %v511
    %v517 = vmul.f32 %v515, %v512
    %v518 = vmul.f32 %v515, %v513
    %v519 = vmul.f32 %v515, %v514
    %520 = vst [vmem:[%s18] sm:$0xff] %v516
    %521 = vst [vmem:[%s18 + $0x8] sm:$0xff] %v517
    %522 = vst [vmem:[%s18 + $0x10] sm:$0xff] %v518
    %523 = vst [vmem:[%s18 + $0x18] sm:$0xff] %v519
    %524 = vst [vmem:[%s18] sm:$0xf] 0.0
    %v525 = vadd.f32 %v124, %v516
    %v526 = vadd.f32 %v125, %v517
    %v527 = vadd.f32 %v126, %v518
    %v528 = vadd.f32 %v127, %v519
    %529 = vst [vmem:[%s19] sm:$0xff] %v525
    %530 = vst [vmem:[%s19 + $0x8] sm:$0xff] %v526
    %531 = vst [vmem:[%s19 + $0x10] sm:$0xff] %v527
    %532 = vst [vmem:[%s19 + $0x18] sm:$0xff] %v528
    %533 = vst [vmem:[%s19] sm:$0xf] 0.0
    %534 = vst [vmem:[%s17] sm:$0xf] 0.0
    %v535 = vld [vmem:[%s0] sm:$0xf]
    %536 = vst [vmem:[%s15] sm:$0xf] %v535
    %v537 = vld [vmem:[%s0 + $0x4] sm:$0x1]
    %v538 = vld [vmem:[%s2] sm:$0xf]
    %v539 = vstv %s105
    %v540 = vmul.f32 %v539, %v538
    %v541 = vld [vmem:[%s1] sm:$0xf]
    %v542 = vstv %s103
    %v543 = vmul.f32 %v542, %v541
    %v544 = vadd.f32 %v540, %v543
    %v545 = vld [vmem:[%s2 + $0x4] sm:$0x1]
    %v546 = vmul.f32 %v539, %v545
    %v547 = vld [vmem:[%s1 + $0x4] sm:$0x1]
    %v548 = vmul.f32 %v542, %v547
    %v549 = vadd.f32 %v546, %v548
    %v550 = vld [vmem:[%s19 + $0x4] sm:$0x1]
    %v552 = vrot.slane %v535, 1
    %v555 = vrot.slane %v537, 5
    %vm557 = vcmask 1042432
    %v558 = vsel %vm557, %v552, %v555
    %v560 = vrot.slane %v544, 1
    %v563 = vrot.slane %v549, 5
    %v565 = vsel %vm557, %v560, %v563
    %v566 = vmul.f32 %v558, 0.25
    %v567 = vmul.f32 %v558, 0.75
    %v568 = vadd.f32 %v566, %v567
    %v569 = vmul.f32 %v542, %v568
    %v570 = vsub.f32 %v565, %v569
    %572 = vset.pattern.permute.xlu0 0
    %573 = vperm.xlu0 %572, %v111
    %v574 = vpop.permute.xlu0 %573
    %577 = vset.pattern.permute.xlu0 0
    %578 = vperm.xlu0 %577, %v112
    %v579 = vpop.permute.xlu0 %578
    %v581 = vperm.slane %v570, 0
    %v582 = vmul.f32 %v574, %v581
    %v583 = vmul.f32 %v579, %v581
    %585 = vset.pattern.permute.xlu0 0
    %586 = vperm.xlu0 %585, %v115
    %v587 = vpop.permute.xlu0 %586
    %590 = vset.pattern.permute.xlu0 0
    %591 = vperm.xlu0 %590, %v116
    %v592 = vpop.permute.xlu0 %591
    %v594 = vadd.f32 %v582, %v587
    %v595 = vadd.f32 %v583, %v592
    %v596 = vperm.slane %v570, 1
    %v597 = vmul.f32 %v574, %v596
    %v598 = vmul.f32 %v579, %v596
    %v599 = vadd.f32 %v597, %v587
    %v600 = vadd.f32 %v598, %v592
    %v601 = vperm.slane %v570, 2
    %v602 = vmul.f32 %v574, %v601
    %v603 = vmul.f32 %v579, %v601
    %v604 = vadd.f32 %v602, %v587
    %v605 = vadd.f32 %v603, %v592
    %v606 = vperm.slane %v570, 3
    %v607 = vmul.f32 %v574, %v606
    %v608 = vmul.f32 %v579, %v606
    %v609 = vadd.f32 %v607, %v587
    %v610 = vadd.f32 %v608, %v592
    %vm611 = vcmask 130048
    %v613 = vsel %vm611, %v113, 0
    %v616 = vsel %vm611, %v114, 0
    %618 = vmatpush.msra.mxu0 0.0
    %619 = vmatpush.msra.mxu0 0.0
    %620 = vmatpush.msra.mxu0 0.0
    %621 = vmatpush.msra.mxu0 0.0
    %622 = vmatpush.msra.mxu0 0.0
    %623 = vmatpush.msra.mxu0 0.0
    %624 = vmatpush.msra.mxu0 0.0
    %625 = vmatpush.msra.mxu0 0.0
    %626 = vmatpush.msra.mxu0 0.0
    %627 = vmatpush.msra.mxu0 0.0
    %628 = vmatpush.msra.mxu0 0.0
    %629 = vmatpush.msra.mxu0 0.0
    %630 = vmatpush.msra.mxu0 0.0
    %631 = vmatpush.msra.mxu0 0.0
    %632 = vmatpush.msra.mxu0 1.0
    %633 = vmatpush.msra.mxu0 1.0
    %634 = vmatmul.f32.gmra.mxu0 %v613
    %v635 = vpop.f32.mrf.mxu0
    %v636 = vadd.f32 0.0, %v635
    %637 = vmatmul.f32.gmra.mxu0 %v616
    %v638 = vpop.f32.mrf.mxu0
    %v639 = vadd.f32 0.0, %v638
    %640 = vdwg.mxu0
    %v641 = vadd.f32 %v594, %v636
    %v642 = vadd.f32 %v595, %v639
    %v643 = vtanh.pop %v641
    %v644 = vtanh.pop %v642
    %645 = vmatpush.msra.mxu0 0.0
    %646 = vmatpush.msra.mxu0 0.0
    %647 = vmatpush.msra.mxu0 0.0
    %648 = vmatpush.msra.mxu0 0.0
    %649 = vmatpush.msra.mxu0 0.0
    %650 = vmatpush.msra.mxu0 0.0
    %651 = vmatpush.msra.mxu0 0.0
    %652 = vmatpush.msra.mxu0 0.0
    %653 = vmatpush.msra.mxu0 0.0
    %654 = vmatpush.msra.mxu0 0.0
    %655 = vmatpush.msra.mxu0 0.0
    %656 = vmatpush.msra.mxu0 0.0
    %657 = vmatpush.msra.mxu0 0.0
    %658 = vmatpush.msra.mxu0 0.0
    %659 = vmatpush.msra.mxu0 %v644
    %660 = vmatpush.msra.mxu0 %v643
    %661 = vmatmul.f32.gmra.mxu0 %v613
    %v662 = vpop.f32.mrf.mxu0
    %v663 = vadd.f32 0.0, %v662
    %664 = vmatmul.f32.gmra.mxu0 %v616
    %v665 = vpop.f32.mrf.mxu0
    %v666 = vadd.f32 0.0, %v665
    %667 = vdwg.mxu0
    %v668 = vadd.f32 %v599, %v663
    %v669 = vadd.f32 %v600, %v666
    %v670 = vtanh.pop %v668
    %v671 = vtanh.pop %v669
    %672 = vmatpush.msra.mxu0 0.0
    %673 = vmatpush.msra.mxu0 0.0
    %674 = vmatpush.msra.mxu0 0.0
    %675 = vmatpush.msra.mxu0 0.0
    %676 = vmatpush.msra.mxu0 0.0
    %677 = vmatpush.msra.mxu0 0.0
    %678 = vmatpush.msra.mxu0 0.0
    %679 = vmatpush.msra.mxu0 0.0
    %680 = vmatpush.msra.mxu0 0.0
    %681 = vmatpush.msra.mxu0 0.0
    %682 = vmatpush.msra.mxu0 0.0
    %683 = vmatpush.msra.mxu0 0.0
    %684 = vmatpush.msra.mxu0 0.0
    %685 = vmatpush.msra.mxu0 0.0
    %686 = vmatpush.msra.mxu0 %v671
    %687 = vmatpush.msra.mxu0 %v670
    %688 = vmatmul.f32.gmra.mxu0 %v613
    %v689 = vpop.f32.mrf.mxu0
    %v690 = vadd.f32 0.0, %v689
    %691 = vmatmul.f32.gmra.mxu0 %v616
    %v692 = vpop.f32.mrf.mxu0
    %v693 = vadd.f32 0.0, %v692
    %694 = vdwg.mxu0
    %v695 = vadd.f32 %v604, %v690
    %v696 = vadd.f32 %v605, %v693
    %v697 = vtanh.pop %v695
    %v698 = vtanh.pop %v696
    %699 = vmatpush.msra.mxu0 0.0
    %700 = vmatpush.msra.mxu0 0.0
    %701 = vmatpush.msra.mxu0 0.0
    %702 = vmatpush.msra.mxu0 0.0
    %703 = vmatpush.msra.mxu0 0.0
    %704 = vmatpush.msra.mxu0 0.0
    %705 = vmatpush.msra.mxu0 0.0
    %706 = vmatpush.msra.mxu0 0.0
    %707 = vmatpush.msra.mxu0 0.0
    %708 = vmatpush.msra.mxu0 0.0
    %709 = vmatpush.msra.mxu0 0.0
    %710 = vmatpush.msra.mxu0 0.0
    %711 = vmatpush.msra.mxu0 0.0
    %712 = vmatpush.msra.mxu0 0.0
    %713 = vmatpush.msra.mxu0 %v698
    %714 = vmatpush.msra.mxu0 %v697
    %715 = vmatmul.f32.gmra.mxu0 %v613
    %v716 = vpop.f32.mrf.mxu0
    %v717 = vadd.f32 0.0, %v716
    %718 = vmatmul.f32.gmra.mxu0 %v616
    %v719 = vpop.f32.mrf.mxu0
    %v720 = vadd.f32 0.0, %v719
    %721 = vdwg.mxu0
    %v722 = vadd.f32 %v609, %v717
    %v723 = vadd.f32 %v610, %v720
    %v724 = vtanh.pop %v722
    %v725 = vtanh.pop %v723
    %727 = vset.pattern.permute.xlu0 0
    %728 = vperm.xlu0 %727, %v117
    %v729 = vpop.permute.xlu0 %728
    %732 = vset.pattern.permute.xlu0 0
    %733 = vperm.xlu0 %732, %v118
    %v734 = vpop.permute.xlu0 %733
    %v736 = vmul.f32 %v729, %v724
    %v737 = vmul.f32 %v734, %v725
    %v738 = vadd.f32 %v736, %v737
    %v739 = vrot.slane %v738, 4
    %v740 = vadd.f32 %v738, %v739
    %v741 = vrot.slane %v740, 2
    %v742 = vadd.f32 %v740, %v741
    %v743 = vrot.slane %v742, 1
    %v744 = vadd.f32 %v742, %v743
    %v745 = vstv %s109
    %v746 = vadd.f32 %v744, %v745
    %v747 = vstv %s104
    %v748 = vmul.f32 %v747, %v545
    %v749 = vadd.f32 %v746, %v748
    %v750 = vadd.f32 %v749, %v550
    %v751 = vstv %s108
    %v752 = vmul.f32 %v751, %v750
    %v753 = vadd.f32 %v537, %v752
    %754 = vst [vmem:[%s15 + $0x4] sm:$0x1] %v537
    %755 = vst [vmem:[%s17 + $0x4] sm:$0x1] %v749
    %756 = vst [vmem:[%s19 + $0x4] sm:$0x1] %v750
    %v757 = vld [vmem:[%s0 + $0x5] sm:$0x1]
    %v758 = vld [vmem:[%s2 + $0x5] sm:$0x1]
    %v759 = vmul.f32 %v539, %v758
    %v760 = vld [vmem:[%s1 + $0x5] sm:$0x1]
    %v761 = vmul.f32 %v542, %v760
    %v762 = vadd.f32 %v759, %v761
    %v763 = vld [vmem:[%s19 + $0x5] sm:$0x1]
    %v765 = vrot.slane %v558, 1
    %v768 = vrot.slane %v757, 5
    %v770 = vsel %vm557, %v765, %v768
    %v772 = vrot.slane %v565, 1
    %v775 = vrot.slane %v762, 5
    %v777 = vsel %vm557, %v772, %v775
    %v779 = vrot.slane %v753, 5
    %v781 = vsel %vm557, %v765, %v779
    %v782 = vmul.f32 %v770, 0.3125
    %v783 = vmul.f32 %v781, 0.6875
    %v784 = vadd.f32 %v782, %v783
    %v785 = vmul.f32 %v542, %v784
    %v786 = vsub.f32 %v777, %v785
    %v787 = vperm.slane %v786, 0
    %v788 = vmul.f32 %v574, %v787
    %v789 = vmul.f32 %v579, %v787
    %v790 = vadd.f32 %v788, %v587
    %v791 = vadd.f32 %v789, %v592
    %v792 = vperm.slane %v786, 1
    %v793 = vmul.f32 %v574, %v792
    %v794 = vmul.f32 %v579, %v792
    %v795 = vadd.f32 %v793, %v587
    %v796 = vadd.f32 %v794, %v592
    %v797 = vperm.slane %v786, 2
    %v798 = vmul.f32 %v574, %v797
    %v799 = vmul.f32 %v579, %v797
    %v800 = vadd.f32 %v798, %v587
    %v801 = vadd.f32 %v799, %v592
    %v802 = vperm.slane %v786, 3
    %v803 = vmul.f32 %v574, %v802
    %v804 = vmul.f32 %v579, %v802
    %v805 = vadd.f32 %v803, %v587
    %v806 = vadd.f32 %v804, %v592
    %807 = vmatpush.msra.mxu0 0.0
    %808 = vmatpush.msra.mxu0 0.0
    %809 = vmatpush.msra.mxu0 0.0
    %810 = vmatpush.msra.mxu0 0.0
    %811 = vmatpush.msra.mxu0 0.0
    %812 = vmatpush.msra.mxu0 0.0
    %813 = vmatpush.msra.mxu0 0.0
    %814 = vmatpush.msra.mxu0 0.0
    %815 = vmatpush.msra.mxu0 0.0
    %816 = vmatpush.msra.mxu0 0.0
    %817 = vmatpush.msra.mxu0 0.0
    %818 = vmatpush.msra.mxu0 0.0
    %819 = vmatpush.msra.mxu0 0.0
    %820 = vmatpush.msra.mxu0 0.0
    %821 = vmatpush.msra.mxu0 %v725
    %822 = vmatpush.msra.mxu0 %v724
    %823 = vmatmul.f32.gmra.mxu0 %v613
    %v824 = vpop.f32.mrf.mxu0
    %v825 = vadd.f32 0.0, %v824
    %826 = vmatmul.f32.gmra.mxu0 %v616
    %v827 = vpop.f32.mrf.mxu0
    %v828 = vadd.f32 0.0, %v827
    %829 = vdwg.mxu0
    %v830 = vadd.f32 %v790, %v825
    %v831 = vadd.f32 %v791, %v828
    %v832 = vtanh.pop %v830
    %v833 = vtanh.pop %v831
    %834 = vmatpush.msra.mxu0 0.0
    %835 = vmatpush.msra.mxu0 0.0
    %836 = vmatpush.msra.mxu0 0.0
    %837 = vmatpush.msra.mxu0 0.0
    %838 = vmatpush.msra.mxu0 0.0
    %839 = vmatpush.msra.mxu0 0.0
    %840 = vmatpush.msra.mxu0 0.0
    %841 = vmatpush.msra.mxu0 0.0
    %842 = vmatpush.msra.mxu0 0.0
    %843 = vmatpush.msra.mxu0 0.0
    %844 = vmatpush.msra.mxu0 0.0
    %845 = vmatpush.msra.mxu0 0.0
    %846 = vmatpush.msra.mxu0 0.0
    %847 = vmatpush.msra.mxu0 0.0
    %848 = vmatpush.msra.mxu0 %v833
    %849 = vmatpush.msra.mxu0 %v832
    %850 = vmatmul.f32.gmra.mxu0 %v613
    %v851 = vpop.f32.mrf.mxu0
    %v852 = vadd.f32 0.0, %v851
    %853 = vmatmul.f32.gmra.mxu0 %v616
    %v854 = vpop.f32.mrf.mxu0
    %v855 = vadd.f32 0.0, %v854
    %856 = vdwg.mxu0
    %v857 = vadd.f32 %v795, %v852
    %v858 = vadd.f32 %v796, %v855
    %v859 = vtanh.pop %v857
    %v860 = vtanh.pop %v858
    %861 = vmatpush.msra.mxu0 0.0
    %862 = vmatpush.msra.mxu0 0.0
    %863 = vmatpush.msra.mxu0 0.0
    %864 = vmatpush.msra.mxu0 0.0
    %865 = vmatpush.msra.mxu0 0.0
    %866 = vmatpush.msra.mxu0 0.0
    %867 = vmatpush.msra.mxu0 0.0
    %868 = vmatpush.msra.mxu0 0.0
    %869 = vmatpush.msra.mxu0 0.0
    %870 = vmatpush.msra.mxu0 0.0
    %871 = vmatpush.msra.mxu0 0.0
    %872 = vmatpush.msra.mxu0 0.0
    %873 = vmatpush.msra.mxu0 0.0
    %874 = vmatpush.msra.mxu0 0.0
    %875 = vmatpush.msra.mxu0 %v860
    %876 = vmatpush.msra.mxu0 %v859
    %877 = vmatmul.f32.gmra.mxu0 %v613
    %v878 = vpop.f32.mrf.mxu0
    %v879 = vadd.f32 0.0, %v878
    %880 = vmatmul.f32.gmra.mxu0 %v616
    %v881 = vpop.f32.mrf.mxu0
    %v882 = vadd.f32 0.0, %v881
    %883 = vdwg.mxu0
    %v884 = vadd.f32 %v800, %v879
    %v885 = vadd.f32 %v801, %v882
    %v886 = vtanh.pop %v884
    %v887 = vtanh.pop %v885
    %888 = vmatpush.msra.mxu0 0.0
    %889 = vmatpush.msra.mxu0 0.0
    %890 = vmatpush.msra.mxu0 0.0
    %891 = vmatpush.msra.mxu0 0.0
    %892 = vmatpush.msra.mxu0 0.0
    %893 = vmatpush.msra.mxu0 0.0
    %894 = vmatpush.msra.mxu0 0.0
    %895 = vmatpush.msra.mxu0 0.0
    %896 = vmatpush.msra.mxu0 0.0
    %897 = vmatpush.msra.mxu0 0.0
    %898 = vmatpush.msra.mxu0 0.0
    %899 = vmatpush.msra.mxu0 0.0
    %900 = vmatpush.msra.mxu0 0.0
    %901 = vmatpush.msra.mxu0 0.0
    %902 = vmatpush.msra.mxu0 %v887
    %903 = vmatpush.msra.mxu0 %v886
    %904 = vmatmul.f32.gmra.mxu0 %v613
    %v905 = vpop.f32.mrf.mxu0
    %v906 = vadd.f32 0.0, %v905
    %907 = vmatmul.f32.gmra.mxu0 %v616
    %v908 = vpop.f32.mrf.mxu0
    %v909 = vadd.f32 0.0, %v908
    %910 = vdwg.mxu0
    %v911 = vadd.f32 %v805, %v906
    %v912 = vadd.f32 %v806, %v909
    %v913 = vtanh.pop %v911
    %v914 = vtanh.pop %v912
    %v915 = vmul.f32 %v729, %v913
    %v916 = vmul.f32 %v734, %v914
    %v917 = vadd.f32 %v915, %v916
    %v918 = vrot.slane %v917, 4
    %v919 = vadd.f32 %v917, %v918
    %v920 = vrot.slane %v919, 2
    %v921 = vadd.f32 %v919, %v920
    %v922 = vrot.slane %v921, 1
    %v923 = vadd.f32 %v921, %v922
    %v924 = vadd.f32 %v923, %v745
    %v925 = vmul.f32 %v747, %v758
    %v926 = vadd.f32 %v924, %v925
    %v927 = vadd.f32 %v926, %v763
    %v928 = vmul.f32 %v751, %v927
    %v929 = vadd.f32 %v753, %v928
    %930 = vst [vmem:[%s15 + $0x5] sm:$0x1] %v753
    %931 = vst [vmem:[%s17 + $0x5] sm:$0x1] %v926
    %932 = vst [vmem:[%s19 + $0x5] sm:$0x1] %v927
    %v933 = vld [vmem:[%s0 + $0x6] sm:$0x1]
    %v934 = vld [vmem:[%s2 + $0x6] sm:$0x1]
    %v935 = vmul.f32 %v539, %v934
    %v936 = vld [vmem:[%s1 + $0x6] sm:$0x1]
    %v937 = vmul.f32 %v542, %v936
    %v938 = vadd.f32 %v935, %v937
    %v939 = vld [vmem:[%s19 + $0x6] sm:$0x1]
    %v941 = vrot.slane %v770, 1
    %v944 = vrot.slane %v933, 5
    %v946 = vsel %vm557, %v941, %v944
    %v948 = vrot.slane %v777, 1
    %v951 = vrot.slane %v938, 5
    %v953 = vsel %vm557, %v948, %v951
    %v955 = vrot.slane %v781, 1
    %v958 = vrot.slane %v929, 5
    %v960 = vsel %vm557, %v955, %v958
    %v961 = vmul.f32 %v946, 0.375
    %v962 = vmul.f32 %v960, 0.625
    %v963 = vadd.f32 %v961, %v962
    %v964 = vmul.f32 %v542, %v963
    %v965 = vsub.f32 %v953, %v964
    %v966 = vperm.slane %v965, 0
    %v967 = vmul.f32 %v574, %v966
    %v968 = vmul.f32 %v579, %v966
    %v969 = vadd.f32 %v967, %v587
    %v970 = vadd.f32 %v968, %v592
    %v971 = vperm.slane %v965, 1
    %v972 = vmul.f32 %v574, %v971
    %v973 = vmul.f32 %v579, %v971
    %v974 = vadd.f32 %v972, %v587
    %v975 = vadd.f32 %v973, %v592
    %v976 = vperm.slane %v965, 2
    %v977 = vmul.f32 %v574, %v976
    %v978 = vmul.f32 %v579, %v976
    %v979 = vadd.f32 %v977, %v587
    %v980 = vadd.f32 %v978, %v592
    %v981 = vperm.slane %v965, 3
    %v982 = vmul.f32 %v574, %v981
    %v983 = vmul.f32 %v579, %v981
    %v984 = vadd.f32 %v982, %v587
    %v985 = vadd.f32 %v983, %v592
    %986 = vmatpush.msra.mxu0 0.0
    %987 = vmatpush.msra.mxu0 0.0
    %988 = vmatpush.msra.mxu0 0.0
    %989 = vmatpush.msra.mxu0 0.0
    %990 = vmatpush.msra.mxu0 0.0
    %991 = vmatpush.msra.mxu0 0.0
    %992 = vmatpush.msra.mxu0 0.0
    %993 = vmatpush.msra.mxu0 0.0
    %994 = vmatpush.msra.mxu0 0.0
    %995 = vmatpush.msra.mxu0 0.0
    %996 = vmatpush.msra.mxu0 0.0
    %997 = vmatpush.msra.mxu0 0.0
    %998 = vmatpush.msra.mxu0 0.0
    %999 = vmatpush.msra.mxu0 0.0
    %1000 = vmatpush.msra.mxu0 %v914
    %1001 = vmatpush.msra.mxu0 %v913
    %1002 = vmatmul.f32.gmra.mxu0 %v613
    %v1003 = vpop.f32.mrf.mxu0
    %v1004 = vadd.f32 0.0, %v1003
    %1005 = vmatmul.f32.gmra.mxu0 %v616
    %v1006 = vpop.f32.mrf.mxu0
    %v1007 = vadd.f32 0.0, %v1006
    %1008 = vdwg.mxu0
    %v1009 = vadd.f32 %v969, %v1004
    %v1010 = vadd.f32 %v970, %v1007
    %v1011 = vtanh.pop %v1009
    %v1012 = vtanh.pop %v1010
    %1013 = vmatpush.msra.mxu0 0.0
    %1014 = vmatpush.msra.mxu0 0.0
    %1015 = vmatpush.msra.mxu0 0.0
    %1016 = vmatpush.msra.mxu0 0.0
    %1017 = vmatpush.msra.mxu0 0.0
    %1018 = vmatpush.msra.mxu0 0.0
    %1019 = vmatpush.msra.mxu0 0.0
    %1020 = vmatpush.msra.mxu0 0.0
    %1021 = vmatpush.msra.mxu0 0.0
    %1022 = vmatpush.msra.mxu0 0.0
    %1023 = vmatpush.msra.mxu0 0.0
    %1024 = vmatpush.msra.mxu0 0.0
    %1025 = vmatpush.msra.mxu0 0.0
    %1026 = vmatpush.msra.mxu0 0.0
    %1027 = vmatpush.msra.mxu0 %v1012
    %1028 = vmatpush.msra.mxu0 %v1011
    %1029 = vmatmul.f32.gmra.mxu0 %v613
    %v1030 = vpop.f32.mrf.mxu0
    %v1031 = vadd.f32 0.0, %v1030
    %1032 = vmatmul.f32.gmra.mxu0 %v616
    %v1033 = vpop.f32.mrf.mxu0
    %v1034 = vadd.f32 0.0, %v1033
    %1035 = vdwg.mxu0
    %v1036 = vadd.f32 %v974, %v1031
    %v1037 = vadd.f32 %v975, %v1034
    %v1038 = vtanh.pop %v1036
    %v1039 = vtanh.pop %v1037
    %1040 = vmatpush.msra.mxu0 0.0
    %1041 = vmatpush.msra.mxu0 0.0
    %1042 = vmatpush.msra.mxu0 0.0
    %1043 = vmatpush.msra.mxu0 0.0
    %1044 = vmatpush.msra.mxu0 0.0
    %1045 = vmatpush.msra.mxu0 0.0
    %1046 = vmatpush.msra.mxu0 0.0
    %1047 = vmatpush.msra.mxu0 0.0
    %1048 = vmatpush.msra.mxu0 0.0
    %1049 = vmatpush.msra.mxu0 0.0
    %1050 = vmatpush.msra.mxu0 0.0
    %1051 = vmatpush.msra.mxu0 0.0
    %1052 = vmatpush.msra.mxu0 0.0
    %1053 = vmatpush.msra.mxu0 0.0
    %1054 = vmatpush.msra.mxu0 %v1039
    %1055 = vmatpush.msra.mxu0 %v1038
    %1056 = vmatmul.f32.gmra.mxu0 %v613
    %v1057 = vpop.f32.mrf.mxu0
    %v1058 = vadd.f32 0.0, %v1057
    %1059 = vmatmul.f32.gmra.mxu0 %v616
    %v1060 = vpop.f32.mrf.mxu0
    %v1061 = vadd.f32 0.0, %v1060
    %1062 = vdwg.mxu0
    %v1063 = vadd.f32 %v979, %v1058
    %v1064 = vadd.f32 %v980, %v1061
    %v1065 = vtanh.pop %v1063
    %v1066 = vtanh.pop %v1064
    %1067 = vmatpush.msra.mxu0 0.0
    %1068 = vmatpush.msra.mxu0 0.0
    %1069 = vmatpush.msra.mxu0 0.0
    %1070 = vmatpush.msra.mxu0 0.0
    %1071 = vmatpush.msra.mxu0 0.0
    %1072 = vmatpush.msra.mxu0 0.0
    %1073 = vmatpush.msra.mxu0 0.0
    %1074 = vmatpush.msra.mxu0 0.0
    %1075 = vmatpush.msra.mxu0 0.0
    %1076 = vmatpush.msra.mxu0 0.0
    %1077 = vmatpush.msra.mxu0 0.0
    %1078 = vmatpush.msra.mxu0 0.0
    %1079 = vmatpush.msra.mxu0 0.0
    %1080 = vmatpush.msra.mxu0 0.0
    %1081 = vmatpush.msra.mxu0 %v1066
    %1082 = vmatpush.msra.mxu0 %v1065
    %1083 = vmatmul.f32.gmra.mxu0 %v613
    %v1084 = vpop.f32.mrf.mxu0
    %v1085 = vadd.f32 0.0, %v1084
    %1086 = vmatmul.f32.gmra.mxu0 %v616
    %v1087 = vpop.f32.mrf.mxu0
    %v1088 = vadd.f32 0.0, %v1087
    %1089 = vdwg.mxu0
    %v1090 = vadd.f32 %v984, %v1085
    %v1091 = vadd.f32 %v985, %v1088
    %v1092 = vtanh.pop %v1090
    %v1093 = vtanh.pop %v1091
    %v1094 = vmul.f32 %v729, %v1092
    %v1095 = vmul.f32 %v734, %v1093
    %v1096 = vadd.f32 %v1094, %v1095
    %v1097 = vrot.slane %v1096, 4
    %v1098 = vadd.f32 %v1096, %v1097
    %v1099 = vrot.slane %v1098, 2
    %v1100 = vadd.f32 %v1098, %v1099
    %v1101 = vrot.slane %v1100, 1
    %v1102 = vadd.f32 %v1100, %v1101
    %v1103 = vadd.f32 %v1102, %v745
    %v1104 = vmul.f32 %v747, %v934
    %v1105 = vadd.f32 %v1103, %v1104
    %v1106 = vadd.f32 %v1105, %v939
    %v1107 = vmul.f32 %v751, %v1106
    %v1108 = vadd.f32 %v929, %v1107
    %1109 = vst [vmem:[%s15 + $0x6] sm:$0x1] %v929
    %1110 = vst [vmem:[%s17 + $0x6] sm:$0x1] %v1105
    %1111 = vst [vmem:[%s19 + $0x6] sm:$0x1] %v1106
    %v1112 = vld [vmem:[%s0 + $0x7] sm:$0x1]
    %v1113 = vld [vmem:[%s2 + $0x7] sm:$0x1]
    %v1114 = vmul.f32 %v539, %v1113
    %v1115 = vld [vmem:[%s1 + $0x7] sm:$0x1]
    %v1116 = vmul.f32 %v542, %v1115
    %v1117 = vadd.f32 %v1114, %v1116
    %v1118 = vld [vmem:[%s19 + $0x7] sm:$0x1]
    %v1120 = vrot.slane %v946, 1
    %v1123 = vrot.slane %v1112, 5
    %v1125 = vsel %vm557, %v1120, %v1123
    %v1127 = vrot.slane %v953, 1
    %v1130 = vrot.slane %v1117, 5
    %v1132 = vsel %vm557, %v1127, %v1130
    %v1134 = vrot.slane %v960, 1
    %v1137 = vrot.slane %v1108, 5
    %v1139 = vsel %vm557, %v1134, %v1137
    %v1140 = vmul.f32 %v1125, 0.4375
    %v1141 = vmul.f32 %v1139, 0.5625
    %v1142 = vadd.f32 %v1140, %v1141
    %v1143 = vmul.f32 %v542, %v1142
    %v1144 = vsub.f32 %v1132, %v1143
    %v1145 = vperm.slane %v1144, 0
    %v1146 = vmul.f32 %v574, %v1145
    %v1147 = vmul.f32 %v579, %v1145
    %v1148 = vadd.f32 %v1146, %v587
    %v1149 = vadd.f32 %v1147, %v592
    %v1150 = vperm.slane %v1144, 1
    %v1151 = vmul.f32 %v574, %v1150
    %v1152 = vmul.f32 %v579, %v1150
    %v1153 = vadd.f32 %v1151, %v587
    %v1154 = vadd.f32 %v1152, %v592
    %v1155 = vperm.slane %v1144, 2
    %v1156 = vmul.f32 %v574, %v1155
    %v1157 = vmul.f32 %v579, %v1155
    %v1158 = vadd.f32 %v1156, %v587
    %v1159 = vadd.f32 %v1157, %v592
    %v1160 = vperm.slane %v1144, 3
    %v1161 = vmul.f32 %v574, %v1160
    %v1162 = vmul.f32 %v579, %v1160
    %v1163 = vadd.f32 %v1161, %v587
    %v1164 = vadd.f32 %v1162, %v592
    %1165 = vmatpush.msra.mxu0 0.0
    %1166 = vmatpush.msra.mxu0 0.0
    %1167 = vmatpush.msra.mxu0 0.0
    %1168 = vmatpush.msra.mxu0 0.0
    %1169 = vmatpush.msra.mxu0 0.0
    %1170 = vmatpush.msra.mxu0 0.0
    %1171 = vmatpush.msra.mxu0 0.0
    %1172 = vmatpush.msra.mxu0 0.0
    %1173 = vmatpush.msra.mxu0 0.0
    %1174 = vmatpush.msra.mxu0 0.0
    %1175 = vmatpush.msra.mxu0 0.0
    %1176 = vmatpush.msra.mxu0 0.0
    %1177 = vmatpush.msra.mxu0 0.0
    %1178 = vmatpush.msra.mxu0 0.0
    %1179 = vmatpush.msra.mxu0 %v1093
    %1180 = vmatpush.msra.mxu0 %v1092
    %1181 = vmatmul.f32.gmra.mxu0 %v613
    %v1182 = vpop.f32.mrf.mxu0
    %v1183 = vadd.f32 0.0, %v1182
    %1184 = vmatmul.f32.gmra.mxu0 %v616
    %v1185 = vpop.f32.mrf.mxu0
    %v1186 = vadd.f32 0.0, %v1185
    %1187 = vdwg.mxu0
    %v1188 = vadd.f32 %v1148, %v1183
    %v1189 = vadd.f32 %v1149, %v1186
    %v1190 = vtanh.pop %v1188
    %v1191 = vtanh.pop %v1189
    %1192 = vmatpush.msra.mxu0 0.0
    %1193 = vmatpush.msra.mxu0 0.0
    %1194 = vmatpush.msra.mxu0 0.0
    %1195 = vmatpush.msra.mxu0 0.0
    %1196 = vmatpush.msra.mxu0 0.0
    %1197 = vmatpush.msra.mxu0 0.0
    %1198 = vmatpush.msra.mxu0 0.0
    %1199 = vmatpush.msra.mxu0 0.0
    %1200 = vmatpush.msra.mxu0 0.0
    %1201 = vmatpush.msra.mxu0 0.0
    %1202 = vmatpush.msra.mxu0 0.0
    %1203 = vmatpush.msra.mxu0 0.0
    %1204 = vmatpush.msra.mxu0 0.0
    %1205 = vmatpush.msra.mxu0 0.0
    %1206 = vmatpush.msra.mxu0 %v1191
    %1207 = vmatpush.msra.mxu0 %v1190
    %1208 = vmatmul.f32.gmra.mxu0 %v613
    %v1209 = vpop.f32.mrf.mxu0
    %v1210 = vadd.f32 0.0, %v1209
    %1211 = vmatmul.f32.gmra.mxu0 %v616
    %v1212 = vpop.f32.mrf.mxu0
    %v1213 = vadd.f32 0.0, %v1212
    %1214 = vdwg.mxu0
    %v1215 = vadd.f32 %v1153, %v1210
    %v1216 = vadd.f32 %v1154, %v1213
    %v1217 = vtanh.pop %v1215
    %v1218 = vtanh.pop %v1216
    %1219 = vmatpush.msra.mxu0 0.0
    %1220 = vmatpush.msra.mxu0 0.0
    %1221 = vmatpush.msra.mxu0 0.0
    %1222 = vmatpush.msra.mxu0 0.0
    %1223 = vmatpush.msra.mxu0 0.0
    %1224 = vmatpush.msra.mxu0 0.0
    %1225 = vmatpush.msra.mxu0 0.0
    %1226 = vmatpush.msra.mxu0 0.0
    %1227 = vmatpush.msra.mxu0 0.0
    %1228 = vmatpush.msra.mxu0 0.0
    %1229 = vmatpush.msra.mxu0 0.0
    %1230 = vmatpush.msra.mxu0 0.0
    %1231 = vmatpush.msra.mxu0 0.0
    %1232 = vmatpush.msra.mxu0 0.0
    %1233 = vmatpush.msra.mxu0 %v1218
    %1234 = vmatpush.msra.mxu0 %v1217
    %1235 = vmatmul.f32.gmra.mxu0 %v613
    %v1236 = vpop.f32.mrf.mxu0
    %v1237 = vadd.f32 0.0, %v1236
    %1238 = vmatmul.f32.gmra.mxu0 %v616
    %v1239 = vpop.f32.mrf.mxu0
    %v1240 = vadd.f32 0.0, %v1239
    %1241 = vdwg.mxu0
    %v1242 = vadd.f32 %v1158, %v1237
    %v1243 = vadd.f32 %v1159, %v1240
    %v1244 = vtanh.pop %v1242
    %v1245 = vtanh.pop %v1243
    %1246 = vmatpush.msra.mxu0 0.0
    %1247 = vmatpush.msra.mxu0 0.0
    %1248 = vmatpush.msra.mxu0 0.0
    %1249 = vmatpush.msra.mxu0 0.0
    %1250 = vmatpush.msra.mxu0 0.0
    %1251 = vmatpush.msra.mxu0 0.0
    %1252 = vmatpush.msra.mxu0 0.0
    %1253 = vmatpush.msra.mxu0 0.0
    %1254 = vmatpush.msra.mxu0 0.0
    %1255 = vmatpush.msra.mxu0 0.0
    %1256 = vmatpush.msra.mxu0 0.0
    %1257 = vmatpush.msra.mxu0 0.0
    %1258 = vmatpush.msra.mxu0 0.0
    %1259 = vmatpush.msra.mxu0 0.0
    %1260 = vmatpush.msra.mxu0 %v1245
    %1261 = vmatpush.msra.mxu0 %v1244
    %1262 = vmatmul.f32.gmra.mxu0 %v613
    %v1263 = vpop.f32.mrf.mxu0
    %v1264 = vadd.f32 0.0, %v1263
    %1265 = vmatmul.f32.gmra.mxu0 %v616
    %v1266 = vpop.f32.mrf.mxu0
    %v1267 = vadd.f32 0.0, %v1266
    %1268 = vdwg.mxu0
    %v1269 = vadd.f32 %v1163, %v1264
    %v1270 = vadd.f32 %v1164, %v1267
    %v1271 = vtanh.pop %v1269
    %v1272 = vtanh.pop %v1270
    %v1273 = vmul.f32 %v729, %v1271
    %v1274 = vmul.f32 %v734, %v1272
    %v1275 = vadd.f32 %v1273, %v1274
    %v1276 = vrot.slane %v1275, 4
    %v1277 = vadd.f32 %v1275, %v1276
    %v1278 = vrot.slane %v1277, 2
    %v1279 = vadd.f32 %v1277, %v1278
    %v1280 = vrot.slane %v1279, 1
    %v1281 = vadd.f32 %v1279, %v1280
    %v1282 = vadd.f32 %v1281, %v745
    %v1283 = vmul.f32 %v747, %v1113
    %v1284 = vadd.f32 %v1282, %v1283
    %v1285 = vadd.f32 %v1284, %v1118
    %v1286 = vmul.f32 %v751, %v1285
    %v1287 = vadd.f32 %v1108, %v1286
    %1288 = vst [vmem:[%s15 + $0x7] sm:$0x1] %v1108
    %1289 = vst [vmem:[%s17 + $0x7] sm:$0x1] %v1284
    %1290 = vst [vmem:[%s19 + $0x7] sm:$0x1] %v1285
    loop: start=0, step=1, limit=3
    $region78: #{modnn_forward.1} parent=1 // loop_pre_header
      _
    $region79: #{modnn_forward.1} parent=1 // loop_header
      %s1292 = sphi 0, %s1296
      %p1293 = scmp.ge.s32.totalorder %s1292, 3
      %v1297 = vphi %v1287, %v2750
      %v1298 = vphi %v1125, %v2577
      %v1299 = vphi %v1132, %v2583
      %v1300 = vphi %v1139, %v2590
      %v1301 = vphi %v1271, %v2732
      %v1302 = vphi %v1272, %v2733
    $region80: #{modnn_forward.1} parent=1 // loop_header_branch
      %1295 = sbr.rel (%p1293) target = $region84
    $region81: #{modnn_forward.1} parent=1 // loop_body
      %s1303 = smul.u32 %s1292, 8
      %s1304 = sadd.s32 %s1303, 8
      %s1305 = scalar_lea.vmem %s0, %s1304
      %v1306 = vld [vmem:[%s1305] sm:$0xff]
      %s1307 = scalar_lea.vmem %s1, %s1304
      %v1308 = vld [vmem:[%s1307] sm:$0xff]
      %s1309 = scalar_lea.vmem %s2, %s1304
      %v1310 = vld [vmem:[%s1309] sm:$0xff]
      %s1311 = scalar_lea.vmem %s19, %s1304
      %v1312 = vld [vmem:[%s1311] sm:$0xff]
      %v1313 = vmul.f32 %v539, %v1310
      %v1314 = vmul.f32 %v542, %v1308
      %v1315 = vadd.f32 %v1313, %v1314
      %v1317 = vrot.slane %v1298, 1
      %v1320 = vrot.slane %v1306, 5
      %v1322 = vsel %vm557, %v1317, %v1320
      %v1324 = vrot.slane %v1299, 1
      %v1327 = vrot.slane %v1315, 5
      %v1329 = vsel %vm557, %v1324, %v1327
      %v1331 = vrot.slane %v1300, 1
      %v1334 = vrot.slane %v1297, 5
      %v1336 = vsel %vm557, %v1331, %v1334
      %s1337 = scvt.s32.f32 %s1304
      %s1338 = smul.f32 %s1337, 0.0625
      %p1339 = scmp.lt.s32.totalorder %s1304, 16
      %v1340 = vstv %s1338
      %v1341 = vmul.f32 %v1322, %v1340
      %s1342 = ssub.f32 1.0, %s1338
      %v1343 = vstv %s1342
      %v1344 = vmul.f32 %v1336, %v1343
      %v1345 = vadd.f32 %v1341, %v1344
      %s1346 = scalar_select %p1339, 1, 0
      %v1347 = vstv %s1346
      %vm1348 = vcmp.eq.s32.totalorder %v1347, 1
      %v1349 = vsel %vm1348, %v1345, %v1336
      %v1350 = vmul.f32 %v542, %v1349
      %v1351 = vsub.f32 %v1329, %v1350
      %v1352 = vperm.slane %v1351, 0
      %v1353 = vmul.f32 %v574, %v1352
      %v1354 = vmul.f32 %v579, %v1352
      %v1355 = vadd.f32 %v1353, %v587
      %v1356 = vadd.f32 %v1354, %v592
      %v1357 = vperm.slane %v1351, 1
      %v1358 = vmul.f32 %v574, %v1357
      %v1359 = vmul.f32 %v579, %v1357
      %v1360 = vadd.f32 %v1358, %v587
      %v1361 = vadd.f32 %v1359, %v592
      %v1362 = vperm.slane %v1351, 2
      %v1363 = vmul.f32 %v574, %v1362
      %v1364 = vmul.f32 %v579, %v1362
      %v1365 = vadd.f32 %v1363, %v587
      %v1366 = vadd.f32 %v1364, %v592
      %v1367 = vperm.slane %v1351, 3
      %v1368 = vmul.f32 %v574, %v1367
      %v1369 = vmul.f32 %v579, %v1367
      %v1370 = vadd.f32 %v1368, %v587
      %v1371 = vadd.f32 %v1369, %v592
      %1372 = vmatpush.msra.mxu0 0.0
      %1373 = vmatpush.msra.mxu0 0.0
      %1374 = vmatpush.msra.mxu0 0.0
      %1375 = vmatpush.msra.mxu0 0.0
      %1376 = vmatpush.msra.mxu0 0.0
      %1377 = vmatpush.msra.mxu0 0.0
      %1378 = vmatpush.msra.mxu0 0.0
      %1379 = vmatpush.msra.mxu0 0.0
      %1380 = vmatpush.msra.mxu0 0.0
      %1381 = vmatpush.msra.mxu0 0.0
      %1382 = vmatpush.msra.mxu0 0.0
      %1383 = vmatpush.msra.mxu0 0.0
      %1384 = vmatpush.msra.mxu0 0.0
      %1385 = vmatpush.msra.mxu0 0.0
      %1386 = vmatpush.msra.mxu0 %v1302
      %1387 = vmatpush.msra.mxu0 %v1301
      %1388 = vmatmul.f32.gmra.mxu0 %v613
      %v1389 = vpop.f32.mrf.mxu0
      %v1390 = vadd.f32 0.0, %v1389
      %1391 = vmatmul.f32.gmra.mxu0 %v616
      %v1392 = vpop.f32.mrf.mxu0
      %v1393 = vadd.f32 0.0, %v1392
      %1394 = vdwg.mxu0
      %v1395 = vadd.f32 %v1355, %v1390
      %v1396 = vadd.f32 %v1356, %v1393
      %v1397 = vtanh.pop %v1395
      %v1398 = vtanh.pop %v1396
      %1399 = vmatpush.msra.mxu0 0.0
      %1400 = vmatpush.msra.mxu0 0.0
      %1401 = vmatpush.msra.mxu0 0.0
      %1402 = vmatpush.msra.mxu0 0.0
      %1403 = vmatpush.msra.mxu0 0.0
      %1404 = vmatpush.msra.mxu0 0.0
      %1405 = vmatpush.msra.mxu0 0.0
      %1406 = vmatpush.msra.mxu0 0.0
      %1407 = vmatpush.msra.mxu0 0.0
      %1408 = vmatpush.msra.mxu0 0.0
      %1409 = vmatpush.msra.mxu0 0.0
      %1410 = vmatpush.msra.mxu0 0.0
      %1411 = vmatpush.msra.mxu0 0.0
      %1412 = vmatpush.msra.mxu0 0.0
      %1413 = vmatpush.msra.mxu0 %v1398
      %1414 = vmatpush.msra.mxu0 %v1397
      %1415 = vmatmul.f32.gmra.mxu0 %v613
      %v1416 = vpop.f32.mrf.mxu0
      %v1417 = vadd.f32 0.0, %v1416
      %1418 = vmatmul.f32.gmra.mxu0 %v616
      %v1419 = vpop.f32.mrf.mxu0
      %v1420 = vadd.f32 0.0, %v1419
      %1421 = vdwg.mxu0
      %v1422 = vadd.f32 %v1360, %v1417
      %v1423 = vadd.f32 %v1361, %v1420
      %v1424 = vtanh.pop %v1422
      %v1425 = vtanh.pop %v1423
      %1426 = vmatpush.msra.mxu0 0.0
      %1427 = vmatpush.msra.mxu0 0.0
      %1428 = vmatpush.msra.mxu0 0.0
      %1429 = vmatpush.msra.mxu0 0.0
      %1430 = vmatpush.msra.mxu0 0.0
      %1431 = vmatpush.msra.mxu0 0.0
      %1432 = vmatpush.msra.mxu0 0.0
      %1433 = vmatpush.msra.mxu0 0.0
      %1434 = vmatpush.msra.mxu0 0.0
      %1435 = vmatpush.msra.mxu0 0.0
      %1436 = vmatpush.msra.mxu0 0.0
      %1437 = vmatpush.msra.mxu0 0.0
      %1438 = vmatpush.msra.mxu0 0.0
      %1439 = vmatpush.msra.mxu0 0.0
      %1440 = vmatpush.msra.mxu0 %v1425
      %1441 = vmatpush.msra.mxu0 %v1424
      %1442 = vmatmul.f32.gmra.mxu0 %v613
      %v1443 = vpop.f32.mrf.mxu0
      %v1444 = vadd.f32 0.0, %v1443
      %1445 = vmatmul.f32.gmra.mxu0 %v616
      %v1446 = vpop.f32.mrf.mxu0
      %v1447 = vadd.f32 0.0, %v1446
      %1448 = vdwg.mxu0
      %v1449 = vadd.f32 %v1365, %v1444
      %v1450 = vadd.f32 %v1366, %v1447
      %v1451 = vtanh.pop %v1449
      %v1452 = vtanh.pop %v1450
      %1453 = vmatpush.msra.mxu0 0.0
      %1454 = vmatpush.msra.mxu0 0.0
      %1455 = vmatpush.msra.mxu0 0.0
      %1456 = vmatpush.msra.mxu0 0.0
      %1457 = vmatpush.msra.mxu0 0.0
      %1458 = vmatpush.msra.mxu0 0.0
      %1459 = vmatpush.msra.mxu0 0.0
      %1460 = vmatpush.msra.mxu0 0.0
      %1461 = vmatpush.msra.mxu0 0.0
      %1462 = vmatpush.msra.mxu0 0.0
      %1463 = vmatpush.msra.mxu0 0.0
      %1464 = vmatpush.msra.mxu0 0.0
      %1465 = vmatpush.msra.mxu0 0.0
      %1466 = vmatpush.msra.mxu0 0.0
      %1467 = vmatpush.msra.mxu0 %v1452
      %1468 = vmatpush.msra.mxu0 %v1451
      %1469 = vmatmul.f32.gmra.mxu0 %v613
      %v1470 = vpop.f32.mrf.mxu0
      %v1471 = vadd.f32 0.0, %v1470
      %1472 = vmatmul.f32.gmra.mxu0 %v616
      %v1473 = vpop.f32.mrf.mxu0
      %v1474 = vadd.f32 0.0, %v1473
      %1475 = vdwg.mxu0
      %v1476 = vadd.f32 %v1370, %v1471
      %v1477 = vadd.f32 %v1371, %v1474
      %v1478 = vtanh.pop %v1476
      %v1479 = vtanh.pop %v1477
      %v1480 = vmul.f32 %v729, %v1478
      %v1481 = vmul.f32 %v734, %v1479
      %v1482 = vadd.f32 %v1480, %v1481
      %v1483 = vrot.slane %v1482, 4
      %v1484 = vadd.f32 %v1482, %v1483
      %v1485 = vrot.slane %v1484, 2
      %v1486 = vadd.f32 %v1484, %v1485
      %v1487 = vrot.slane %v1486, 1
      %v1488 = vadd.f32 %v1486, %v1487
      %v1489 = vadd.f32 %v1488, %v745
      %v1490 = vmul.f32 %v747, %v1310
      %v1491 = vadd.f32 %v1489, %v1490
      %v1492 = vadd.f32 %v1491, %v1312
      %v1493 = vmul.f32 %v751, %v1492
      %v1494 = vadd.f32 %v1297, %v1493
      %s1495 = sadd.s32 %s1304, 1
      %v1497 = vrot.slane %v1322, 1
      %v1499 = vrot.slane %v1306, 6
      %v1501 = vsel %vm557, %v1497, %v1499
      %v1503 = vrot.slane %v1329, 1
      %v1505 = vrot.slane %v1315, 6
      %v1507 = vsel %vm557, %v1503, %v1505
      %v1509 = vrot.slane %v1336, 1
      %v1512 = vrot.slane %v1494, 5
      %v1514 = vsel %vm557, %v1509, %v1512
      %s1515 = scvt.s32.f32 %s1495
      %s1516 = smul.f32 %s1515, 0.0625
      %p1517 = scmp.lt.s32.totalorder %s1495, 16
      %v1518 = vstv %s1516
      %v1519 = vmul.f32 %v1501, %v1518
      %s1520 = ssub.f32 1.0, %s1516
      %v1521 = vstv %s1520
      %v1522 = vmul.f32 %v1514, %v1521
      %v1523 = vadd.f32 %v1519, %v1522
      %s1524 = scalar_select %p1517, 1, 0
      %v1525 = vstv %s1524
      %vm1526 = vcmp.eq.s32.totalorder %v1525, 1
      %v1527 = vsel %vm1526, %v1523, %v1514
      %v1528 = vmul.f32 %v542, %v1527
      %v1529 = vsub.f32 %v1507, %v1528
      %v1530 = vperm.slane %v1529, 0
      %v1531 = vmul.f32 %v574, %v1530
      %v1532 = vmul.f32 %v579, %v1530
      %v1533 = vadd.f32 %v1531, %v587
      %v1534 = vadd.f32 %v1532, %v592
      %v1535 = vperm.slane %v1529, 1
      %v1536 = vmul.f32 %v574, %v1535
      %v1537 = vmul.f32 %v579, %v1535
      %v1538 = vadd.f32 %v1536, %v587
      %v1539 = vadd.f32 %v1537, %v592
      %v1540 = vperm.slane %v1529, 2
      %v1541 = vmul.f32 %v574, %v1540
      %v1542 = vmul.f32 %v579, %v1540
      %v1543 = vadd.f32 %v1541, %v587
      %v1544 = vadd.f32 %v1542, %v592
      %v1545 = vperm.slane %v1529, 3
      %v1546 = vmul.f32 %v574, %v1545
      %v1547 = vmul.f32 %v579, %v1545
      %v1548 = vadd.f32 %v1546, %v587
      %v1549 = vadd.f32 %v1547, %v592
      %1550 = vmatpush.msra.mxu0 0.0
      %1551 = vmatpush.msra.mxu0 0.0
      %1552 = vmatpush.msra.mxu0 0.0
      %1553 = vmatpush.msra.mxu0 0.0
      %1554 = vmatpush.msra.mxu0 0.0
      %1555 = vmatpush.msra.mxu0 0.0
      %1556 = vmatpush.msra.mxu0 0.0
      %1557 = vmatpush.msra.mxu0 0.0
      %1558 = vmatpush.msra.mxu0 0.0
      %1559 = vmatpush.msra.mxu0 0.0
      %1560 = vmatpush.msra.mxu0 0.0
      %1561 = vmatpush.msra.mxu0 0.0
      %1562 = vmatpush.msra.mxu0 0.0
      %1563 = vmatpush.msra.mxu0 0.0
      %1564 = vmatpush.msra.mxu0 %v1479
      %1565 = vmatpush.msra.mxu0 %v1478
      %1566 = vmatmul.f32.gmra.mxu0 %v613
      %v1567 = vpop.f32.mrf.mxu0
      %v1568 = vadd.f32 0.0, %v1567
      %1569 = vmatmul.f32.gmra.mxu0 %v616
      %v1570 = vpop.f32.mrf.mxu0
      %v1571 = vadd.f32 0.0, %v1570
      %1572 = vdwg.mxu0
      %v1573 = vadd.f32 %v1533, %v1568
      %v1574 = vadd.f32 %v1534, %v1571
      %v1575 = vtanh.pop %v1573
      %v1576 = vtanh.pop %v1574
      %1577 = vmatpush.msra.mxu0 0.0
      %1578 = vmatpush.msra.mxu0 0.0
      %1579 = vmatpush.msra.mxu0 0.0
      %1580 = vmatpush.msra.mxu0 0.0
      %1581 = vmatpush.msra.mxu0 0.0
      %1582 = vmatpush.msra.mxu0 0.0
      %1583 = vmatpush.msra.mxu0 0.0
      %1584 = vmatpush.msra.mxu0 0.0
      %1585 = vmatpush.msra.mxu0 0.0
      %1586 = vmatpush.msra.mxu0 0.0
      %1587 = vmatpush.msra.mxu0 0.0
      %1588 = vmatpush.msra.mxu0 0.0
      %1589 = vmatpush.msra.mxu0 0.0
      %1590 = vmatpush.msra.mxu0 0.0
      %1591 = vmatpush.msra.mxu0 %v1576
      %1592 = vmatpush.msra.mxu0 %v1575
      %1593 = vmatmul.f32.gmra.mxu0 %v613
      %v1594 = vpop.f32.mrf.mxu0
      %v1595 = vadd.f32 0.0, %v1594
      %1596 = vmatmul.f32.gmra.mxu0 %v616
      %v1597 = vpop.f32.mrf.mxu0
      %v1598 = vadd.f32 0.0, %v1597
      %1599 = vdwg.mxu0
      %v1600 = vadd.f32 %v1538, %v1595
      %v1601 = vadd.f32 %v1539, %v1598
      %v1602 = vtanh.pop %v1600
      %v1603 = vtanh.pop %v1601
      %1604 = vmatpush.msra.mxu0 0.0
      %1605 = vmatpush.msra.mxu0 0.0
      %1606 = vmatpush.msra.mxu0 0.0
      %1607 = vmatpush.msra.mxu0 0.0
      %1608 = vmatpush.msra.mxu0 0.0
      %1609 = vmatpush.msra.mxu0 0.0
      %1610 = vmatpush.msra.mxu0 0.0
      %1611 = vmatpush.msra.mxu0 0.0
      %1612 = vmatpush.msra.mxu0 0.0
      %1613 = vmatpush.msra.mxu0 0.0
      %1614 = vmatpush.msra.mxu0 0.0
      %1615 = vmatpush.msra.mxu0 0.0
      %1616 = vmatpush.msra.mxu0 0.0
      %1617 = vmatpush.msra.mxu0 0.0
      %1618 = vmatpush.msra.mxu0 %v1603
      %1619 = vmatpush.msra.mxu0 %v1602
      %1620 = vmatmul.f32.gmra.mxu0 %v613
      %v1621 = vpop.f32.mrf.mxu0
      %v1622 = vadd.f32 0.0, %v1621
      %1623 = vmatmul.f32.gmra.mxu0 %v616
      %v1624 = vpop.f32.mrf.mxu0
      %v1625 = vadd.f32 0.0, %v1624
      %1626 = vdwg.mxu0
      %v1627 = vadd.f32 %v1543, %v1622
      %v1628 = vadd.f32 %v1544, %v1625
      %v1629 = vtanh.pop %v1627
      %v1630 = vtanh.pop %v1628
      %1631 = vmatpush.msra.mxu0 0.0
      %1632 = vmatpush.msra.mxu0 0.0
      %1633 = vmatpush.msra.mxu0 0.0
      %1634 = vmatpush.msra.mxu0 0.0
      %1635 = vmatpush.msra.mxu0 0.0
      %1636 = vmatpush.msra.mxu0 0.0
      %1637 = vmatpush.msra.mxu0 0.0
      %1638 = vmatpush.msra.mxu0 0.0
      %1639 = vmatpush.msra.mxu0 0.0
      %1640 = vmatpush.msra.mxu0 0.0
      %1641 = vmatpush.msra.mxu0 0.0
      %1642 = vmatpush.msra.mxu0 0.0
      %1643 = vmatpush.msra.mxu0 0.0
      %1644 = vmatpush.msra.mxu0 0.0
      %1645 = vmatpush.msra.mxu0 %v1630
      %1646 = vmatpush.msra.mxu0 %v1629
      %1647 = vmatmul.f32.gmra.mxu0 %v613
      %v1648 = vpop.f32.mrf.mxu0
      %v1649 = vadd.f32 0.0, %v1648
      %1650 = vmatmul.f32.gmra.mxu0 %v616
      %v1651 = vpop.f32.mrf.mxu0
      %v1652 = vadd.f32 0.0, %v1651
      %1653 = vdwg.mxu0
      %v1654 = vadd.f32 %v1548, %v1649
      %v1655 = vadd.f32 %v1549, %v1652
      %v1656 = vtanh.pop %v1654
      %v1657 = vtanh.pop %v1655
      %v1658 = vmul.f32 %v729, %v1656
      %v1659 = vmul.f32 %v734, %v1657
      %v1660 = vadd.f32 %v1658, %v1659
      %v1661 = vrot.slane %v1660, 4
      %v1662 = vadd.f32 %v1660, %v1661
      %v1663 = vrot.slane %v1662, 2
      %v1664 = vadd.f32 %v1662, %v1663
      %v1665 = vrot.slane %v1664, 1
      %v1666 = vadd.f32 %v1664, %v1665
      %v1667 = vadd.f32 %v1666, %v745
      %v1668 = vadd.f32 %v1667, %v1490
      %v1669 = vadd.f32 %v1668, %v1312
      %v1670 = vmul.f32 %v751, %v1669
      %v1672 = vrot.slane %v1670, 1
      %v1674 = vadd.f32 %v1494, %v1672
      %s1675 = sadd.s32 %s1304, 2
      %v1677 = vrot.slane %v1501, 1
      %v1679 = vrot.slane %v1306, 7
      %v1681 = vsel %vm557, %v1677, %v1679
      %v1683 = vrot.slane %v1507, 1
      %v1685 = vrot.slane %v1315, 7
      %v1687 = vsel %vm557, %v1683, %v1685
      %v1689 = vrot.slane %v1514, 1
      %v1692 = vrot.slane %v1674, 5
      %v1694 = vsel %vm557, %v1689, %v1692
      %s1695 = scvt.s32.f32 %s1675
      %s1696 = smul.f32 %s1695, 0.0625
      %p1697 = scmp.lt.s32.totalorder %s1675, 16
      %v1698 = vstv %s1696
      %v1699 = vmul.f32 %v1681, %v1698
      %s1700 = ssub.f32 1.0, %s1696
      %v1701 = vstv %s1700
      %v1702 = vmul.f32 %v1694, %v1701
      %v1703 = vadd.f32 %v1699, %v1702
      %s1704 = scalar_select %p1697, 1, 0
      %v1705 = vstv %s1704
      %vm1706 = vcmp.eq.s32.totalorder %v1705, 1
      %v1707 = vsel %vm1706, %v1703, %v1694
      %v1708 = vmul.f32 %v542, %v1707
      %v1709 = vsub.f32 %v1687, %v1708
      %v1710 = vperm.slane %v1709, 0
      %v1711 = vmul.f32 %v574, %v1710
      %v1712 = vmul.f32 %v579, %v1710
      %v1713 = vadd.f32 %v1711, %v587
      %v1714 = vadd.f32 %v1712, %v592
      %v1715 = vperm.slane %v1709, 1
      %v1716 = vmul.f32 %v574, %v1715
      %v1717 = vmul.f32 %v579, %v1715
      %v1718 = vadd.f32 %v1716, %v587
      %v1719 = vadd.f32 %v1717, %v592
      %v1720 = vperm.slane %v1709, 2
      %v1721 = vmul.f32 %v574, %v1720
      %v1722 = vmul.f32 %v579, %v1720
      %v1723 = vadd.f32 %v1721, %v587
      %v1724 = vadd.f32 %v1722, %v592
      %v1725 = vperm.slane %v1709, 3
      %v1726 = vmul.f32 %v574, %v1725
      %v1727 = vmul.f32 %v579, %v1725
      %v1728 = vadd.f32 %v1726, %v587
      %v1729 = vadd.f32 %v1727, %v592
      %1730 = vmatpush.msra.mxu0 0.0
      %1731 = vmatpush.msra.mxu0 0.0
      %1732 = vmatpush.msra.mxu0 0.0
      %1733 = vmatpush.msra.mxu0 0.0
      %1734 = vmatpush.msra.mxu0 0.0
      %1735 = vmatpush.msra.mxu0 0.0
      %1736 = vmatpush.msra.mxu0 0.0
      %1737 = vmatpush.msra.mxu0 0.0
      %1738 = vmatpush.msra.mxu0 0.0
      %1739 = vmatpush.msra.mxu0 0.0
      %1740 = vmatpush.msra.mxu0 0.0
      %1741 = vmatpush.msra.mxu0 0.0
      %1742 = vmatpush.msra.mxu0 0.0
      %1743 = vmatpush.msra.mxu0 0.0
      %1744 = vmatpush.msra.mxu0 %v1657
      %1745 = vmatpush.msra.mxu0 %v1656
      %1746 = vmatmul.f32.gmra.mxu0 %v613
      %v1747 = vpop.f32.mrf.mxu0
      %v1748 = vadd.f32 0.0, %v1747
      %1749 = vmatmul.f32.gmra.mxu0 %v616
      %v1750 = vpop.f32.mrf.mxu0
      %v1751 = vadd.f32 0.0, %v1750
      %1752 = vdwg.mxu0
      %v1753 = vadd.f32 %v1713, %v1748
      %v1754 = vadd.f32 %v1714, %v1751
      %v1755 = vtanh.pop %v1753
      %v1756 = vtanh.pop %v1754
      %1757 = vmatpush.msra.mxu0 0.0
      %1758 = vmatpush.msra.mxu0 0.0
      %1759 = vmatpush.msra.mxu0 0.0
      %1760 = vmatpush.msra.mxu0 0.0
      %1761 = vmatpush.msra.mxu0 0.0
      %1762 = vmatpush.msra.mxu0 0.0
      %1763 = vmatpush.msra.mxu0 0.0
      %1764 = vmatpush.msra.mxu0 0.0
      %1765 = vmatpush.msra.mxu0 0.0
      %1766 = vmatpush.msra.mxu0 0.0
      %1767 = vmatpush.msra.mxu0 0.0
      %1768 = vmatpush.msra.mxu0 0.0
      %1769 = vmatpush.msra.mxu0 0.0
      %1770 = vmatpush.msra.mxu0 0.0
      %1771 = vmatpush.msra.mxu0 %v1756
      %1772 = vmatpush.msra.mxu0 %v1755
      %1773 = vmatmul.f32.gmra.mxu0 %v613
      %v1774 = vpop.f32.mrf.mxu0
      %v1775 = vadd.f32 0.0, %v1774
      %1776 = vmatmul.f32.gmra.mxu0 %v616
      %v1777 = vpop.f32.mrf.mxu0
      %v1778 = vadd.f32 0.0, %v1777
      %1779 = vdwg.mxu0
      %v1780 = vadd.f32 %v1718, %v1775
      %v1781 = vadd.f32 %v1719, %v1778
      %v1782 = vtanh.pop %v1780
      %v1783 = vtanh.pop %v1781
      %1784 = vmatpush.msra.mxu0 0.0
      %1785 = vmatpush.msra.mxu0 0.0
      %1786 = vmatpush.msra.mxu0 0.0
      %1787 = vmatpush.msra.mxu0 0.0
      %1788 = vmatpush.msra.mxu0 0.0
      %1789 = vmatpush.msra.mxu0 0.0
      %1790 = vmatpush.msra.mxu0 0.0
      %1791 = vmatpush.msra.mxu0 0.0
      %1792 = vmatpush.msra.mxu0 0.0
      %1793 = vmatpush.msra.mxu0 0.0
      %1794 = vmatpush.msra.mxu0 0.0
      %1795 = vmatpush.msra.mxu0 0.0
      %1796 = vmatpush.msra.mxu0 0.0
      %1797 = vmatpush.msra.mxu0 0.0
      %1798 = vmatpush.msra.mxu0 %v1783
      %1799 = vmatpush.msra.mxu0 %v1782
      %1800 = vmatmul.f32.gmra.mxu0 %v613
      %v1801 = vpop.f32.mrf.mxu0
      %v1802 = vadd.f32 0.0, %v1801
      %1803 = vmatmul.f32.gmra.mxu0 %v616
      %v1804 = vpop.f32.mrf.mxu0
      %v1805 = vadd.f32 0.0, %v1804
      %1806 = vdwg.mxu0
      %v1807 = vadd.f32 %v1723, %v1802
      %v1808 = vadd.f32 %v1724, %v1805
      %v1809 = vtanh.pop %v1807
      %v1810 = vtanh.pop %v1808
      %1811 = vmatpush.msra.mxu0 0.0
      %1812 = vmatpush.msra.mxu0 0.0
      %1813 = vmatpush.msra.mxu0 0.0
      %1814 = vmatpush.msra.mxu0 0.0
      %1815 = vmatpush.msra.mxu0 0.0
      %1816 = vmatpush.msra.mxu0 0.0
      %1817 = vmatpush.msra.mxu0 0.0
      %1818 = vmatpush.msra.mxu0 0.0
      %1819 = vmatpush.msra.mxu0 0.0
      %1820 = vmatpush.msra.mxu0 0.0
      %1821 = vmatpush.msra.mxu0 0.0
      %1822 = vmatpush.msra.mxu0 0.0
      %1823 = vmatpush.msra.mxu0 0.0
      %1824 = vmatpush.msra.mxu0 0.0
      %1825 = vmatpush.msra.mxu0 %v1810
      %1826 = vmatpush.msra.mxu0 %v1809
      %1827 = vmatmul.f32.gmra.mxu0 %v613
      %v1828 = vpop.f32.mrf.mxu0
      %v1829 = vadd.f32 0.0, %v1828
      %1830 = vmatmul.f32.gmra.mxu0 %v616
      %v1831 = vpop.f32.mrf.mxu0
      %v1832 = vadd.f32 0.0, %v1831
      %1833 = vdwg.mxu0
      %v1834 = vadd.f32 %v1728, %v1829
      %v1835 = vadd.f32 %v1729, %v1832
      %v1836 = vtanh.pop %v1834
      %v1837 = vtanh.pop %v1835
      %v1838 = vmul.f32 %v729, %v1836
      %v1839 = vmul.f32 %v734, %v1837
      %v1840 = vadd.f32 %v1838, %v1839
      %v1841 = vrot.slane %v1840, 4
      %v1842 = vadd.f32 %v1840, %v1841
      %v1843 = vrot.slane %v1842, 2
      %v1844 = vadd.f32 %v1842, %v1843
      %v1845 = vrot.slane %v1844, 1
      %v1846 = vadd.f32 %v1844, %v1845
      %v1847 = vadd.f32 %v1846, %v745
      %v1848 = vadd.f32 %v1847, %v1490
      %v1849 = vadd.f32 %v1848, %v1312
      %v1850 = vmul.f32 %v751, %v1849
      %v1852 = vrot.slane %v1850, 2
      %v1854 = vadd.f32 %v1674, %v1852
      %s1855 = sadd.s32 %s1304, 3
      %v1857 = vrot.slane %v1681, 1
      %v1859 = vsel %vm557, %v1857, %v1306
      %v1861 = vrot.slane %v1687, 1
      %v1863 = vsel %vm557, %v1861, %v1315
      %v1865 = vrot.slane %v1694, 1
      %v1868 = vrot.slane %v1854, 5
      %v1870 = vsel %vm557, %v1865, %v1868
      %s1871 = scvt.s32.f32 %s1855
      %s1872 = smul.f32 %s1871, 0.0625
      %p1873 = scmp.lt.s32.totalorder %s1855, 16
      %v1874 = vstv %s1872
      %v1875 = vmul.f32 %v1859, %v1874
      %s1876 = ssub.f32 1.0, %s1872
      %v1877 = vstv %s1876
      %v1878 = vmul.f32 %v1870, %v1877
      %v1879 = vadd.f32 %v1875, %v1878
      %s1880 = scalar_select %p1873, 1, 0
      %v1881 = vstv %s1880
      %vm1882 = vcmp.eq.s32.totalorder %v1881, 1
      %v1883 = vsel %vm1882, %v1879, %v1870
      %v1884 = vmul.f32 %v542, %v1883
      %v1885 = vsub.f32 %v1863, %v1884
      %v1886 = vperm.slane %v1885, 0
      %v1887 = vmul.f32 %v574, %v1886
      %v1888 = vmul.f32 %v579, %v1886
      %v1889 = vadd.f32 %v1887, %v587
      %v1890 = vadd.f32 %v1888, %v592
      %v1891 = vperm.slane %v1885, 1
      %v1892 = vmul.f32 %v574, %v1891
      %v1893 = vmul.f32 %v579, %v1891
      %v1894 = vadd.f32 %v1892, %v587
      %v1895 = vadd.f32 %v1893, %v592
      %v1896 = vperm.slane %v1885, 2
      %v1897 = vmul.f32 %v574, %v1896
      %v1898 = vmul.f32 %v579, %v1896
      %v1899 = vadd.f32 %v1897, %v587
      %v1900 = vadd.f32 %v1898, %v592
      %v1901 = vperm.slane %v1885, 3
      %v1902 = vmul.f32 %v574, %v1901
      %v1903 = vmul.f32 %v579, %v1901
      %v1904 = vadd.f32 %v1902, %v587
      %v1905 = vadd.f32 %v1903, %v592
      %1906 = vmatpush.msra.mxu0 0.0
      %1907 = vmatpush.msra.mxu0 0.0
      %1908 = vmatpush.msra.mxu0 0.0
      %1909 = vmatpush.msra.mxu0 0.0
      %1910 = vmatpush.msra.mxu0 0.0
      %1911 = vmatpush.msra.mxu0 0.0
      %1912 = vmatpush.msra.mxu0 0.0
      %1913 = vmatpush.msra.mxu0 0.0
      %1914 = vmatpush.msra.mxu0 0.0
      %1915 = vmatpush.msra.mxu0 0.0
      %1916 = vmatpush.msra.mxu0 0.0
      %1917 = vmatpush.msra.mxu0 0.0
      %1918 = vmatpush.msra.mxu0 0.0
      %1919 = vmatpush.msra.mxu0 0.0
      %1920 = vmatpush.msra.mxu0 %v1837
      %1921 = vmatpush.msra.mxu0 %v1836
      %1922 = vmatmul.f32.gmra.mxu0 %v613
      %v1923 = vpop.f32.mrf.mxu0
      %v1924 = vadd.f32 0.0, %v1923
      %1925 = vmatmul.f32.gmra.mxu0 %v616
      %v1926 = vpop.f32.mrf.mxu0
      %v1927 = vadd.f32 0.0, %v1926
      %1928 = vdwg.mxu0
      %v1929 = vadd.f32 %v1889, %v1924
      %v1930 = vadd.f32 %v1890, %v1927
      %v1931 = vtanh.pop %v1929
      %v1932 = vtanh.pop %v1930
      %1933 = vmatpush.msra.mxu0 0.0
      %1934 = vmatpush.msra.mxu0 0.0
      %1935 = vmatpush.msra.mxu0 0.0
      %1936 = vmatpush.msra.mxu0 0.0
      %1937 = vmatpush.msra.mxu0 0.0
      %1938 = vmatpush.msra.mxu0 0.0
      %1939 = vmatpush.msra.mxu0 0.0
      %1940 = vmatpush.msra.mxu0 0.0
      %1941 = vmatpush.msra.mxu0 0.0
      %1942 = vmatpush.msra.mxu0 0.0
      %1943 = vmatpush.msra.mxu0 0.0
      %1944 = vmatpush.msra.mxu0 0.0
      %1945 = vmatpush.msra.mxu0 0.0
      %1946 = vmatpush.msra.mxu0 0.0
      %1947 = vmatpush.msra.mxu0 %v1932
      %1948 = vmatpush.msra.mxu0 %v1931
      %1949 = vmatmul.f32.gmra.mxu0 %v613
      %v1950 = vpop.f32.mrf.mxu0
      %v1951 = vadd.f32 0.0, %v1950
      %1952 = vmatmul.f32.gmra.mxu0 %v616
      %v1953 = vpop.f32.mrf.mxu0
      %v1954 = vadd.f32 0.0, %v1953
      %1955 = vdwg.mxu0
      %v1956 = vadd.f32 %v1894, %v1951
      %v1957 = vadd.f32 %v1895, %v1954
      %v1958 = vtanh.pop %v1956
      %v1959 = vtanh.pop %v1957
      %1960 = vmatpush.msra.mxu0 0.0
      %1961 = vmatpush.msra.mxu0 0.0
      %1962 = vmatpush.msra.mxu0 0.0
      %1963 = vmatpush.msra.mxu0 0.0
      %1964 = vmatpush.msra.mxu0 0.0
      %1965 = vmatpush.msra.mxu0 0.0
      %1966 = vmatpush.msra.mxu0 0.0
      %1967 = vmatpush.msra.mxu0 0.0
      %1968 = vmatpush.msra.mxu0 0.0
      %1969 = vmatpush.msra.mxu0 0.0
      %1970 = vmatpush.msra.mxu0 0.0
      %1971 = vmatpush.msra.mxu0 0.0
      %1972 = vmatpush.msra.mxu0 0.0
      %1973 = vmatpush.msra.mxu0 0.0
      %1974 = vmatpush.msra.mxu0 %v1959
      %1975 = vmatpush.msra.mxu0 %v1958
      %1976 = vmatmul.f32.gmra.mxu0 %v613
      %v1977 = vpop.f32.mrf.mxu0
      %v1978 = vadd.f32 0.0, %v1977
      %1979 = vmatmul.f32.gmra.mxu0 %v616
      %v1980 = vpop.f32.mrf.mxu0
      %v1981 = vadd.f32 0.0, %v1980
      %1982 = vdwg.mxu0
      %v1983 = vadd.f32 %v1899, %v1978
      %v1984 = vadd.f32 %v1900, %v1981
      %v1985 = vtanh.pop %v1983
      %v1986 = vtanh.pop %v1984
      %1987 = vmatpush.msra.mxu0 0.0
      %1988 = vmatpush.msra.mxu0 0.0
      %1989 = vmatpush.msra.mxu0 0.0
      %1990 = vmatpush.msra.mxu0 0.0
      %1991 = vmatpush.msra.mxu0 0.0
      %1992 = vmatpush.msra.mxu0 0.0
      %1993 = vmatpush.msra.mxu0 0.0
      %1994 = vmatpush.msra.mxu0 0.0
      %1995 = vmatpush.msra.mxu0 0.0
      %1996 = vmatpush.msra.mxu0 0.0
      %1997 = vmatpush.msra.mxu0 0.0
      %1998 = vmatpush.msra.mxu0 0.0
      %1999 = vmatpush.msra.mxu0 0.0
      %2000 = vmatpush.msra.mxu0 0.0
      %2001 = vmatpush.msra.mxu0 %v1986
      %2002 = vmatpush.msra.mxu0 %v1985
      %2003 = vmatmul.f32.gmra.mxu0 %v613
      %v2004 = vpop.f32.mrf.mxu0
      %v2005 = vadd.f32 0.0, %v2004
      %2006 = vmatmul.f32.gmra.mxu0 %v616
      %v2007 = vpop.f32.mrf.mxu0
      %v2008 = vadd.f32 0.0, %v2007
      %2009 = vdwg.mxu0
      %v2010 = vadd.f32 %v1904, %v2005
      %v2011 = vadd.f32 %v1905, %v2008
      %v2012 = vtanh.pop %v2010
      %v2013 = vtanh.pop %v2011
      %v2014 = vmul.f32 %v729, %v2012
      %v2015 = vmul.f32 %v734, %v2013
      %v2016 = vadd.f32 %v2014, %v2015
      %v2017 = vrot.slane %v2016, 4
      %v2018 = vadd.f32 %v2016, %v2017
      %v2019 = vrot.slane %v2018, 2
      %v2020 = vadd.f32 %v2018, %v2019
      %v2021 = vrot.slane %v2020, 1
      %v2022 = vadd.f32 %v2020, %v2021
      %v2023 = vadd.f32 %v2022, %v745
      %v2024 = vadd.f32 %v2023, %v1490
      %v2025 = vadd.f32 %v2024, %v1312
      %v2026 = vmul.f32 %v751, %v2025
      %v2028 = vrot.slane %v2026, 3
      %v2030 = vadd.f32 %v1854, %v2028
      %s2031 = sadd.s32 %s1304, 4
      %v2033 = vrot.slane %v1859, 1
      %v2035 = vrot.slane %v1306, 1
      %v2037 = vsel %vm557, %v2033, %v2035
      %v2039 = vrot.slane %v1863, 1
      %v2041 = vrot.slane %v1315, 1
      %v2043 = vsel %vm557, %v2039, %v2041
      %v2045 = vrot.slane %v1870, 1
      %v2048 = vrot.slane %v2030, 5
      %v2050 = vsel %vm557, %v2045, %v2048
      %s2051 = scvt.s32.f32 %s2031
      %s2052 = smul.f32 %s2051, 0.0625
      %p2053 = scmp.lt.s32.totalorder %s2031, 16
      %v2054 = vstv %s2052
      %v2055 = vmul.f32 %v2037, %v2054
      %s2056 = ssub.f32 1.0, %s2052
      %v2057 = vstv %s2056
      %v2058 = vmul.f32 %v2050, %v2057
      %v2059 = vadd.f32 %v2055, %v2058
      %s2060 = scalar_select %p2053, 1, 0
      %v2061 = vstv %s2060
      %vm2062 = vcmp.eq.s32.totalorder %v2061, 1
      %v2063 = vsel %vm2062, %v2059, %v2050
      %v2064 = vmul.f32 %v542, %v2063
      %v2065 = vsub.f32 %v2043, %v2064
      %v2066 = vperm.slane %v2065, 0
      %v2067 = vmul.f32 %v574, %v2066
      %v2068 = vmul.f32 %v579, %v2066
      %v2069 = vadd.f32 %v2067, %v587
      %v2070 = vadd.f32 %v2068, %v592
      %v2071 = vperm.slane %v2065, 1
      %v2072 = vmul.f32 %v574, %v2071
      %v2073 = vmul.f32 %v579, %v2071
      %v2074 = vadd.f32 %v2072, %v587
      %v2075 = vadd.f32 %v2073, %v592
      %v2076 = vperm.slane %v2065, 2
      %v2077 = vmul.f32 %v574, %v2076
      %v2078 = vmul.f32 %v579, %v2076
      %v2079 = vadd.f32 %v2077, %v587
      %v2080 = vadd.f32 %v2078, %v592
      %v2081 = vperm.slane %v2065, 3
      %v2082 = vmul.f32 %v574, %v2081
      %v2083 = vmul.f32 %v579, %v2081
      %v2084 = vadd.f32 %v2082, %v587
      %v2085 = vadd.f32 %v2083, %v592
      %2086 = vmatpush.msra.mxu0 0.0
      %2087 = vmatpush.msra.mxu0 0.0
      %2088 = vmatpush.msra.mxu0 0.0
      %2089 = vmatpush.msra.mxu0 0.0
      %2090 = vmatpush.msra.mxu0 0.0
      %2091 = vmatpush.msra.mxu0 0.0
      %2092 = vmatpush.msra.mxu0 0.0
      %2093 = vmatpush.msra.mxu0 0.0
      %2094 = vmatpush.msra.mxu0 0.0
      %2095 = vmatpush.msra.mxu0 0.0
      %2096 = vmatpush.msra.mxu0 0.0
      %2097 = vmatpush.msra.mxu0 0.0
      %2098 = vmatpush.msra.mxu0 0.0
      %2099 = vmatpush.msra.mxu0 0.0
      %2100 = vmatpush.msra.mxu0 %v2013
      %2101 = vmatpush.msra.mxu0 %v2012
      %2102 = vmatmul.f32.gmra.mxu0 %v613
      %v2103 = vpop.f32.mrf.mxu0
      %v2104 = vadd.f32 0.0, %v2103
      %2105 = vmatmul.f32.gmra.mxu0 %v616
      %v2106 = vpop.f32.mrf.mxu0
      %v2107 = vadd.f32 0.0, %v2106
      %2108 = vdwg.mxu0
      %v2109 = vadd.f32 %v2069, %v2104
      %v2110 = vadd.f32 %v2070, %v2107
      %v2111 = vtanh.pop %v2109
      %v2112 = vtanh.pop %v2110
      %2113 = vmatpush.msra.mxu0 0.0
      %2114 = vmatpush.msra.mxu0 0.0
      %2115 = vmatpush.msra.mxu0 0.0
      %2116 = vmatpush.msra.mxu0 0.0
      %2117 = vmatpush.msra.mxu0 0.0
      %2118 = vmatpush.msra.mxu0 0.0
      %2119 = vmatpush.msra.mxu0 0.0
      %2120 = vmatpush.msra.mxu0 0.0
      %2121 = vmatpush.msra.mxu0 0.0
      %2122 = vmatpush.msra.mxu0 0.0
      %2123 = vmatpush.msra.mxu0 0.0
      %2124 = vmatpush.msra.mxu0 0.0
      %2125 = vmatpush.msra.mxu0 0.0
      %2126 = vmatpush.msra.mxu0 0.0
      %2127 = vmatpush.msra.mxu0 %v2112
      %2128 = vmatpush.msra.mxu0 %v2111
      %2129 = vmatmul.f32.gmra.mxu0 %v613
      %v2130 = vpop.f32.mrf.mxu0
      %v2131 = vadd.f32 0.0, %v2130
      %2132 = vmatmul.f32.gmra.mxu0 %v616
      %v2133 = vpop.f32.mrf.mxu0
      %v2134 = vadd.f32 0.0, %v2133
      %2135 = vdwg.mxu0
      %v2136 = vadd.f32 %v2074, %v2131
      %v2137 = vadd.f32 %v2075, %v2134
      %v2138 = vtanh.pop %v2136
      %v2139 = vtanh.pop %v2137
      %2140 = vmatpush.msra.mxu0 0.0
      %2141 = vmatpush.msra.mxu0 0.0
      %2142 = vmatpush.msra.mxu0 0.0
      %2143 = vmatpush.msra.mxu0 0.0
      %2144 = vmatpush.msra.mxu0 0.0
      %2145 = vmatpush.msra.mxu0 0.0
      %2146 = vmatpush.msra.mxu0 0.0
      %2147 = vmatpush.msra.mxu0 0.0
      %2148 = vmatpush.msra.mxu0 0.0
      %2149 = vmatpush.msra.mxu0 0.0
      %2150 = vmatpush.msra.mxu0 0.0
      %2151 = vmatpush.msra.mxu0 0.0
      %2152 = vmatpush.msra.mxu0 0.0
      %2153 = vmatpush.msra.mxu0 0.0
      %2154 = vmatpush.msra.mxu0 %v2139
      %2155 = vmatpush.msra.mxu0 %v2138
      %2156 = vmatmul.f32.gmra.mxu0 %v613
      %v2157 = vpop.f32.mrf.mxu0
      %v2158 = vadd.f32 0.0, %v2157
      %2159 = vmatmul.f32.gmra.mxu0 %v616
      %v2160 = vpop.f32.mrf.mxu0
      %v2161 = vadd.f32 0.0, %v2160
      %2162 = vdwg.mxu0
      %v2163 = vadd.f32 %v2079, %v2158
      %v2164 = vadd.f32 %v2080, %v2161
      %v2165 = vtanh.pop %v2163
      %v2166 = vtanh.pop %v2164
      %2167 = vmatpush.msra.mxu0 0.0
      %2168 = vmatpush.msra.mxu0 0.0
      %2169 = vmatpush.msra.mxu0 0.0
      %2170 = vmatpush.msra.mxu0 0.0
      %2171 = vmatpush.msra.mxu0 0.0
      %2172 = vmatpush.msra.mxu0 0.0
      %2173 = vmatpush.msra.mxu0 0.0
      %2174 = vmatpush.msra.mxu0 0.0
      %2175 = vmatpush.msra.mxu0 0.0
      %2176 = vmatpush.msra.mxu0 0.0
      %2177 = vmatpush.msra.mxu0 0.0
      %2178 = vmatpush.msra.mxu0 0.0
      %2179 = vmatpush.msra.mxu0 0.0
      %2180 = vmatpush.msra.mxu0 0.0
      %2181 = vmatpush.msra.mxu0 %v2166
      %2182 = vmatpush.msra.mxu0 %v2165
      %2183 = vmatmul.f32.gmra.mxu0 %v613
      %v2184 = vpop.f32.mrf.mxu0
      %v2185 = vadd.f32 0.0, %v2184
      %2186 = vmatmul.f32.gmra.mxu0 %v616
      %v2187 = vpop.f32.mrf.mxu0
      %v2188 = vadd.f32 0.0, %v2187
      %2189 = vdwg.mxu0
      %v2190 = vadd.f32 %v2084, %v2185
      %v2191 = vadd.f32 %v2085, %v2188
      %v2192 = vtanh.pop %v2190
      %v2193 = vtanh.pop %v2191
      %v2194 = vmul.f32 %v729, %v2192
      %v2195 = vmul.f32 %v734, %v2193
      %v2196 = vadd.f32 %v2194, %v2195
      %v2197 = vrot.slane %v2196, 4
      %v2198 = vadd.f32 %v2196, %v2197
      %v2199 = vrot.slane %v2198, 2
      %v2200 = vadd.f32 %v2198, %v2199
      %v2201 = vrot.slane %v2200, 1
      %v2202 = vadd.f32 %v2200, %v2201
      %v2203 = vadd.f32 %v2202, %v745
      %v2204 = vadd.f32 %v2203, %v1490
      %v2205 = vadd.f32 %v2204, %v1312
      %v2206 = vmul.f32 %v751, %v2205
      %v2208 = vrot.slane %v2206, 4
      %v2210 = vadd.f32 %v2030, %v2208
      %s2211 = sadd.s32 %s1304, 5
      %v2213 = vrot.slane %v2037, 1
      %v2215 = vrot.slane %v1306, 2
      %v2217 = vsel %vm557, %v2213, %v2215
      %v2219 = vrot.slane %v2043, 1
      %v2221 = vrot.slane %v1315, 2
      %v2223 = vsel %vm557, %v2219, %v2221
      %v2225 = vrot.slane %v2050, 1
      %v2228 = vrot.slane %v2210, 5
      %v2230 = vsel %vm557, %v2225, %v2228
      %s2231 = scvt.s32.f32 %s2211
      %s2232 = smul.f32 %s2231, 0.0625
      %p2233 = scmp.lt.s32.totalorder %s2211, 16
      %v2234 = vstv %s2232
      %v2235 = vmul.f32 %v2217, %v2234
      %s2236 = ssub.f32 1.0, %s2232
      %v2237 = vstv %s2236
      %v2238 = vmul.f32 %v2230, %v2237
      %v2239 = vadd.f32 %v2235, %v2238
      %s2240 = scalar_select %p2233, 1, 0
      %v2241 = vstv %s2240
      %vm2242 = vcmp.eq.s32.totalorder %v2241, 1
      %v2243 = vsel %vm2242, %v2239, %v2230
      %v2244 = vmul.f32 %v542, %v2243
      %v2245 = vsub.f32 %v2223, %v2244
      %v2246 = vperm.slane %v2245, 0
      %v2247 = vmul.f32 %v574, %v2246
      %v2248 = vmul.f32 %v579, %v2246
      %v2249 = vadd.f32 %v2247, %v587
      %v2250 = vadd.f32 %v2248, %v592
      %v2251 = vperm.slane %v2245, 1
      %v2252 = vmul.f32 %v574, %v2251
      %v2253 = vmul.f32 %v579, %v2251
      %v2254 = vadd.f32 %v2252, %v587
      %v2255 = vadd.f32 %v2253, %v592
      %v2256 = vperm.slane %v2245, 2
      %v2257 = vmul.f32 %v574, %v2256
      %v2258 = vmul.f32 %v579, %v2256
      %v2259 = vadd.f32 %v2257, %v587
      %v2260 = vadd.f32 %v2258, %v592
      %v2261 = vperm.slane %v2245, 3
      %v2262 = vmul.f32 %v574, %v2261
      %v2263 = vmul.f32 %v579, %v2261
      %v2264 = vadd.f32 %v2262, %v587
      %v2265 = vadd.f32 %v2263, %v592
      %2266 = vmatpush.msra.mxu0 0.0
      %2267 = vmatpush.msra.mxu0 0.0
      %2268 = vmatpush.msra.mxu0 0.0
      %2269 = vmatpush.msra.mxu0 0.0
      %2270 = vmatpush.msra.mxu0 0.0
      %2271 = vmatpush.msra.mxu0 0.0
      %2272 = vmatpush.msra.mxu0 0.0
      %2273 = vmatpush.msra.mxu0 0.0
      %2274 = vmatpush.msra.mxu0 0.0
      %2275 = vmatpush.msra.mxu0 0.0
      %2276 = vmatpush.msra.mxu0 0.0
      %2277 = vmatpush.msra.mxu0 0.0
      %2278 = vmatpush.msra.mxu0 0.0
      %2279 = vmatpush.msra.mxu0 0.0
      %2280 = vmatpush.msra.mxu0 %v2193
      %2281 = vmatpush.msra.mxu0 %v2192
      %2282 = vmatmul.f32.gmra.mxu0 %v613
      %v2283 = vpop.f32.mrf.mxu0
      %v2284 = vadd.f32 0.0, %v2283
      %2285 = vmatmul.f32.gmra.mxu0 %v616
      %v2286 = vpop.f32.mrf.mxu0
      %v2287 = vadd.f32 0.0, %v2286
      %2288 = vdwg.mxu0
      %v2289 = vadd.f32 %v2249, %v2284
      %v2290 = vadd.f32 %v2250, %v2287
      %v2291 = vtanh.pop %v2289
      %v2292 = vtanh.pop %v2290
      %2293 = vmatpush.msra.mxu0 0.0
      %2294 = vmatpush.msra.mxu0 0.0
      %2295 = vmatpush.msra.mxu0 0.0
      %2296 = vmatpush.msra.mxu0 0.0
      %2297 = vmatpush.msra.mxu0 0.0
      %2298 = vmatpush.msra.mxu0 0.0
      %2299 = vmatpush.msra.mxu0 0.0
      %2300 = vmatpush.msra.mxu0 0.0
      %2301 = vmatpush.msra.mxu0 0.0
      %2302 = vmatpush.msra.mxu0 0.0
      %2303 = vmatpush.msra.mxu0 0.0
      %2304 = vmatpush.msra.mxu0 0.0
      %2305 = vmatpush.msra.mxu0 0.0
      %2306 = vmatpush.msra.mxu0 0.0
      %2307 = vmatpush.msra.mxu0 %v2292
      %2308 = vmatpush.msra.mxu0 %v2291
      %2309 = vmatmul.f32.gmra.mxu0 %v613
      %v2310 = vpop.f32.mrf.mxu0
      %v2311 = vadd.f32 0.0, %v2310
      %2312 = vmatmul.f32.gmra.mxu0 %v616
      %v2313 = vpop.f32.mrf.mxu0
      %v2314 = vadd.f32 0.0, %v2313
      %2315 = vdwg.mxu0
      %v2316 = vadd.f32 %v2254, %v2311
      %v2317 = vadd.f32 %v2255, %v2314
      %v2318 = vtanh.pop %v2316
      %v2319 = vtanh.pop %v2317
      %2320 = vmatpush.msra.mxu0 0.0
      %2321 = vmatpush.msra.mxu0 0.0
      %2322 = vmatpush.msra.mxu0 0.0
      %2323 = vmatpush.msra.mxu0 0.0
      %2324 = vmatpush.msra.mxu0 0.0
      %2325 = vmatpush.msra.mxu0 0.0
      %2326 = vmatpush.msra.mxu0 0.0
      %2327 = vmatpush.msra.mxu0 0.0
      %2328 = vmatpush.msra.mxu0 0.0
      %2329 = vmatpush.msra.mxu0 0.0
      %2330 = vmatpush.msra.mxu0 0.0
      %2331 = vmatpush.msra.mxu0 0.0
      %2332 = vmatpush.msra.mxu0 0.0
      %2333 = vmatpush.msra.mxu0 0.0
      %2334 = vmatpush.msra.mxu0 %v2319
      %2335 = vmatpush.msra.mxu0 %v2318
      %2336 = vmatmul.f32.gmra.mxu0 %v613
      %v2337 = vpop.f32.mrf.mxu0
      %v2338 = vadd.f32 0.0, %v2337
      %2339 = vmatmul.f32.gmra.mxu0 %v616
      %v2340 = vpop.f32.mrf.mxu0
      %v2341 = vadd.f32 0.0, %v2340
      %2342 = vdwg.mxu0
      %v2343 = vadd.f32 %v2259, %v2338
      %v2344 = vadd.f32 %v2260, %v2341
      %v2345 = vtanh.pop %v2343
      %v2346 = vtanh.pop %v2344
      %2347 = vmatpush.msra.mxu0 0.0
      %2348 = vmatpush.msra.mxu0 0.0
      %2349 = vmatpush.msra.mxu0 0.0
      %2350 = vmatpush.msra.mxu0 0.0
      %2351 = vmatpush.msra.mxu0 0.0
      %2352 = vmatpush.msra.mxu0 0.0
      %2353 = vmatpush.msra.mxu0 0.0
      %2354 = vmatpush.msra.mxu0 0.0
      %2355 = vmatpush.msra.mxu0 0.0
      %2356 = vmatpush.msra.mxu0 0.0
      %2357 = vmatpush.msra.mxu0 0.0
      %2358 = vmatpush.msra.mxu0 0.0
      %2359 = vmatpush.msra.mxu0 0.0
      %2360 = vmatpush.msra.mxu0 0.0
      %2361 = vmatpush.msra.mxu0 %v2346
      %2362 = vmatpush.msra.mxu0 %v2345
      %2363 = vmatmul.f32.gmra.mxu0 %v613
      %v2364 = vpop.f32.mrf.mxu0
      %v2365 = vadd.f32 0.0, %v2364
      %2366 = vmatmul.f32.gmra.mxu0 %v616
      %v2367 = vpop.f32.mrf.mxu0
      %v2368 = vadd.f32 0.0, %v2367
      %2369 = vdwg.mxu0
      %v2370 = vadd.f32 %v2264, %v2365
      %v2371 = vadd.f32 %v2265, %v2368
      %v2372 = vtanh.pop %v2370
      %v2373 = vtanh.pop %v2371
      %v2374 = vmul.f32 %v729, %v2372
      %v2375 = vmul.f32 %v734, %v2373
      %v2376 = vadd.f32 %v2374, %v2375
      %v2377 = vrot.slane %v2376, 4
      %v2378 = vadd.f32 %v2376, %v2377
      %v2379 = vrot.slane %v2378, 2
      %v2380 = vadd.f32 %v2378, %v2379
      %v2381 = vrot.slane %v2380, 1
      %v2382 = vadd.f32 %v2380, %v2381
      %v2383 = vadd.f32 %v2382, %v745
      %v2384 = vadd.f32 %v2383, %v1490
      %v2385 = vadd.f32 %v2384, %v1312
      %v2386 = vmul.f32 %v751, %v2385
      %v2388 = vrot.slane %v2386, 5
      %v2390 = vadd.f32 %v2210, %v2388
      %s2391 = sadd.s32 %s1304, 6
      %v2393 = vrot.slane %v2217, 1
      %v2395 = vrot.slane %v1306, 3
      %v2397 = vsel %vm557, %v2393, %v2395
      %v2399 = vrot.slane %v2223, 1
      %v2401 = vrot.slane %v1315, 3
      %v2403 = vsel %vm557, %v2399, %v2401
      %v2405 = vrot.slane %v2230, 1
      %v2408 = vrot.slane %v2390, 5
      %v2410 = vsel %vm557, %v2405, %v2408
      %s2411 = scvt.s32.f32 %s2391
      %s2412 = smul.f32 %s2411, 0.0625
      %p2413 = scmp.lt.s32.totalorder %s2391, 16
      %v2414 = vstv %s2412
      %v2415 = vmul.f32 %v2397, %v2414
      %s2416 = ssub.f32 1.0, %s2412
      %v2417 = vstv %s2416
      %v2418 = vmul.f32 %v2410, %v2417
      %v2419 = vadd.f32 %v2415, %v2418
      %s2420 = scalar_select %p2413, 1, 0
      %v2421 = vstv %s2420
      %vm2422 = vcmp.eq.s32.totalorder %v2421, 1
      %v2423 = vsel %vm2422, %v2419, %v2410
      %v2424 = vmul.f32 %v542, %v2423
      %v2425 = vsub.f32 %v2403, %v2424
      %v2426 = vperm.slane %v2425, 0
      %v2427 = vmul.f32 %v574, %v2426
      %v2428 = vmul.f32 %v579, %v2426
      %v2429 = vadd.f32 %v2427, %v587
      %v2430 = vadd.f32 %v2428, %v592
      %v2431 = vperm.slane %v2425, 1
      %v2432 = vmul.f32 %v574, %v2431
      %v2433 = vmul.f32 %v579, %v2431
      %v2434 = vadd.f32 %v2432, %v587
      %v2435 = vadd.f32 %v2433, %v592
      %v2436 = vperm.slane %v2425, 2
      %v2437 = vmul.f32 %v574, %v2436
      %v2438 = vmul.f32 %v579, %v2436
      %v2439 = vadd.f32 %v2437, %v587
      %v2440 = vadd.f32 %v2438, %v592
      %v2441 = vperm.slane %v2425, 3
      %v2442 = vmul.f32 %v574, %v2441
      %v2443 = vmul.f32 %v579, %v2441
      %v2444 = vadd.f32 %v2442, %v587
      %v2445 = vadd.f32 %v2443, %v592
      %2446 = vmatpush.msra.mxu0 0.0
      %2447 = vmatpush.msra.mxu0 0.0
      %2448 = vmatpush.msra.mxu0 0.0
      %2449 = vmatpush.msra.mxu0 0.0
      %2450 = vmatpush.msra.mxu0 0.0
      %2451 = vmatpush.msra.mxu0 0.0
      %2452 = vmatpush.msra.mxu0 0.0
      %2453 = vmatpush.msra.mxu0 0.0
      %2454 = vmatpush.msra.mxu0 0.0
      %2455 = vmatpush.msra.mxu0 0.0
      %2456 = vmatpush.msra.mxu0 0.0
      %2457 = vmatpush.msra.mxu0 0.0
      %2458 = vmatpush.msra.mxu0 0.0
      %2459 = vmatpush.msra.mxu0 0.0
      %2460 = vmatpush.msra.mxu0 %v2373
      %2461 = vmatpush.msra.mxu0 %v2372
      %2462 = vmatmul.f32.gmra.mxu0 %v613
      %v2463 = vpop.f32.mrf.mxu0
      %v2464 = vadd.f32 0.0, %v2463
      %2465 = vmatmul.f32.gmra.mxu0 %v616
      %v2466 = vpop.f32.mrf.mxu0
      %v2467 = vadd.f32 0.0, %v2466
      %2468 = vdwg.mxu0
      %v2469 = vadd.f32 %v2429, %v2464
      %v2470 = vadd.f32 %v2430, %v2467
      %v2471 = vtanh.pop %v2469
      %v2472 = vtanh.pop %v2470
      %2473 = vmatpush.msra.mxu0 0.0
      %2474 = vmatpush.msra.mxu0 0.0
      %2475 = vmatpush.msra.mxu0 0.0
      %2476 = vmatpush.msra.mxu0 0.0
      %2477 = vmatpush.msra.mxu0 0.0
      %2478 = vmatpush.msra.mxu0 0.0
      %2479 = vmatpush.msra.mxu0 0.0
      %2480 = vmatpush.msra.mxu0 0.0
      %2481 = vmatpush.msra.mxu0 0.0
      %2482 = vmatpush.msra.mxu0 0.0
      %2483 = vmatpush.msra.mxu0 0.0
      %2484 = vmatpush.msra.mxu0 0.0
      %2485 = vmatpush.msra.mxu0 0.0
      %2486 = vmatpush.msra.mxu0 0.0
      %2487 = vmatpush.msra.mxu0 %v2472
      %2488 = vmatpush.msra.mxu0 %v2471
      %2489 = vmatmul.f32.gmra.mxu0 %v613
      %v2490 = vpop.f32.mrf.mxu0
      %v2491 = vadd.f32 0.0, %v2490
      %2492 = vmatmul.f32.gmra.mxu0 %v616
      %v2493 = vpop.f32.mrf.mxu0
      %v2494 = vadd.f32 0.0, %v2493
      %2495 = vdwg.mxu0
      %v2496 = vadd.f32 %v2434, %v2491
      %v2497 = vadd.f32 %v2435, %v2494
      %v2498 = vtanh.pop %v2496
      %v2499 = vtanh.pop %v2497
      %2500 = vmatpush.msra.mxu0 0.0
      %2501 = vmatpush.msra.mxu0 0.0
      %2502 = vmatpush.msra.mxu0 0.0
      %2503 = vmatpush.msra.mxu0 0.0
      %2504 = vmatpush.msra.mxu0 0.0
      %2505 = vmatpush.msra.mxu0 0.0
      %2506 = vmatpush.msra.mxu0 0.0
      %2507 = vmatpush.msra.mxu0 0.0
      %2508 = vmatpush.msra.mxu0 0.0
      %2509 = vmatpush.msra.mxu0 0.0
      %2510 = vmatpush.msra.mxu0 0.0
      %2511 = vmatpush.msra.mxu0 0.0
      %2512 = vmatpush.msra.mxu0 0.0
      %2513 = vmatpush.msra.mxu0 0.0
      %2514 = vmatpush.msra.mxu0 %v2499
      %2515 = vmatpush.msra.mxu0 %v2498
      %2516 = vmatmul.f32.gmra.mxu0 %v613
      %v2517 = vpop.f32.mrf.mxu0
      %v2518 = vadd.f32 0.0, %v2517
      %2519 = vmatmul.f32.gmra.mxu0 %v616
      %v2520 = vpop.f32.mrf.mxu0
      %v2521 = vadd.f32 0.0, %v2520
      %2522 = vdwg.mxu0
      %v2523 = vadd.f32 %v2439, %v2518
      %v2524 = vadd.f32 %v2440, %v2521
      %v2525 = vtanh.pop %v2523
      %v2526 = vtanh.pop %v2524
      %2527 = vmatpush.msra.mxu0 0.0
      %2528 = vmatpush.msra.mxu0 0.0
      %2529 = vmatpush.msra.mxu0 0.0
      %2530 = vmatpush.msra.mxu0 0.0
      %2531 = vmatpush.msra.mxu0 0.0
      %2532 = vmatpush.msra.mxu0 0.0
      %2533 = vmatpush.msra.mxu0 0.0
      %2534 = vmatpush.msra.mxu0 0.0
      %2535 = vmatpush.msra.mxu0 0.0
      %2536 = vmatpush.msra.mxu0 0.0
      %2537 = vmatpush.msra.mxu0 0.0
      %2538 = vmatpush.msra.mxu0 0.0
      %2539 = vmatpush.msra.mxu0 0.0
      %2540 = vmatpush.msra.mxu0 0.0
      %2541 = vmatpush.msra.mxu0 %v2526
      %2542 = vmatpush.msra.mxu0 %v2525
      %2543 = vmatmul.f32.gmra.mxu0 %v613
      %v2544 = vpop.f32.mrf.mxu0
      %v2545 = vadd.f32 0.0, %v2544
      %2546 = vmatmul.f32.gmra.mxu0 %v616
      %v2547 = vpop.f32.mrf.mxu0
      %v2548 = vadd.f32 0.0, %v2547
      %2549 = vdwg.mxu0
      %v2550 = vadd.f32 %v2444, %v2545
      %v2551 = vadd.f32 %v2445, %v2548
      %v2552 = vtanh.pop %v2550
      %v2553 = vtanh.pop %v2551
      %v2554 = vmul.f32 %v729, %v2552
      %v2555 = vmul.f32 %v734, %v2553
      %v2556 = vadd.f32 %v2554, %v2555
      %v2557 = vrot.slane %v2556, 4
      %v2558 = vadd.f32 %v2556, %v2557
      %v2559 = vrot.slane %v2558, 2
      %v2560 = vadd.f32 %v2558, %v2559
      %v2561 = vrot.slane %v2560, 1
      %v2562 = vadd.f32 %v2560, %v2561
      %v2563 = vadd.f32 %v2562, %v745
      %v2564 = vadd.f32 %v2563, %v1490
      %v2565 = vadd.f32 %v2564, %v1312
      %v2566 = vmul.f32 %v751, %v2565
      %v2568 = vrot.slane %v2566, 6
      %v2570 = vadd.f32 %v2390, %v2568
      %s2571 = sadd.s32 %s1304, 7
      %v2573 = vrot.slane %v2397, 1
      %v2575 = vrot.slane %v1306, 4
      %v2577 = vsel %vm557, %v2573, %v2575
      %v2579 = vrot.slane %v2403, 1
      %v2581 = vrot.slane %v1315, 4
      %v2583 = vsel %vm557, %v2579, %v2581
      %v2585 = vrot.slane %v2410, 1
      %v2588 = vrot.slane %v2570, 5
      %v2590 = vsel %vm557, %v2585, %v2588
      %s2591 = scvt.s32.f32 %s2571
      %s2592 = smul.f32 %s2591, 0.0625
      %p2593 = scmp.lt.s32.totalorder %s2571, 16
      %v2594 = vstv %s2592
      %v2595 = vmul.f32 %v2577, %v2594
      %s2596 = ssub.f32 1.0, %s2592
      %v2597 = vstv %s2596
      %v2598 = vmul.f32 %v2590, %v2597
      %v2599 = vadd.f32 %v2595, %v2598
      %s2600 = scalar_select %p2593, 1, 0
      %v2601 = vstv %s2600
      %vm2602 = vcmp.eq.s32.totalorder %v2601, 1
      %v2603 = vsel %vm2602, %v2599, %v2590
      %v2604 = vmul.f32 %v542, %v2603
      %v2605 = vsub.f32 %v2583, %v2604
      %v2606 = vperm.slane %v2605, 0
      %v2607 = vmul.f32 %v574, %v2606
      %v2608 = vmul.f32 %v579, %v2606
      %v2609 = vadd.f32 %v2607, %v587
      %v2610 = vadd.f32 %v2608, %v592
      %v2611 = vperm.slane %v2605, 1
      %v2612 = vmul.f32 %v574, %v2611
      %v2613 = vmul.f32 %v579, %v2611
      %v2614 = vadd.f32 %v2612, %v587
      %v2615 = vadd.f32 %v2613, %v592
      %v2616 = vperm.slane %v2605, 2
      %v2617 = vmul.f32 %v574, %v2616
      %v2618 = vmul.f32 %v579, %v2616
      %v2619 = vadd.f32 %v2617, %v587
      %v2620 = vadd.f32 %v2618, %v592
      %v2621 = vperm.slane %v2605, 3
      %v2622 = vmul.f32 %v574, %v2621
      %v2623 = vmul.f32 %v579, %v2621
      %v2624 = vadd.f32 %v2622, %v587
      %v2625 = vadd.f32 %v2623, %v592
      %2626 = vmatpush.msra.mxu0 0.0
      %2627 = vmatpush.msra.mxu0 0.0
      %2628 = vmatpush.msra.mxu0 0.0
      %2629 = vmatpush.msra.mxu0 0.0
      %2630 = vmatpush.msra.mxu0 0.0
      %2631 = vmatpush.msra.mxu0 0.0
      %2632 = vmatpush.msra.mxu0 0.0
      %2633 = vmatpush.msra.mxu0 0.0
      %2634 = vmatpush.msra.mxu0 0.0
      %2635 = vmatpush.msra.mxu0 0.0
      %2636 = vmatpush.msra.mxu0 0.0
      %2637 = vmatpush.msra.mxu0 0.0
      %2638 = vmatpush.msra.mxu0 0.0
      %2639 = vmatpush.msra.mxu0 0.0
      %2640 = vmatpush.msra.mxu0 %v2553
      %2641 = vmatpush.msra.mxu0 %v2552
      %2642 = vmatmul.f32.gmra.mxu0 %v613
      %v2643 = vpop.f32.mrf.mxu0
      %v2644 = vadd.f32 0.0, %v2643
      %2645 = vmatmul.f32.gmra.mxu0 %v616
      %v2646 = vpop.f32.mrf.mxu0
      %v2647 = vadd.f32 0.0, %v2646
      %2648 = vdwg.mxu0
      %v2649 = vadd.f32 %v2609, %v2644
      %v2650 = vadd.f32 %v2610, %v2647
      %v2651 = vtanh.pop %v2649
      %v2652 = vtanh.pop %v2650
      %2653 = vmatpush.msra.mxu0 0.0
      %2654 = vmatpush.msra.mxu0 0.0
      %2655 = vmatpush.msra.mxu0 0.0
      %2656 = vmatpush.msra.mxu0 0.0
      %2657 = vmatpush.msra.mxu0 0.0
      %2658 = vmatpush.msra.mxu0 0.0
      %2659 = vmatpush.msra.mxu0 0.0
      %2660 = vmatpush.msra.mxu0 0.0
      %2661 = vmatpush.msra.mxu0 0.0
      %2662 = vmatpush.msra.mxu0 0.0
      %2663 = vmatpush.msra.mxu0 0.0
      %2664 = vmatpush.msra.mxu0 0.0
      %2665 = vmatpush.msra.mxu0 0.0
      %2666 = vmatpush.msra.mxu0 0.0
      %2667 = vmatpush.msra.mxu0 %v2652
      %2668 = vmatpush.msra.mxu0 %v2651
      %2669 = vmatmul.f32.gmra.mxu0 %v613
      %v2670 = vpop.f32.mrf.mxu0
      %v2671 = vadd.f32 0.0, %v2670
      %2672 = vmatmul.f32.gmra.mxu0 %v616
      %v2673 = vpop.f32.mrf.mxu0
      %v2674 = vadd.f32 0.0, %v2673
      %2675 = vdwg.mxu0
      %v2676 = vadd.f32 %v2614, %v2671
      %v2677 = vadd.f32 %v2615, %v2674
      %v2678 = vtanh.pop %v2676
      %v2679 = vtanh.pop %v2677
      %2680 = vmatpush.msra.mxu0 0.0
      %2681 = vmatpush.msra.mxu0 0.0
      %2682 = vmatpush.msra.mxu0 0.0
      %2683 = vmatpush.msra.mxu0 0.0
      %2684 = vmatpush.msra.mxu0 0.0
      %2685 = vmatpush.msra.mxu0 0.0
      %2686 = vmatpush.msra.mxu0 0.0
      %2687 = vmatpush.msra.mxu0 0.0
      %2688 = vmatpush.msra.mxu0 0.0
      %2689 = vmatpush.msra.mxu0 0.0
      %2690 = vmatpush.msra.mxu0 0.0
      %2691 = vmatpush.msra.mxu0 0.0
      %2692 = vmatpush.msra.mxu0 0.0
      %2693 = vmatpush.msra.mxu0 0.0
      %2694 = vmatpush.msra.mxu0 %v2679
      %2695 = vmatpush.msra.mxu0 %v2678
      %2696 = vmatmul.f32.gmra.mxu0 %v613
      %v2697 = vpop.f32.mrf.mxu0
      %v2698 = vadd.f32 0.0, %v2697
      %2699 = vmatmul.f32.gmra.mxu0 %v616
      %v2700 = vpop.f32.mrf.mxu0
      %v2701 = vadd.f32 0.0, %v2700
      %2702 = vdwg.mxu0
      %v2703 = vadd.f32 %v2619, %v2698
      %v2704 = vadd.f32 %v2620, %v2701
      %v2705 = vtanh.pop %v2703
      %v2706 = vtanh.pop %v2704
      %2707 = vmatpush.msra.mxu0 0.0
      %2708 = vmatpush.msra.mxu0 0.0
      %2709 = vmatpush.msra.mxu0 0.0
      %2710 = vmatpush.msra.mxu0 0.0
      %2711 = vmatpush.msra.mxu0 0.0
      %2712 = vmatpush.msra.mxu0 0.0
      %2713 = vmatpush.msra.mxu0 0.0
      %2714 = vmatpush.msra.mxu0 0.0
      %2715 = vmatpush.msra.mxu0 0.0
      %2716 = vmatpush.msra.mxu0 0.0
      %2717 = vmatpush.msra.mxu0 0.0
      %2718 = vmatpush.msra.mxu0 0.0
      %2719 = vmatpush.msra.mxu0 0.0
      %2720 = vmatpush.msra.mxu0 0.0
      %2721 = vmatpush.msra.mxu0 %v2706
      %2722 = vmatpush.msra.mxu0 %v2705
      %2723 = vmatmul.f32.gmra.mxu0 %v613
      %v2724 = vpop.f32.mrf.mxu0
      %v2725 = vadd.f32 0.0, %v2724
      %2726 = vmatmul.f32.gmra.mxu0 %v616
      %v2727 = vpop.f32.mrf.mxu0
      %v2728 = vadd.f32 0.0, %v2727
      %2729 = vdwg.mxu0
      %v2730 = vadd.f32 %v2624, %v2725
      %v2731 = vadd.f32 %v2625, %v2728
      %v2732 = vtanh.pop %v2730
      %v2733 = vtanh.pop %v2731
      %v2734 = vmul.f32 %v729, %v2732
      %v2735 = vmul.f32 %v734, %v2733
      %v2736 = vadd.f32 %v2734, %v2735
      %v2737 = vrot.slane %v2736, 4
      %v2738 = vadd.f32 %v2736, %v2737
      %v2739 = vrot.slane %v2738, 2
      %v2740 = vadd.f32 %v2738, %v2739
      %v2741 = vrot.slane %v2740, 1
      %v2742 = vadd.f32 %v2740, %v2741
      %v2743 = vadd.f32 %v2742, %v745
      %v2744 = vadd.f32 %v2743, %v1490
      %v2745 = vadd.f32 %v2744, %v1312
      %v2746 = vmul.f32 %v751, %v2745
      %v2748 = vrot.slane %v2746, 7
      %v2750 = vadd.f32 %v2570, %v2748
      %v2751 = vrot.slane %v1494, 7
      %v2753 = vrot.slane %v1674, 6
      %v2755 = vrot.slane %v2030, 4
      %v2757 = vrot.slane %v2210, 3
      %v2759 = vrot.slane %v2390, 2
      %v2761 = vrot.slane %v2570, 1
      %vm2763 = vcmask 1040384
      %v2764 = vsel %vm2763, %v1297, %v2751
      %vm2765 = vcmask 1041408
      %v2766 = vsel %vm2765, %v2764, %v2753
      %v2767 = vsel %vm557, %v2766, %v1868
      %vm2768 = vcmask 1043456
      %v2769 = vsel %vm2768, %v2767, %v2755
      %vm2770 = vcmask 1044480
      %v2771 = vsel %vm2770, %v2769, %v2757
      %vm2772 = vcmask 1045504
      %v2773 = vsel %vm2772, %v2771, %v2759
      %vm2774 = vcmask 1046528
      %v2775 = vsel %vm2774, %v2773, %v2761
      %s2776 = scalar_lea.vmem %s15, %s1304
      %2777 = vst [vmem:[%s2776] sm:$0xff] %v2775
      %v2778 = vsel %vm2763, %v1491, %v1668
      %v2779 = vsel %vm2765, %v2778, %v1848
      %v2780 = vsel %vm557, %v2779, %v2024
      %v2781 = vsel %vm2768, %v2780, %v2204
      %v2782 = vsel %vm2770, %v2781, %v2384
      %v2783 = vsel %vm2772, %v2782, %v2564
      %v2784 = vsel %vm2774, %v2783, %v2744
      %s2785 = scalar_lea.vmem %s17, %s1304
      %2786 = vst [vmem:[%s2785] sm:$0xff] %v2784
      %v2787 = vsel %vm2763, %v1492, %v1669
      %v2788 = vsel %vm2765, %v2787, %v1849
      %v2789 = vsel %vm557, %v2788, %v2025
      %v2790 = vsel %vm2768, %v2789, %v2205
      %v2791 = vsel %vm2770, %v2790, %v2385
      %v2792 = vsel %vm2772, %v2791, %v2565
      %v2793 = vsel %vm2774, %v2792, %v2745
      %2794 = vst [vmem:[%s1311] sm:$0xff] %v2793
    $region82: #{modnn_forward.1} parent=1 // loop_footer
      %s1296 = sadd.s32 1, %s1292
    $region83: #{modnn_forward.1} parent=1 // loop_footer_branch
      %1291 = sbr.rel target = $region79
    $region84: #{modnn_forward.1} parent=1 // loop_exit
      _
    // Predicated region
    $region85: #{modnn_forward.1} parent=1 // pred_check
      _
    $region86: #{modnn_forward.1} parent=1 // pred_check_branch
      %2796 = sbr.rel (0) target = $region88
    $region87: #{modnn_forward.1} parent=1 // pred_region
      _
    $region88: #{modnn_forward.1} parent=1 // pred_fallthru
      _
    // Predicated region
    $region89: #{modnn_forward.1} parent=1 // pred_check
      _
    $region90: #{modnn_forward.1} parent=1 // pred_check_branch
      %2798 = sbr.rel (0) target = $region92
    $region91: #{modnn_forward.1} parent=1 // pred_region
      _
    $region92: #{modnn_forward.1} parent=1 // pred_fallthru
      _
    // Predicated region
    $region93: #{modnn_forward.1} parent=1 // pred_check
      _
    $region94: #{modnn_forward.1} parent=1 // pred_check_branch
      %2800 = sbr.rel (0) target = $region96
    $region95: #{modnn_forward.1} parent=1 // pred_region
      _
    $region96: #{modnn_forward.1} parent=1 // pred_fallthru
      _
    // Predicated region
    $region97: #{modnn_forward.1} parent=1 // pred_check
      _
    $region98: #{modnn_forward.1} parent=1 // pred_check_branch
      %2802 = sbr.rel (0) target = $region100
    $region99: #{modnn_forward.1} parent=1 // pred_region
      _
    $region100: #{modnn_forward.1} parent=1 // pred_fallthru
      _
    // Predicated region
    $region101: #{modnn_forward.1} parent=1 // pred_check
      _
    $region102: #{modnn_forward.1} parent=1 // pred_check_branch
      %2804 = sbr.rel (0) target = $region104
    $region103: #{modnn_forward.1} parent=1 // pred_region
      _
    $region104: #{modnn_forward.1} parent=1 // pred_fallthru
      _
    // Predicated region
    $region105: #{modnn_forward.1} parent=1 // pred_check
      _
    $region106: #{modnn_forward.1} parent=1 // pred_check_branch
      %2806 = sbr.rel (0) target = $region108
    $region107: #{modnn_forward.1} parent=1 // pred_region
      _
    $region108: #{modnn_forward.1} parent=1 // pred_fallthru
      _
    // Predicated region
    $region109: #{modnn_forward.1} parent=1 // pred_check
      _
    $region110: #{modnn_forward.1} parent=1 // pred_check_branch
      %2808 = sbr.rel (0) target = $region112
    $region111: #{modnn_forward.1} parent=1 // pred_region
      _
    $region112: #{modnn_forward.1} parent=1 // pred_fallthru
      _
    // Predicated region
    $region113: #{modnn_forward.1} parent=1 // pred_check
      _
    $region114: #{modnn_forward.1} parent=1 // pred_check_branch
      %2810 = sbr.rel (0) target = $region116
    $region115: #{modnn_forward.1} parent=1 // pred_region
      _
    $region116: #{modnn_forward.1} parent=1 // pred_fallthru
      _
    // Predicated region
    $region117: #{modnn_forward.1} parent=1 // pred_check
      _
    $region118: #{modnn_forward.1} parent=1 // pred_check_branch
      %2812 = sbr.rel (0) target = $region120
    $region119: #{modnn_forward.1} parent=1 // pred_region
      _
    $region120: #{modnn_forward.1} parent=1 // pred_fallthru
      _
    // Predicated region
    $region121: #{modnn_forward.1} parent=1 // pred_check
      _
    $region122: #{modnn_forward.1} parent=1 // pred_check_branch
      %2814 = sbr.rel (0) target = $region124
    $region123: #{modnn_forward.1} parent=1 // pred_region
      _
    $region124: #{modnn_forward.1} parent=1 // pred_fallthru
      _
    %2815 = vsyncpa [#allocation3], 1
    %2816 = vsyncpa [#allocation5], 1
    %2817 = vsyncpa [#allocation8], 1

</llo_original>
